<compile_context>
chip_gen: v5e
topology: v5e:2x2
jax: 0.10.0
libtpu: 0.0.40
codegen_flags: <defaults>
</compile_context>

<pallas_src>
import jax
import jax.numpy as jnp
from jax import lax
from jax.experimental import pallas as pl
from jax.experimental.pallas import tpu as pltpu

C = 176        # channels (lane axis)
H = 14         # spatial height
W = 14         # spatial width
HP = H + 2     # zero-padded height (leading axis)
WP = W + 2     # zero-padded width  (sublane axis) == 16
EPS = 1e-5


def _fused_kernel(xp_ref, wdw_ref, gamma_ref, beta_ref, wpw_ref, o_ref,
                  xs1, xs2, yb, ybf):
    # xp_ref   : (HP, WP, C) f32   zero-padded input, channels-last
    # wdw_ref  : (9, C)      f32   depthwise 3x3 taps, k = ky*3 + kx
    # gamma_ref: (1, C) f32        beta_ref: (1, C) f32
    # wpw_ref  : (C, C)      bf16  1x1 conv weight, [C_in, C_out]
    # o_ref    : (H*WP, C)   f32   image row h lives at sublanes [h*WP, h*WP+W)
    # xs1, xs2 : (HP, WP, C) f32   scratch: column-shifted copies of xp
    # yb       : (H*WP, C)   f32   scratch: raw depthwise output
    # ybf      : (H*WP, C)   bf16  scratch: normalized matmul LHS

    # ---- hoist the unaligned sublane shifts out of the 126-tap loop --------
    # xs1[:, w] = xp[:, w+1] and xs2[:, w] = xp[:, w+2], so every tap below
    # reads a full, sublane-aligned (WP, C) tile.  (kx == 0 reads xp itself.)
    xs1[...] = jnp.zeros((HP, WP, C), jnp.float32)
    xs2[...] = jnp.zeros((HP, WP, C), jnp.float32)
    xs1[:, 0:W, :] = xp_ref[:, 1:W + 1, :]
    xs2[:, 0:W, :] = xp_ref[:, 2:W + 2, :]

    # ---- depthwise 3x3 conv + single-pass BN statistics --------------------
    wks = [wdw_ref[k:k + 1, :] for k in range(9)]        # nine (1, C) taps
    srcs = (xp_ref, xs1, xs2)                            # indexed by kx

    rs = jnp.zeros((WP, C), jnp.float32)                 # per-sublane sums
    rsq = jnp.zeros((WP, C), jnp.float32)                # per-sublane sum sq
    for h in range(H):
        acc = jnp.zeros((WP, C), jnp.float32)            # one output row
        for ky in range(3):
            for kx in range(3):
                # aligned (WP, C) load; weight broadcast rides the XLU slot.
                acc = acc + srcs[kx][h + ky, :, :] * wks[ky * 3 + kx]
        yb[h * WP:(h + 1) * WP, :] = acc                 # aligned full store
        rs = rs + acc
        rsq = rsq + acc * acc

    # ---- BatchNorm2d (training mode): biased batch stats over N*H*W = 196 --
    n = jnp.float32(H * W)
    mean = jnp.sum(rs[0:W, :], axis=0, keepdims=True) / n          # (1, C)
    var = jnp.sum(rsq[0:W, :], axis=0, keepdims=True) / n - mean * mean
    inv = lax.rsqrt(var + EPS)
    scale = gamma_ref[...] * inv                                    # (1, C)
    shift = beta_ref[...] - mean * scale                            # (1, C)
    scale_b = jnp.broadcast_to(scale, (WP, C))
    shift_b = jnp.broadcast_to(shift, (WP, C))

    # ---- normalize + cast to bf16 (blockwise: tiny vreg working set) -------
    for h in range(H):
        blk = yb[h * WP:(h + 1) * WP, :]
        ybf[h * WP:(h + 1) * WP, :] = (blk * scale_b + shift_b).astype(
            jnp.bfloat16)

    # ---- 1x1 conv == one (224,176)x(176,176) bf16 matmul on the MXU --------
    o_ref[...] = jnp.dot(ybf[...], wpw_ref[...],
                         preferred_element_type=jnp.float32)


def fused_forward(x_nchw, w_dw, gamma, beta, w_pw):
    """x_nchw: (1, C, H, W) f32 -> (1, C, H, W) f32."""
    x_hwc = jnp.transpose(x_nchw[0], (1, 2, 0))              # (H, W, C)
    xp = jnp.pad(x_hwc, ((1, 1), (1, 1), (0, 0)))            # (HP, WP, C)
    wdw = jnp.transpose(w_dw.reshape(C, 9), (1, 0))          # (9, C)
    wpw = jnp.transpose(w_pw[:, :, 0, 0], (1, 0)).astype(jnp.bfloat16)

    z = pl.pallas_call(
        _fused_kernel,
        out_shape=jax.ShapeDtypeStruct((H * WP, C), jnp.float32),
        scratch_shapes=[
            pltpu.VMEM((HP, WP, C), jnp.float32),   # xs1
            pltpu.VMEM((HP, WP, C), jnp.float32),   # xs2
            pltpu.VMEM((H * WP, C), jnp.float32),   # yb
            pltpu.VMEM((H * WP, C), jnp.bfloat16),  # ybf
        ],
    )(xp, wdw, gamma.reshape(1, C), beta.reshape(1, C), wpw)

    # reshape is a free bitcast; slice + transpose fuse into one XLA copy.
    out_hwc = z.reshape(H, WP, C)[:, :W, :]                  # (H, W, C)
    return jnp.transpose(out_hwc, (2, 0, 1))[None]           # (1, C, H, W)
    # TODO(synk): for batch N > 1 add a "parallel" grid axis over N so v7x's
    # two TensorCores both get work.


def reference_forward(x, w_dw, gamma, beta, w_pw):
    """Plain-JAX (f32) reference matching the PyTorch forward."""
    dn = ("NCHW", "OIHW", "NCHW")
    y = lax.conv_general_dilated(
        x, w_dw, window_strides=(1, 1), padding=((1, 1), (1, 1)),
        dimension_numbers=dn, feature_group_count=C)
    mean = jnp.mean(y, axis=(0, 2, 3), keepdims=True)
    var = jnp.mean((y - mean) ** 2, axis=(0, 2, 3), keepdims=True)
    y = (y - mean) * lax.rsqrt(var + EPS)
    y = y * gamma[None, :, None, None] + beta[None, :, None, None]
    z = lax.conv_general_dilated(
        y, w_pw, window_strides=(1, 1), padding=((0, 0), (0, 0)),
        dimension_numbers=dn)
    return z


if __name__ == "__main__":
    key = jax.random.PRNGKey(0)
    kx_, k1, k2, k3, k4 = jax.random.split(key, 5)

    # deterministic synthetic parameters (shapes from the module __init__)
    x = jax.random.normal(kx_, (1, C, H, W), jnp.float32)
    w_dw = 0.1 * jax.random.normal(k1, (C, 1, 3, 3), jnp.float32)   # conv2d33
    gamma = 1.0 + 0.1 * jax.random.normal(k2, (C,), jnp.float32)    # bn33
    beta = 0.1 * jax.random.normal(k3, (C,), jnp.float32)
    w_pw = 0.05 * jax.random.normal(k4, (C, C, 1, 1), jnp.float32)  # conv2d34

    out = jax.jit(fused_forward)(x, w_dw, gamma, beta, w_pw)
    out = jax.block_until_ready(out)

    ref = reference_forward(x, w_dw, gamma, beta, w_pw)
    assert out.shape == (1, C, H, W), out.shape
    max_err = float(jnp.max(jnp.abs(out - ref)))
    # bf16 matmul operands -> expected max abs error ~3e-3, well inside 2e-2.
    assert jnp.allclose(out, ref, rtol=2e-2, atol=2e-2), max_err

    print("KERNEL_OK")
</pallas_src>

<mosaic_0001>
module attributes {stable_mosaic.version = 11 : i64} {
  func.func @_fused_kernel(%arg0: memref<16x16x176xf32, #tpu.memory_space<vmem>>, %arg1: memref<9x176xf32, #tpu.memory_space<vmem>>, %arg2: memref<1x176xf32, #tpu.memory_space<vmem>>, %arg3: memref<1x176xf32, #tpu.memory_space<vmem>>, %arg4: memref<176x176xbf16, #tpu.memory_space<vmem>>, %arg5: memref<224x176xf32, #tpu.memory_space<vmem>>, %arg6: memref<16x16x176xf32, #tpu.memory_space<vmem>>, %arg7: memref<16x16x176xf32, #tpu.memory_space<vmem>>, %arg8: memref<224x176xf32, #tpu.memory_space<vmem>>, %arg9: memref<224x176xbf16, #tpu.memory_space<vmem>>) attributes {dimension_semantics = [], scalar_prefetch = 0 : i64, scratch_operands = 4 : i64, tpu.core_type = #tpu.core_type<tc>} {
    %cst = arith.constant 0.000000e+00 : f32
    %0 = vector.broadcast %cst : f32 to vector<16x16x176xf32>
    %c0 = arith.constant 0 : index
    %c0_0 = arith.constant 0 : index
    %c0_1 = arith.constant 0 : index
    %1 = vector.load %arg6[%c0, %c0_0, %c0_1] : memref<16x16x176xf32, #tpu.memory_space<vmem>>, vector<16x16x176xf32>
    tpu.vector_store %arg6[%c0, %c0_0, %c0_1], %0 {strides = array<i32>} : memref<16x16x176xf32, #tpu.memory_space<vmem>>, vector<16x16x176xf32>,
    %cst_2 = arith.constant 0.000000e+00 : f32
    %2 = vector.broadcast %cst_2 : f32 to vector<16x16x176xf32>
    %c0_3 = arith.constant 0 : index
    %c0_4 = arith.constant 0 : index
    %c0_5 = arith.constant 0 : index
    %3 = vector.load %arg7[%c0_3, %c0_4, %c0_5] : memref<16x16x176xf32, #tpu.memory_space<vmem>>, vector<16x16x176xf32>
    tpu.vector_store %arg7[%c0_3, %c0_4, %c0_5], %2 {strides = array<i32>} : memref<16x16x176xf32, #tpu.memory_space<vmem>>, vector<16x16x176xf32>,
    %c0_6 = arith.constant 0 : index
    %c1 = arith.constant 1 : index
    %c0_7 = arith.constant 0 : index
    %4 = vector.load %arg0[%c0_6, %c1, %c0_7] : memref<16x16x176xf32, #tpu.memory_space<vmem>>, vector<16x14x176xf32>
    %c0_8 = arith.constant 0 : index
    %c0_9 = arith.constant 0 : index
    %c0_10 = arith.constant 0 : index
    %5 = vector.load %arg6[%c0_8, %c0_9, %c0_10] : memref<16x16x176xf32, #tpu.memory_space<vmem>>, vector<16x14x176xf32>
    tpu.vector_store %arg6[%c0_8, %c0_9, %c0_10], %4 {strides = array<i32>} : memref<16x16x176xf32, #tpu.memory_space<vmem>>, vector<16x14x176xf32>,
    %c0_11 = arith.constant 0 : index
    %c2 = arith.constant 2 : index
    %c0_12 = arith.constant 0 : index
    %6 = vector.load %arg0[%c0_11, %c2, %c0_12] : memref<16x16x176xf32, #tpu.memory_space<vmem>>, vector<16x14x176xf32>
    %c0_13 = arith.constant 0 : index
    %c0_14 = arith.constant 0 : index
    %c0_15 = arith.constant 0 : index
    %7 = vector.load %arg7[%c0_13, %c0_14, %c0_15] : memref<16x16x176xf32, #tpu.memory_space<vmem>>, vector<16x14x176xf32>
    tpu.vector_store %arg7[%c0_13, %c0_14, %c0_15], %6 {strides = array<i32>} : memref<16x16x176xf32, #tpu.memory_space<vmem>>, vector<16x14x176xf32>,
    %c0_16 = arith.constant 0 : index
    %c0_17 = arith.constant 0 : index
    %8 = vector.load %arg1[%c0_16, %c0_17] : memref<9x176xf32, #tpu.memory_space<vmem>>, vector<1x176xf32>
    %c1_18 = arith.constant 1 : index
    %c0_19 = arith.constant 0 : index
    %9 = vector.load %arg1[%c1_18, %c0_19] : memref<9x176xf32, #tpu.memory_space<vmem>>, vector<1x176xf32>
    %c2_20 = arith.constant 2 : index
    %c0_21 = arith.constant 0 : index
    %10 = vector.load %arg1[%c2_20, %c0_21] : memref<9x176xf32, #tpu.memory_space<vmem>>, vector<1x176xf32>
    %c3 = arith.constant 3 : index
    %c0_22 = arith.constant 0 : index
    %11 = vector.load %arg1[%c3, %c0_22] : memref<9x176xf32, #tpu.memory_space<vmem>>, vector<1x176xf32>
    %c4 = arith.constant 4 : index
    %c0_23 = arith.constant 0 : index
    %12 = vector.load %arg1[%c4, %c0_23] : memref<9x176xf32, #tpu.memory_space<vmem>>, vector<1x176xf32>
    %c5 = arith.constant 5 : index
    %c0_24 = arith.constant 0 : index
    %13 = vector.load %arg1[%c5, %c0_24] : memref<9x176xf32, #tpu.memory_space<vmem>>, vector<1x176xf32>
    %c6 = arith.constant 6 : index
    %c0_25 = arith.constant 0 : index
    %14 = vector.load %arg1[%c6, %c0_25] : memref<9x176xf32, #tpu.memory_space<vmem>>, vector<1x176xf32>
    %c7 = arith.constant 7 : index
    %c0_26 = arith.constant 0 : index
    %15 = vector.load %arg1[%c7, %c0_26] : memref<9x176xf32, #tpu.memory_space<vmem>>, vector<1x176xf32>
    %c8 = arith.constant 8 : index
    %c0_27 = arith.constant 0 : index
    %16 = vector.load %arg1[%c8, %c0_27] : memref<9x176xf32, #tpu.memory_space<vmem>>, vector<1x176xf32>
    %cst_28 = arith.constant 0.000000e+00 : f32
    %17 = vector.broadcast %cst_28 : f32 to vector<16x176xf32>
    %cst_29 = arith.constant 0.000000e+00 : f32
    %18 = vector.broadcast %cst_29 : f32 to vector<16x176xf32>
    %cst_30 = arith.constant 0.000000e+00 : f32
    %19 = vector.broadcast %cst_30 : f32 to vector<16x176xf32>
    %c0_31 = arith.constant 0 : index
    %c0_32 = arith.constant 0 : index
    %c0_33 = arith.constant 0 : index
    %20 = vector.load %arg0[%c0_31, %c0_32, %c0_33] : memref<16x16x176xf32, #tpu.memory_space<vmem>>, vector<1x16x176xf32>
    %21 = vector.shape_cast %20 : vector<1x16x176xf32> to vector<16x176xf32>
    %22 = vector.broadcast %8 : vector<1x176xf32> to vector<16x176xf32>
    %23 = arith.mulf %21, %22 : vector<16x176xf32>
    %24 = arith.addf %19, %23 : vector<16x176xf32>
    %c0_34 = arith.constant 0 : index
    %c0_35 = arith.constant 0 : index
    %c0_36 = arith.constant 0 : index
    %25 = vector.load %arg6[%c0_34, %c0_35, %c0_36] : memref<16x16x176xf32, #tpu.memory_space<vmem>>, vector<1x16x176xf32>
    %26 = vector.shape_cast %25 : vector<1x16x176xf32> to vector<16x176xf32>
    %27 = vector.broadcast %9 : vector<1x176xf32> to vector<16x176xf32>
    %28 = arith.mulf %26, %27 : vector<16x176xf32>
    %29 = arith.addf %24, %28 : vector<16x176xf32>
    %c0_37 = arith.constant 0 : index
    %c0_38 = arith.constant 0 : index
    %c0_39 = arith.constant 0 : index
    %30 = vector.load %arg7[%c0_37, %c0_38, %c0_39] : memref<16x16x176xf32, #tpu.memory_space<vmem>>, vector<1x16x176xf32>
    %31 = vector.shape_cast %30 : vector<1x16x176xf32> to vector<16x176xf32>
    %32 = vector.broadcast %10 : vector<1x176xf32> to vector<16x176xf32>
    %33 = arith.mulf %31, %32 : vector<16x176xf32>
    %34 = arith.addf %29, %33 : vector<16x176xf32>
    %c1_40 = arith.constant 1 : index
    %c0_41 = arith.constant 0 : index
    %c0_42 = arith.constant 0 : index
    %35 = vector.load %arg0[%c1_40, %c0_41, %c0_42] : memref<16x16x176xf32, #tpu.memory_space<vmem>>, vector<1x16x176xf32>
    %36 = vector.shape_cast %35 : vector<1x16x176xf32> to vector<16x176xf32>
    %37 = vector.broadcast %11 : vector<1x176xf32> to vector<16x176xf32>
    %38 = arith.mulf %36, %37 : vector<16x176xf32>
    %39 = arith.addf %34, %38 : vector<16x176xf32>
    %c1_43 = arith.constant 1 : index
    %c0_44 = arith.constant 0 : index
    %c0_45 = arith.constant 0 : index
    %40 = vector.load %arg6[%c1_43, %c0_44, %c0_45] : memref<16x16x176xf32, #tpu.memory_space<vmem>>, vector<1x16x176xf32>
    %41 = vector.shape_cast %40 : vector<1x16x176xf32> to vector<16x176xf32>
    %42 = vector.broadcast %12 : vector<1x176xf32> to vector<16x176xf32>
    %43 = arith.mulf %41, %42 : vector<16x176xf32>
    %44 = arith.addf %39, %43 : vector<16x176xf32>
    %c1_46 = arith.constant 1 : index
    %c0_47 = arith.constant 0 : index
    %c0_48 = arith.constant 0 : index
    %45 = vector.load %arg7[%c1_46, %c0_47, %c0_48] : memref<16x16x176xf32, #tpu.memory_space<vmem>>, vector<1x16x176xf32>
    %46 = vector.shape_cast %45 : vector<1x16x176xf32> to vector<16x176xf32>
    %47 = vector.broadcast %13 : vector<1x176xf32> to vector<16x176xf32>
    %48 = arith.mulf %46, %47 : vector<16x176xf32>
    %49 = arith.addf %44, %48 : vector<16x176xf32>
    %c2_49 = arith.constant 2 : index
    %c0_50 = arith.constant 0 : index
    %c0_51 = arith.constant 0 : index
    %50 = vector.load %arg0[%c2_49, %c0_50, %c0_51] : memref<16x16x176xf32, #tpu.memory_space<vmem>>, vector<1x16x176xf32>
    %51 = vector.shape_cast %50 : vector<1x16x176xf32> to vector<16x176xf32>
    %52 = vector.broadcast %14 : vector<1x176xf32> to vector<16x176xf32>
    %53 = arith.mulf %51, %52 : vector<16x176xf32>
    %54 = arith.addf %49, %53 : vector<16x176xf32>
    %c2_52 = arith.constant 2 : index
    %c0_53 = arith.constant 0 : index
    %c0_54 = arith.constant 0 : index
    %55 = vector.load %arg6[%c2_52, %c0_53, %c0_54] : memref<16x16x176xf32, #tpu.memory_space<vmem>>, vector<1x16x176xf32>
    %56 = vector.shape_cast %55 : vector<1x16x176xf32> to vector<16x176xf32>
    %57 = vector.broadcast %15 : vector<1x176xf32> to vector<16x176xf32>
    %58 = arith.mulf %56, %57 : vector<16x176xf32>
    %59 = arith.addf %54, %58 : vector<16x176xf32>
    %c2_55 = arith.constant 2 : index
    %c0_56 = arith.constant 0 : index
    %c0_57 = arith.constant 0 : index
    %60 = vector.load %arg7[%c2_55, %c0_56, %c0_57] : memref<16x16x176xf32, #tpu.memory_space<vmem>>, vector<1x16x176xf32>
    %61 = vector.shape_cast %60 : vector<1x16x176xf32> to vector<16x176xf32>
    %62 = vector.broadcast %16 : vector<1x176xf32> to vector<16x176xf32>
    %63 = arith.mulf %61, %62 : vector<16x176xf32>
    %64 = arith.addf %59, %63 : vector<16x176xf32>
    %c0_58 = arith.constant 0 : index
    %c0_59 = arith.constant 0 : index
    %65 = vector.load %arg8[%c0_58, %c0_59] : memref<224x176xf32, #tpu.memory_space<vmem>>, vector<16x176xf32>
    tpu.vector_store %arg8[%c0_58, %c0_59], %64 {strides = array<i32>} : memref<224x176xf32, #tpu.memory_space<vmem>>, vector<16x176xf32>,
    %66 = arith.addf %17, %64 : vector<16x176xf32>
    %67 = arith.mulf %64, %64 : vector<16x176xf32>
    %68 = arith.addf %18, %67 : vector<16x176xf32>
    %cst_60 = arith.constant 0.000000e+00 : f32
    %69 = vector.broadcast %cst_60 : f32 to vector<16x176xf32>
    %c1_61 = arith.constant 1 : index
    %c0_62 = arith.constant 0 : index
    %c0_63 = arith.constant 0 : index
    %70 = vector.load %arg0[%c1_61, %c0_62, %c0_63] : memref<16x16x176xf32, #tpu.memory_space<vmem>>, vector<1x16x176xf32>
    %71 = vector.shape_cast %70 : vector<1x16x176xf32> to vector<16x176xf32>
    %72 = vector.broadcast %8 : vector<1x176xf32> to vector<16x176xf32>
    %73 = arith.mulf %71, %72 : vector<16x176xf32>
    %74 = arith.addf %69, %73 : vector<16x176xf32>
    %c1_64 = arith.constant 1 : index
    %c0_65 = arith.constant 0 : index
    %c0_66 = arith.constant 0 : index
    %75 = vector.load %arg6[%c1_64, %c0_65, %c0_66] : memref<16x16x176xf32, #tpu.memory_space<vmem>>, vector<1x16x176xf32>
    %76 = vector.shape_cast %75 : vector<1x16x176xf32> to vector<16x176xf32>
    %77 = vector.broadcast %9 : vector<1x176xf32> to vector<16x176xf32>
    %78 = arith.mulf %76, %77 : vector<16x176xf32>
    %79 = arith.addf %74, %78 : vector<16x176xf32>
    %c1_67 = arith.constant 1 : index
    %c0_68 = arith.constant 0 : index
    %c0_69 = arith.constant 0 : index
    %80 = vector.load %arg7[%c1_67, %c0_68, %c0_69] : memref<16x16x176xf32, #tpu.memory_space<vmem>>, vector<1x16x176xf32>
    %81 = vector.shape_cast %80 : vector<1x16x176xf32> to vector<16x176xf32>
    %82 = vector.broadcast %10 : vector<1x176xf32> to vector<16x176xf32>
    %83 = arith.mulf %81, %82 : vector<16x176xf32>
    %84 = arith.addf %79, %83 : vector<16x176xf32>
    %c2_70 = arith.constant 2 : index
    %c0_71 = arith.constant 0 : index
    %c0_72 = arith.constant 0 : index
    %85 = vector.load %arg0[%c2_70, %c0_71, %c0_72] : memref<16x16x176xf32, #tpu.memory_space<vmem>>, vector<1x16x176xf32>
    %86 = vector.shape_cast %85 : vector<1x16x176xf32> to vector<16x176xf32>
    %87 = vector.broadcast %11 : vector<1x176xf32> to vector<16x176xf32>
    %88 = arith.mulf %86, %87 : vector<16x176xf32>
    %89 = arith.addf %84, %88 : vector<16x176xf32>
    %c2_73 = arith.constant 2 : index
    %c0_74 = arith.constant 0 : index
    %c0_75 = arith.constant 0 : index
    %90 = vector.load %arg6[%c2_73, %c0_74, %c0_75] : memref<16x16x176xf32, #tpu.memory_space<vmem>>, vector<1x16x176xf32>
    %91 = vector.shape_cast %90 : vector<1x16x176xf32> to vector<16x176xf32>
    %92 = vector.broadcast %12 : vector<1x176xf32> to vector<16x176xf32>
    %93 = arith.mulf %91, %92 : vector<16x176xf32>
    %94 = arith.addf %89, %93 : vector<16x176xf32>
    %c2_76 = arith.constant 2 : index
    %c0_77 = arith.constant 0 : index
    %c0_78 = arith.constant 0 : index
    %95 = vector.load %arg7[%c2_76, %c0_77, %c0_78] : memref<16x16x176xf32, #tpu.memory_space<vmem>>, vector<1x16x176xf32>
    %96 = vector.shape_cast %95 : vector<1x16x176xf32> to vector<16x176xf32>
    %97 = vector.broadcast %13 : vector<1x176xf32> to vector<16x176xf32>
    %98 = arith.mulf %96, %97 : vector<16x176xf32>
    %99 = arith.addf %94, %98 : vector<16x176xf32>
    %c3_79 = arith.constant 3 : index
    %c0_80 = arith.constant 0 : index
    %c0_81 = arith.constant 0 : index
    %100 = vector.load %arg0[%c3_79, %c0_80, %c0_81] : memref<16x16x176xf32, #tpu.memory_space<vmem>>, vector<1x16x176xf32>
    %101 = vector.shape_cast %100 : vector<1x16x176xf32> to vector<16x176xf32>
    %102 = vector.broadcast %14 : vector<1x176xf32> to vector<16x176xf32>
    %103 = arith.mulf %101, %102 : vector<16x176xf32>
    %104 = arith.addf %99, %103 : vector<16x176xf32>
    %c3_82 = arith.constant 3 : index
    %c0_83 = arith.constant 0 : index
    %c0_84 = arith.constant 0 : index
    %105 = vector.load %arg6[%c3_82, %c0_83, %c0_84] : memref<16x16x176xf32, #tpu.memory_space<vmem>>, vector<1x16x176xf32>
    %106 = vector.shape_cast %105 : vector<1x16x176xf32> to vector<16x176xf32>
    %107 = vector.broadcast %15 : vector<1x176xf32> to vector<16x176xf32>
    %108 = arith.mulf %106, %107 : vector<16x176xf32>
    %109 = arith.addf %104, %108 : vector<16x176xf32>
    %c3_85 = arith.constant 3 : index
    %c0_86 = arith.constant 0 : index
    %c0_87 = arith.constant 0 : index
    %110 = vector.load %arg7[%c3_85, %c0_86, %c0_87] : memref<16x16x176xf32, #tpu.memory_space<vmem>>, vector<1x16x176xf32>
    %111 = vector.shape_cast %110 : vector<1x16x176xf32> to vector<16x176xf32>
    %112 = vector.broadcast %16 : vector<1x176xf32> to vector<16x176xf32>
    %113 = arith.mulf %111, %112 : vector<16x176xf32>
    %114 = arith.addf %109, %113 : vector<16x176xf32>
    %c16 = arith.constant 16 : index
    %c0_88 = arith.constant 0 : index
    %115 = vector.load %arg8[%c16, %c0_88] : memref<224x176xf32, #tpu.memory_space<vmem>>, vector<16x176xf32>
    tpu.vector_store %arg8[%c16, %c0_88], %114 {strides = array<i32>} : memref<224x176xf32, #tpu.memory_space<vmem>>, vector<16x176xf32>,
    %116 = arith.addf %66, %114 : vector<16x176xf32>
    %117 = arith.mulf %114, %114 : vector<16x176xf32>
    %118 = arith.addf %68, %117 : vector<16x176xf32>
    %cst_89 = arith.constant 0.000000e+00 : f32
    %119 = vector.broadcast %cst_89 : f32 to vector<16x176xf32>
    %c2_90 = arith.constant 2 : index
    %c0_91 = arith.constant 0 : index
    %c0_92 = arith.constant 0 : index
    %120 = vector.load %arg0[%c2_90, %c0_91, %c0_92] : memref<16x16x176xf32, #tpu.memory_space<vmem>>, vector<1x16x176xf32>
    %121 = vector.shape_cast %120 : vector<1x16x176xf32> to vector<16x176xf32>
    %122 = vector.broadcast %8 : vector<1x176xf32> to vector<16x176xf32>
    %123 = arith.mulf %121, %122 : vector<16x176xf32>
    %124 = arith.addf %119, %123 : vector<16x176xf32>
    %c2_93 = arith.constant 2 : index
    %c0_94 = arith.constant 0 : index
    %c0_95 = arith.constant 0 : index
    %125 = vector.load %arg6[%c2_93, %c0_94, %c0_95] : memref<16x16x176xf32, #tpu.memory_space<vmem>>, vector<1x16x176xf32>
    %126 = vector.shape_cast %125 : vector<1x16x176xf32> to vector<16x176xf32>
    %127 = vector.broadcast %9 : vector<1x176xf32> to vector<16x176xf32>
    %128 = arith.mulf %126, %127 : vector<16x176xf32>
    %129 = arith.addf %124, %128 : vector<16x176xf32>
    %c2_96 = arith.constant 2 : index
    %c0_97 = arith.constant 0 : index
    %c0_98 = arith.constant 0 : index
    %130 = vector.load %arg7[%c2_96, %c0_97, %c0_98] : memref<16x16x176xf32, #tpu.memory_space<vmem>>, vector<1x16x176xf32>
    %131 = vector.shape_cast %130 : vector<1x16x176xf32> to vector<16x176xf32>
    %132 = vector.broadcast %10 : vector<1x176xf32> to vector<16x176xf32>
    %133 = arith.mulf %131, %132 : vector<16x176xf32>
    %134 = arith.addf %129, %133 : vector<16x176xf32>
    %c3_99 = arith.constant 3 : index
    %c0_100 = arith.constant 0 : index
    %c0_101 = arith.constant 0 : index
    %135 = vector.load %arg0[%c3_99, %c0_100, %c0_101] : memref<16x16x176xf32, #tpu.memory_space<vmem>>, vector<1x16x176xf32>
    %136 = vector.shape_cast %135 : vector<1x16x176xf32> to vector<16x176xf32>
    %137 = vector.broadcast %11 : vector<1x176xf32> to vector<16x176xf32>
    %138 = arith.mulf %136, %137 : vector<16x176xf32>
    %139 = arith.addf %134, %138 : vector<16x176xf32>
    %c3_102 = arith.constant 3 : index
    %c0_103 = arith.constant 0 : index
    %c0_104 = arith.constant 0 : index
    %140 = vector.load %arg6[%c3_102, %c0_103, %c0_104] : memref<16x16x176xf32, #tpu.memory_space<vmem>>, vector<1x16x176xf32>
    %141 = vector.shape_cast %140 : vector<1x16x176xf32> to vector<16x176xf32>
    %142 = vector.broadcast %12 : vector<1x176xf32> to vector<16x176xf32>
    %143 = arith.mulf %141, %142 : vector<16x176xf32>
    %144 = arith.addf %139, %143 : vector<16x176xf32>
    %c3_105 = arith.constant 3 : index
    %c0_106 = arith.constant 0 : index
    %c0_107 = arith.constant 0 : index
    %145 = vector.load %arg7[%c3_105, %c0_106, %c0_107] : memref<16x16x176xf32, #tpu.memory_space<vmem>>, vector<1x16x176xf32>
    %146 = vector.shape_cast %145 : vector<1x16x176xf32> to vector<16x176xf32>
    %147 = vector.broadcast %13 : vector<1x176xf32> to vector<16x176xf32>
    %148 = arith.mulf %146, %147 : vector<16x176xf32>
    %149 = arith.addf %144, %148 : vector<16x176xf32>
    %c4_108 = arith.constant 4 : index
    %c0_109 = arith.constant 0 : index
    %c0_110 = arith.constant 0 : index
    %150 = vector.load %arg0[%c4_108, %c0_109, %c0_110] : memref<16x16x176xf32, #tpu.memory_space<vmem>>, vector<1x16x176xf32>
    %151 = vector.shape_cast %150 : vector<1x16x176xf32> to vector<16x176xf32>
    %152 = vector.broadcast %14 : vector<1x176xf32> to vector<16x176xf32>
    %153 = arith.mulf %151, %152 : vector<16x176xf32>
    %154 = arith.addf %149, %153 : vector<16x176xf32>
    %c4_111 = arith.constant 4 : index
    %c0_112 = arith.constant 0 : index
    %c0_113 = arith.constant 0 : index
    %155 = vector.load %arg6[%c4_111, %c0_112, %c0_113] : memref<16x16x176xf32, #tpu.memory_space<vmem>>, vector<1x16x176xf32>
    %156 = vector.shape_cast %155 : vector<1x16x176xf32> to vector<16x176xf32>
    %157 = vector.broadcast %15 : vector<1x176xf32> to vector<16x176xf32>
    %158 = arith.mulf %156, %157 : vector<16x176xf32>
    %159 = arith.addf %154, %158 : vector<16x176xf32>
    %c4_114 = arith.constant 4 : index
    %c0_115 = arith.constant 0 : index
    %c0_116 = arith.constant 0 : index
    %160 = vector.load %arg7[%c4_114, %c0_115, %c0_116] : memref<16x16x176xf32, #tpu.memory_space<vmem>>, vector<1x16x176xf32>
    %161 = vector.shape_cast %160 : vector<1x16x176xf32> to vector<16x176xf32>
    %162 = vector.broadcast %16 : vector<1x176xf32> to vector<16x176xf32>
    %163 = arith.mulf %161, %162 : vector<16x176xf32>
    %164 = arith.addf %159, %163 : vector<16x176xf32>
    %c32 = arith.constant 32 : index
    %c0_117 = arith.constant 0 : index
    %165 = vector.load %arg8[%c32, %c0_117] : memref<224x176xf32, #tpu.memory_space<vmem>>, vector<16x176xf32>
    tpu.vector_store %arg8[%c32, %c0_117], %164 {strides = array<i32>} : memref<224x176xf32, #tpu.memory_space<vmem>>, vector<16x176xf32>,
    %166 = arith.addf %116, %164 : vector<16x176xf32>
    %167 = arith.mulf %164, %164 : vector<16x176xf32>
    %168 = arith.addf %118, %167 : vector<16x176xf32>
    %cst_118 = arith.constant 0.000000e+00 : f32
    %169 = vector.broadcast %cst_118 : f32 to vector<16x176xf32>
    %c3_119 = arith.constant 3 : index
    %c0_120 = arith.constant 0 : index
    %c0_121 = arith.constant 0 : index
    %170 = vector.load %arg0[%c3_119, %c0_120, %c0_121] : memref<16x16x176xf32, #tpu.memory_space<vmem>>, vector<1x16x176xf32>
    %171 = vector.shape_cast %170 : vector<1x16x176xf32> to vector<16x176xf32>
    %172 = vector.broadcast %8 : vector<1x176xf32> to vector<16x176xf32>
    %173 = arith.mulf %171, %172 : vector<16x176xf32>
    %174 = arith.addf %169, %173 : vector<16x176xf32>
    %c3_122 = arith.constant 3 : index
    %c0_123 = arith.constant 0 : index
    %c0_124 = arith.constant 0 : index
    %175 = vector.load %arg6[%c3_122, %c0_123, %c0_124] : memref<16x16x176xf32, #tpu.memory_space<vmem>>, vector<1x16x176xf32>
    %176 = vector.shape_cast %175 : vector<1x16x176xf32> to vector<16x176xf32>
    %177 = vector.broadcast %9 : vector<1x176xf32> to vector<16x176xf32>
    %178 = arith.mulf %176, %177 : vector<16x176xf32>
    %179 = arith.addf %174, %178 : vector<16x176xf32>
    %c3_125 = arith.constant 3 : index
    %c0_126 = arith.constant 0 : index
    %c0_127 = arith.constant 0 : index
    %180 = vector.load %arg7[%c3_125, %c0_126, %c0_127] : memref<16x16x176xf32, #tpu.memory_space<vmem>>, vector<1x16x176xf32>
    %181 = vector.shape_cast %180 : vector<1x16x176xf32> to vector<16x176xf32>
    %182 = vector.broadcast %10 : vector<1x176xf32> to vector<16x176xf32>
    %183 = arith.mulf %181, %182 : vector<16x176xf32>
    %184 = arith.addf %179, %183 : vector<16x176xf32>
    %c4_128 = arith.constant 4 : index
    %c0_129 = arith.constant 0 : index
    %c0_130 = arith.constant 0 : index
    %185 = vector.load %arg0[%c4_128, %c0_129, %c0_130] : memref<16x16x176xf32, #tpu.memory_space<vmem>>, vector<1x16x176xf32>
    %186 = vector.shape_cast %185 : vector<1x16x176xf32> to vector<16x176xf32>
    %187 = vector.broadcast %11 : vector<1x176xf32> to vector<16x176xf32>
    %188 = arith.mulf %186, %187 : vector<16x176xf32>
    %189 = arith.addf %184, %188 : vector<16x176xf32>
    %c4_131 = arith.constant 4 : index
    %c0_132 = arith.constant 0 : index
    %c0_133 = arith.constant 0 : index
    %190 = vector.load %arg6[%c4_131, %c0_132, %c0_133] : memref<16x16x176xf32, #tpu.memory_space<vmem>>, vector<1x16x176xf32>
    %191 = vector.shape_cast %190 : vector<1x16x176xf32> to vector<16x176xf32>
    %192 = vector.broadcast %12 : vector<1x176xf32> to vector<16x176xf32>
    %193 = arith.mulf %191, %192 : vector<16x176xf32>
    %194 = arith.addf %189, %193 : vector<16x176xf32>
    %c4_134 = arith.constant 4 : index
    %c0_135 = arith.constant 0 : index
    %c0_136 = arith.constant 0 : index
    %195 = vector.load %arg7[%c4_134, %c0_135, %c0_136] : memref<16x16x176xf32, #tpu.memory_space<vmem>>, vector<1x16x176xf32>
    %196 = vector.shape_cast %195 : vector<1x16x176xf32> to vector<16x176xf32>
    %197 = vector.broadcast %13 : vector<1x176xf32> to vector<16x176xf32>
    %198 = arith.mulf %196, %197 : vector<16x176xf32>
    %199 = arith.addf %194, %198 : vector<16x176xf32>
    %c5_137 = arith.constant 5 : index
    %c0_138 = arith.constant 0 : index
    %c0_139 = arith.constant 0 : index
    %200 = vector.load %arg0[%c5_137, %c0_138, %c0_139] : memref<16x16x176xf32, #tpu.memory_space<vmem>>, vector<1x16x176xf32>
    %201 = vector.shape_cast %200 : vector<1x16x176xf32> to vector<16x176xf32>
    %202 = vector.broadcast %14 : vector<1x176xf32> to vector<16x176xf32>
    %203 = arith.mulf %201, %202 : vector<16x176xf32>
    %204 = arith.addf %199, %203 : vector<16x176xf32>
    %c5_140 = arith.constant 5 : index
    %c0_141 = arith.constant 0 : index
    %c0_142 = arith.constant 0 : index
    %205 = vector.load %arg6[%c5_140, %c0_141, %c0_142] : memref<16x16x176xf32, #tpu.memory_space<vmem>>, vector<1x16x176xf32>
    %206 = vector.shape_cast %205 : vector<1x16x176xf32> to vector<16x176xf32>
    %207 = vector.broadcast %15 : vector<1x176xf32> to vector<16x176xf32>
    %208 = arith.mulf %206, %207 : vector<16x176xf32>
    %209 = arith.addf %204, %208 : vector<16x176xf32>
    %c5_143 = arith.constant 5 : index
    %c0_144 = arith.constant 0 : index
    %c0_145 = arith.constant 0 : index
    %210 = vector.load %arg7[%c5_143, %c0_144, %c0_145] : memref<16x16x176xf32, #tpu.memory_space<vmem>>, vector<1x16x176xf32>
    %211 = vector.shape_cast %210 : vector<1x16x176xf32> to vector<16x176xf32>
    %212 = vector.broadcast %16 : vector<1x176xf32> to vector<16x176xf32>
    %213 = arith.mulf %211, %212 : vector<16x176xf32>
    %214 = arith.addf %209, %213 : vector<16x176xf32>
    %c48 = arith.constant 48 : index
    %c0_146 = arith.constant 0 : index
    %215 = vector.load %arg8[%c48, %c0_146] : memref<224x176xf32, #tpu.memory_space<vmem>>, vector<16x176xf32>
    tpu.vector_store %arg8[%c48, %c0_146], %214 {strides = array<i32>} : memref<224x176xf32, #tpu.memory_space<vmem>>, vector<16x176xf32>,
    %216 = arith.addf %166, %214 : vector<16x176xf32>
    %217 = arith.mulf %214, %214 : vector<16x176xf32>
    %218 = arith.addf %168, %217 : vector<16x176xf32>
    %cst_147 = arith.constant 0.000000e+00 : f32
    %219 = vector.broadcast %cst_147 : f32 to vector<16x176xf32>
    %c4_148 = arith.constant 4 : index
    %c0_149 = arith.constant 0 : index
    %c0_150 = arith.constant 0 : index
    %220 = vector.load %arg0[%c4_148, %c0_149, %c0_150] : memref<16x16x176xf32, #tpu.memory_space<vmem>>, vector<1x16x176xf32>
    %221 = vector.shape_cast %220 : vector<1x16x176xf32> to vector<16x176xf32>
    %222 = vector.broadcast %8 : vector<1x176xf32> to vector<16x176xf32>
    %223 = arith.mulf %221, %222 : vector<16x176xf32>
    %224 = arith.addf %219, %223 : vector<16x176xf32>
    %c4_151 = arith.constant 4 : index
    %c0_152 = arith.constant 0 : index
    %c0_153 = arith.constant 0 : index
    %225 = vector.load %arg6[%c4_151, %c0_152, %c0_153] : memref<16x16x176xf32, #tpu.memory_space<vmem>>, vector<1x16x176xf32>
    %226 = vector.shape_cast %225 : vector<1x16x176xf32> to vector<16x176xf32>
    %227 = vector.broadcast %9 : vector<1x176xf32> to vector<16x176xf32>
    %228 = arith.mulf %226, %227 : vector<16x176xf32>
    %229 = arith.addf %224, %228 : vector<16x176xf32>
    %c4_154 = arith.constant 4 : index
    %c0_155 = arith.constant 0 : index
    %c0_156 = arith.constant 0 : index
    %230 = vector.load %arg7[%c4_154, %c0_155, %c0_156] : memref<16x16x176xf32, #tpu.memory_space<vmem>>, vector<1x16x176xf32>
    %231 = vector.shape_cast %230 : vector<1x16x176xf32> to vector<16x176xf32>
    %232 = vector.broadcast %10 : vector<1x176xf32> to vector<16x176xf32>
    %233 = arith.mulf %231, %232 : vector<16x176xf32>
    %234 = arith.addf %229, %233 : vector<16x176xf32>
    %c5_157 = arith.constant 5 : index
    %c0_158 = arith.constant 0 : index
    %c0_159 = arith.constant 0 : index
    %235 = vector.load %arg0[%c5_157, %c0_158, %c0_159] : memref<16x16x176xf32, #tpu.memory_space<vmem>>, vector<1x16x176xf32>
    %236 = vector.shape_cast %235 : vector<1x16x176xf32> to vector<16x176xf32>
    %237 = vector.broadcast %11 : vector<1x176xf32> to vector<16x176xf32>
    %238 = arith.mulf %236, %237 : vector<16x176xf32>
    %239 = arith.addf %234, %238 : vector<16x176xf32>
    %c5_160 = arith.constant 5 : index
    %c0_161 = arith.constant 0 : index
    %c0_162 = arith.constant 0 : index
    %240 = vector.load %arg6[%c5_160, %c0_161, %c0_162] : memref<16x16x176xf32, #tpu.memory_space<vmem>>, vector<1x16x176xf32>
    %241 = vector.shape_cast %240 : vector<1x16x176xf32> to vector<16x176xf32>
    %242 = vector.broadcast %12 : vector<1x176xf32> to vector<16x176xf32>
    %243 = arith.mulf %241, %242 : vector<16x176xf32>
    %244 = arith.addf %239, %243 : vector<16x176xf32>
    %c5_163 = arith.constant 5 : index
    %c0_164 = arith.constant 0 : index
    %c0_165 = arith.constant 0 : index
    %245 = vector.load %arg7[%c5_163, %c0_164, %c0_165] : memref<16x16x176xf32, #tpu.memory_space<vmem>>, vector<1x16x176xf32>
    %246 = vector.shape_cast %245 : vector<1x16x176xf32> to vector<16x176xf32>
    %247 = vector.broadcast %13 : vector<1x176xf32> to vector<16x176xf32>
    %248 = arith.mulf %246, %247 : vector<16x176xf32>
    %249 = arith.addf %244, %248 : vector<16x176xf32>
    %c6_166 = arith.constant 6 : index
    %c0_167 = arith.constant 0 : index
    %c0_168 = arith.constant 0 : index
    %250 = vector.load %arg0[%c6_166, %c0_167, %c0_168] : memref<16x16x176xf32, #tpu.memory_space<vmem>>, vector<1x16x176xf32>
    %251 = vector.shape_cast %250 : vector<1x16x176xf32> to vector<16x176xf32>
    %252 = vector.broadcast %14 : vector<1x176xf32> to vector<16x176xf32>
    %253 = arith.mulf %251, %252 : vector<16x176xf32>
    %254 = arith.addf %249, %253 : vector<16x176xf32>
    %c6_169 = arith.constant 6 : index
    %c0_170 = arith.constant 0 : index
    %c0_171 = arith.constant 0 : index
    %255 = vector.load %arg6[%c6_169, %c0_170, %c0_171] : memref<16x16x176xf32, #tpu.memory_space<vmem>>, vector<1x16x176xf32>
    %256 = vector.shape_cast %255 : vector<1x16x176xf32> to vector<16x176xf32>
    %257 = vector.broadcast %15 : vector<1x176xf32> to vector<16x176xf32>
    %258 = arith.mulf %256, %257 : vector<16x176xf32>
    %259 = arith.addf %254, %258 : vector<16x176xf32>
    %c6_172 = arith.constant 6 : index
    %c0_173 = arith.constant 0 : index
    %c0_174 = arith.constant 0 : index
    %260 = vector.load %arg7[%c6_172, %c0_173, %c0_174] : memref<16x16x176xf32, #tpu.memory_space<vmem>>, vector<1x16x176xf32>
    %261 = vector.shape_cast %260 : vector<1x16x176xf32> to vector<16x176xf32>
    %262 = vector.broadcast %16 : vector<1x176xf32> to vector<16x176xf32>
    %263 = arith.mulf %261, %262 : vector<16x176xf32>
    %264 = arith.addf %259, %263 : vector<16x176xf32>
    %c64 = arith.constant 64 : index
    %c0_175 = arith.constant 0 : index
    %265 = vector.load %arg8[%c64, %c0_175] : memref<224x176xf32, #tpu.memory_space<vmem>>, vector<16x176xf32>
    tpu.vector_store %arg8[%c64, %c0_175], %264 {strides = array<i32>} : memref<224x176xf32, #tpu.memory_space<vmem>>, vector<16x176xf32>,
    %266 = arith.addf %216, %264 : vector<16x176xf32>
    %267 = arith.mulf %264, %264 : vector<16x176xf32>
    %268 = arith.addf %218, %267 : vector<16x176xf32>
    %cst_176 = arith.constant 0.000000e+00 : f32
    %269 = vector.broadcast %cst_176 : f32 to vector<16x176xf32>
    %c5_177 = arith.constant 5 : index
    %c0_178 = arith.constant 0 : index
    %c0_179 = arith.constant 0 : index
    %270 = vector.load %arg0[%c5_177, %c0_178, %c0_179] : memref<16x16x176xf32, #tpu.memory_space<vmem>>, vector<1x16x176xf32>
    %271 = vector.shape_cast %270 : vector<1x16x176xf32> to vector<16x176xf32>
    %272 = vector.broadcast %8 : vector<1x176xf32> to vector<16x176xf32>
    %273 = arith.mulf %271, %272 : vector<16x176xf32>
    %274 = arith.addf %269, %273 : vector<16x176xf32>
    %c5_180 = arith.constant 5 : index
    %c0_181 = arith.constant 0 : index
    %c0_182 = arith.constant 0 : index
    %275 = vector.load %arg6[%c5_180, %c0_181, %c0_182] : memref<16x16x176xf32, #tpu.memory_space<vmem>>, vector<1x16x176xf32>
    %276 = vector.shape_cast %275 : vector<1x16x176xf32> to vector<16x176xf32>
    %277 = vector.broadcast %9 : vector<1x176xf32> to vector<16x176xf32>
    %278 = arith.mulf %276, %277 : vector<16x176xf32>
    %279 = arith.addf %274, %278 : vector<16x176xf32>
    %c5_183 = arith.constant 5 : index
    %c0_184 = arith.constant 0 : index
    %c0_185 = arith.constant 0 : index
    %280 = vector.load %arg7[%c5_183, %c0_184, %c0_185] : memref<16x16x176xf32, #tpu.memory_space<vmem>>, vector<1x16x176xf32>
    %281 = vector.shape_cast %280 : vector<1x16x176xf32> to vector<16x176xf32>
    %282 = vector.broadcast %10 : vector<1x176xf32> to vector<16x176xf32>
    %283 = arith.mulf %281, %282 : vector<16x176xf32>
    %284 = arith.addf %279, %283 : vector<16x176xf32>
    %c6_186 = arith.constant 6 : index
    %c0_187 = arith.constant 0 : index
    %c0_188 = arith.constant 0 : index
    %285 = vector.load %arg0[%c6_186, %c0_187, %c0_188] : memref<16x16x176xf32, #tpu.memory_space<vmem>>, vector<1x16x176xf32>
    %286 = vector.shape_cast %285 : vector<1x16x176xf32> to vector<16x176xf32>
    %287 = vector.broadcast %11 : vector<1x176xf32> to vector<16x176xf32>
    %288 = arith.mulf %286, %287 : vector<16x176xf32>
    %289 = arith.addf %284, %288 : vector<16x176xf32>
    %c6_189 = arith.constant 6 : index
    %c0_190 = arith.constant 0 : index
    %c0_191 = arith.constant 0 : index
    %290 = vector.load %arg6[%c6_189, %c0_190, %c0_191] : memref<16x16x176xf32, #tpu.memory_space<vmem>>, vector<1x16x176xf32>
    %291 = vector.shape_cast %290 : vector<1x16x176xf32> to vector<16x176xf32>
    %292 = vector.broadcast %12 : vector<1x176xf32> to vector<16x176xf32>
    %293 = arith.mulf %291, %292 : vector<16x176xf32>
    %294 = arith.addf %289, %293 : vector<16x176xf32>
    %c6_192 = arith.constant 6 : index
    %c0_193 = arith.constant 0 : index
    %c0_194 = arith.constant 0 : index
    %295 = vector.load %arg7[%c6_192, %c0_193, %c0_194] : memref<16x16x176xf32, #tpu.memory_space<vmem>>, vector<1x16x176xf32>
    %296 = vector.shape_cast %295 : vector<1x16x176xf32> to vector<16x176xf32>
    %297 = vector.broadcast %13 : vector<1x176xf32> to vector<16x176xf32>
    %298 = arith.mulf %296, %297 : vector<16x176xf32>
    %299 = arith.addf %294, %298 : vector<16x176xf32>
    %c7_195 = arith.constant 7 : index
    %c0_196 = arith.constant 0 : index
    %c0_197 = arith.constant 0 : index
    %300 = vector.load %arg0[%c7_195, %c0_196, %c0_197] : memref<16x16x176xf32, #tpu.memory_space<vmem>>, vector<1x16x176xf32>
    %301 = vector.shape_cast %300 : vector<1x16x176xf32> to vector<16x176xf32>
    %302 = vector.broadcast %14 : vector<1x176xf32> to vector<16x176xf32>
    %303 = arith.mulf %301, %302 : vector<16x176xf32>
    %304 = arith.addf %299, %303 : vector<16x176xf32>
    %c7_198 = arith.constant 7 : index
    %c0_199 = arith.constant 0 : index
    %c0_200 = arith.constant 0 : index
    %305 = vector.load %arg6[%c7_198, %c0_199, %c0_200] : memref<16x16x176xf32, #tpu.memory_space<vmem>>, vector<1x16x176xf32>
    %306 = vector.shape_cast %305 : vector<1x16x176xf32> to vector<16x176xf32>
    %307 = vector.broadcast %15 : vector<1x176xf32> to vector<16x176xf32>
    %308 = arith.mulf %306, %307 : vector<16x176xf32>
    %309 = arith.addf %304, %308 : vector<16x176xf32>
    %c7_201 = arith.constant 7 : index
    %c0_202 = arith.constant 0 : index
    %c0_203 = arith.constant 0 : index
    %310 = vector.load %arg7[%c7_201, %c0_202, %c0_203] : memref<16x16x176xf32, #tpu.memory_space<vmem>>, vector<1x16x176xf32>
    %311 = vector.shape_cast %310 : vector<1x16x176xf32> to vector<16x176xf32>
    %312 = vector.broadcast %16 : vector<1x176xf32> to vector<16x176xf32>
    %313 = arith.mulf %311, %312 : vector<16x176xf32>
    %314 = arith.addf %309, %313 : vector<16x176xf32>
    %c80 = arith.constant 80 : index
    %c0_204 = arith.constant 0 : index
    %315 = vector.load %arg8[%c80, %c0_204] : memref<224x176xf32, #tpu.memory_space<vmem>>, vector<16x176xf32>
    tpu.vector_store %arg8[%c80, %c0_204], %314 {strides = array<i32>} : memref<224x176xf32, #tpu.memory_space<vmem>>, vector<16x176xf32>,
    %316 = arith.addf %266, %314 : vector<16x176xf32>
    %317 = arith.mulf %314, %314 : vector<16x176xf32>
    %318 = arith.addf %268, %317 : vector<16x176xf32>
    %cst_205 = arith.constant 0.000000e+00 : f32
    %319 = vector.broadcast %cst_205 : f32 to vector<16x176xf32>
    %c6_206 = arith.constant 6 : index
    %c0_207 = arith.constant 0 : index
    %c0_208 = arith.constant 0 : index
    %320 = vector.load %arg0[%c6_206, %c0_207, %c0_208] : memref<16x16x176xf32, #tpu.memory_space<vmem>>, vector<1x16x176xf32>
    %321 = vector.shape_cast %320 : vector<1x16x176xf32> to vector<16x176xf32>
    %322 = vector.broadcast %8 : vector<1x176xf32> to vector<16x176xf32>
    %323 = arith.mulf %321, %322 : vector<16x176xf32>
    %324 = arith.addf %319, %323 : vector<16x176xf32>
    %c6_209 = arith.constant 6 : index
    %c0_210 = arith.constant 0 : index
    %c0_211 = arith.constant 0 : index
    %325 = vector.load %arg6[%c6_209, %c0_210, %c0_211] : memref<16x16x176xf32, #tpu.memory_space<vmem>>, vector<1x16x176xf32>
    %326 = vector.shape_cast %325 : vector<1x16x176xf32> to vector<16x176xf32>
    %327 = vector.broadcast %9 : vector<1x176xf32> to vector<16x176xf32>
    %328 = arith.mulf %326, %327 : vector<16x176xf32>
    %329 = arith.addf %324, %328 : vector<16x176xf32>
    %c6_212 = arith.constant 6 : index
    %c0_213 = arith.constant 0 : index
    %c0_214 = arith.constant 0 : index
    %330 = vector.load %arg7[%c6_212, %c0_213, %c0_214] : memref<16x16x176xf32, #tpu.memory_space<vmem>>, vector<1x16x176xf32>
    %331 = vector.shape_cast %330 : vector<1x16x176xf32> to vector<16x176xf32>
    %332 = vector.broadcast %10 : vector<1x176xf32> to vector<16x176xf32>
    %333 = arith.mulf %331, %332 : vector<16x176xf32>
    %334 = arith.addf %329, %333 : vector<16x176xf32>
    %c7_215 = arith.constant 7 : index
    %c0_216 = arith.constant 0 : index
    %c0_217 = arith.constant 0 : index
    %335 = vector.load %arg0[%c7_215, %c0_216, %c0_217] : memref<16x16x176xf32, #tpu.memory_space<vmem>>, vector<1x16x176xf32>
    %336 = vector.shape_cast %335 : vector<1x16x176xf32> to vector<16x176xf32>
    %337 = vector.broadcast %11 : vector<1x176xf32> to vector<16x176xf32>
    %338 = arith.mulf %336, %337 : vector<16x176xf32>
    %339 = arith.addf %334, %338 : vector<16x176xf32>
    %c7_218 = arith.constant 7 : index
    %c0_219 = arith.constant 0 : index
    %c0_220 = arith.constant 0 : index
    %340 = vector.load %arg6[%c7_218, %c0_219, %c0_220] : memref<16x16x176xf32, #tpu.memory_space<vmem>>, vector<1x16x176xf32>
    %341 = vector.shape_cast %340 : vector<1x16x176xf32> to vector<16x176xf32>
    %342 = vector.broadcast %12 : vector<1x176xf32> to vector<16x176xf32>
    %343 = arith.mulf %341, %342 : vector<16x176xf32>
    %344 = arith.addf %339, %343 : vector<16x176xf32>
    %c7_221 = arith.constant 7 : index
    %c0_222 = arith.constant 0 : index
    %c0_223 = arith.constant 0 : index
    %345 = vector.load %arg7[%c7_221, %c0_222, %c0_223] : memref<16x16x176xf32, #tpu.memory_space<vmem>>, vector<1x16x176xf32>
    %346 = vector.shape_cast %345 : vector<1x16x176xf32> to vector<16x176xf32>
    %347 = vector.broadcast %13 : vector<1x176xf32> to vector<16x176xf32>
    %348 = arith.mulf %346, %347 : vector<16x176xf32>
    %349 = arith.addf %344, %348 : vector<16x176xf32>
    %c8_224 = arith.constant 8 : index
    %c0_225 = arith.constant 0 : index
    %c0_226 = arith.constant 0 : index
    %350 = vector.load %arg0[%c8_224, %c0_225, %c0_226] : memref<16x16x176xf32, #tpu.memory_space<vmem>>, vector<1x16x176xf32>
    %351 = vector.shape_cast %350 : vector<1x16x176xf32> to vector<16x176xf32>
    %352 = vector.broadcast %14 : vector<1x176xf32> to vector<16x176xf32>
    %353 = arith.mulf %351, %352 : vector<16x176xf32>
    %354 = arith.addf %349, %353 : vector<16x176xf32>
    %c8_227 = arith.constant 8 : index
    %c0_228 = arith.constant 0 : index
    %c0_229 = arith.constant 0 : index
    %355 = vector.load %arg6[%c8_227, %c0_228, %c0_229] : memref<16x16x176xf32, #tpu.memory_space<vmem>>, vector<1x16x176xf32>
    %356 = vector.shape_cast %355 : vector<1x16x176xf32> to vector<16x176xf32>
    %357 = vector.broadcast %15 : vector<1x176xf32> to vector<16x176xf32>
    %358 = arith.mulf %356, %357 : vector<16x176xf32>
    %359 = arith.addf %354, %358 : vector<16x176xf32>
    %c8_230 = arith.constant 8 : index
    %c0_231 = arith.constant 0 : index
    %c0_232 = arith.constant 0 : index
    %360 = vector.load %arg7[%c8_230, %c0_231, %c0_232] : memref<16x16x176xf32, #tpu.memory_space<vmem>>, vector<1x16x176xf32>
    %361 = vector.shape_cast %360 : vector<1x16x176xf32> to vector<16x176xf32>
    %362 = vector.broadcast %16 : vector<1x176xf32> to vector<16x176xf32>
    %363 = arith.mulf %361, %362 : vector<16x176xf32>
    %364 = arith.addf %359, %363 : vector<16x176xf32>
    %c96 = arith.constant 96 : index
    %c0_233 = arith.constant 0 : index
    %365 = vector.load %arg8[%c96, %c0_233] : memref<224x176xf32, #tpu.memory_space<vmem>>, vector<16x176xf32>
    tpu.vector_store %arg8[%c96, %c0_233], %364 {strides = array<i32>} : memref<224x176xf32, #tpu.memory_space<vmem>>, vector<16x176xf32>,
    %366 = arith.addf %316, %364 : vector<16x176xf32>
    %367 = arith.mulf %364, %364 : vector<16x176xf32>
    %368 = arith.addf %318, %367 : vector<16x176xf32>
    %cst_234 = arith.constant 0.000000e+00 : f32
    %369 = vector.broadcast %cst_234 : f32 to vector<16x176xf32>
    %c7_235 = arith.constant 7 : index
    %c0_236 = arith.constant 0 : index
    %c0_237 = arith.constant 0 : index
    %370 = vector.load %arg0[%c7_235, %c0_236, %c0_237] : memref<16x16x176xf32, #tpu.memory_space<vmem>>, vector<1x16x176xf32>
    %371 = vector.shape_cast %370 : vector<1x16x176xf32> to vector<16x176xf32>
    %372 = vector.broadcast %8 : vector<1x176xf32> to vector<16x176xf32>
    %373 = arith.mulf %371, %372 : vector<16x176xf32>
    %374 = arith.addf %369, %373 : vector<16x176xf32>
    %c7_238 = arith.constant 7 : index
    %c0_239 = arith.constant 0 : index
    %c0_240 = arith.constant 0 : index
    %375 = vector.load %arg6[%c7_238, %c0_239, %c0_240] : memref<16x16x176xf32, #tpu.memory_space<vmem>>, vector<1x16x176xf32>
    %376 = vector.shape_cast %375 : vector<1x16x176xf32> to vector<16x176xf32>
    %377 = vector.broadcast %9 : vector<1x176xf32> to vector<16x176xf32>
    %378 = arith.mulf %376, %377 : vector<16x176xf32>
    %379 = arith.addf %374, %378 : vector<16x176xf32>
    %c7_241 = arith.constant 7 : index
    %c0_242 = arith.constant 0 : index
    %c0_243 = arith.constant 0 : index
    %380 = vector.load %arg7[%c7_241, %c0_242, %c0_243] : memref<16x16x176xf32, #tpu.memory_space<vmem>>, vector<1x16x176xf32>
    %381 = vector.shape_cast %380 : vector<1x16x176xf32> to vector<16x176xf32>
    %382 = vector.broadcast %10 : vector<1x176xf32> to vector<16x176xf32>
    %383 = arith.mulf %381, %382 : vector<16x176xf32>
    %384 = arith.addf %379, %383 : vector<16x176xf32>
    %c8_244 = arith.constant 8 : index
    %c0_245 = arith.constant 0 : index
    %c0_246 = arith.constant 0 : index
    %385 = vector.load %arg0[%c8_244, %c0_245, %c0_246] : memref<16x16x176xf32, #tpu.memory_space<vmem>>, vector<1x16x176xf32>
    %386 = vector.shape_cast %385 : vector<1x16x176xf32> to vector<16x176xf32>
    %387 = vector.broadcast %11 : vector<1x176xf32> to vector<16x176xf32>
    %388 = arith.mulf %386, %387 : vector<16x176xf32>
    %389 = arith.addf %384, %388 : vector<16x176xf32>
    %c8_247 = arith.constant 8 : index
    %c0_248 = arith.constant 0 : index
    %c0_249 = arith.constant 0 : index
    %390 = vector.load %arg6[%c8_247, %c0_248, %c0_249] : memref<16x16x176xf32, #tpu.memory_space<vmem>>, vector<1x16x176xf32>
    %391 = vector.shape_cast %390 : vector<1x16x176xf32> to vector<16x176xf32>
    %392 = vector.broadcast %12 : vector<1x176xf32> to vector<16x176xf32>
    %393 = arith.mulf %391, %392 : vector<16x176xf32>
    %394 = arith.addf %389, %393 : vector<16x176xf32>
    %c8_250 = arith.constant 8 : index
    %c0_251 = arith.constant 0 : index
    %c0_252 = arith.constant 0 : index
    %395 = vector.load %arg7[%c8_250, %c0_251, %c0_252] : memref<16x16x176xf32, #tpu.memory_space<vmem>>, vector<1x16x176xf32>
    %396 = vector.shape_cast %395 : vector<1x16x176xf32> to vector<16x176xf32>
    %397 = vector.broadcast %13 : vector<1x176xf32> to vector<16x176xf32>
    %398 = arith.mulf %396, %397 : vector<16x176xf32>
    %399 = arith.addf %394, %398 : vector<16x176xf32>
    %c9 = arith.constant 9 : index
    %c0_253 = arith.constant 0 : index
    %c0_254 = arith.constant 0 : index
    %400 = vector.load %arg0[%c9, %c0_253, %c0_254] : memref<16x16x176xf32, #tpu.memory_space<vmem>>, vector<1x16x176xf32>
    %401 = vector.shape_cast %400 : vector<1x16x176xf32> to vector<16x176xf32>
    %402 = vector.broadcast %14 : vector<1x176xf32> to vector<16x176xf32>
    %403 = arith.mulf %401, %402 : vector<16x176xf32>
    %404 = arith.addf %399, %403 : vector<16x176xf32>
    %c9_255 = arith.constant 9 : index
    %c0_256 = arith.constant 0 : index
    %c0_257 = arith.constant 0 : index
    %405 = vector.load %arg6[%c9_255, %c0_256, %c0_257] : memref<16x16x176xf32, #tpu.memory_space<vmem>>, vector<1x16x176xf32>
    %406 = vector.shape_cast %405 : vector<1x16x176xf32> to vector<16x176xf32>
    %407 = vector.broadcast %15 : vector<1x176xf32> to vector<16x176xf32>
    %408 = arith.mulf %406, %407 : vector<16x176xf32>
    %409 = arith.addf %404, %408 : vector<16x176xf32>
    %c9_258 = arith.constant 9 : index
    %c0_259 = arith.constant 0 : index
    %c0_260 = arith.constant 0 : index
    %410 = vector.load %arg7[%c9_258, %c0_259, %c0_260] : memref<16x16x176xf32, #tpu.memory_space<vmem>>, vector<1x16x176xf32>
    %411 = vector.shape_cast %410 : vector<1x16x176xf32> to vector<16x176xf32>
    %412 = vector.broadcast %16 : vector<1x176xf32> to vector<16x176xf32>
    %413 = arith.mulf %411, %412 : vector<16x176xf32>
    %414 = arith.addf %409, %413 : vector<16x176xf32>
    %c112 = arith.constant 112 : index
    %c0_261 = arith.constant 0 : index
    %415 = vector.load %arg8[%c112, %c0_261] : memref<224x176xf32, #tpu.memory_space<vmem>>, vector<16x176xf32>
    tpu.vector_store %arg8[%c112, %c0_261], %414 {strides = array<i32>} : memref<224x176xf32, #tpu.memory_space<vmem>>, vector<16x176xf32>,
    %416 = arith.addf %366, %414 : vector<16x176xf32>
    %417 = arith.mulf %414, %414 : vector<16x176xf32>
    %418 = arith.addf %368, %417 : vector<16x176xf32>
    %cst_262 = arith.constant 0.000000e+00 : f32
    %419 = vector.broadcast %cst_262 : f32 to vector<16x176xf32>
    %c8_263 = arith.constant 8 : index
    %c0_264 = arith.constant 0 : index
    %c0_265 = arith.constant 0 : index
    %420 = vector.load %arg0[%c8_263, %c0_264, %c0_265] : memref<16x16x176xf32, #tpu.memory_space<vmem>>, vector<1x16x176xf32>
    %421 = vector.shape_cast %420 : vector<1x16x176xf32> to vector<16x176xf32>
    %422 = vector.broadcast %8 : vector<1x176xf32> to vector<16x176xf32>
    %423 = arith.mulf %421, %422 : vector<16x176xf32>
    %424 = arith.addf %419, %423 : vector<16x176xf32>
    %c8_266 = arith.constant 8 : index
    %c0_267 = arith.constant 0 : index
    %c0_268 = arith.constant 0 : index
    %425 = vector.load %arg6[%c8_266, %c0_267, %c0_268] : memref<16x16x176xf32, #tpu.memory_space<vmem>>, vector<1x16x176xf32>
    %426 = vector.shape_cast %425 : vector<1x16x176xf32> to vector<16x176xf32>
    %427 = vector.broadcast %9 : vector<1x176xf32> to vector<16x176xf32>
    %428 = arith.mulf %426, %427 : vector<16x176xf32>
    %429 = arith.addf %424, %428 : vector<16x176xf32>
    %c8_269 = arith.constant 8 : index
    %c0_270 = arith.constant 0 : index
    %c0_271 = arith.constant 0 : index
    %430 = vector.load %arg7[%c8_269, %c0_270, %c0_271] : memref<16x16x176xf32, #tpu.memory_space<vmem>>, vector<1x16x176xf32>
    %431 = vector.shape_cast %430 : vector<1x16x176xf32> to vector<16x176xf32>
    %432 = vector.broadcast %10 : vector<1x176xf32> to vector<16x176xf32>
    %433 = arith.mulf %431, %432 : vector<16x176xf32>
    %434 = arith.addf %429, %433 : vector<16x176xf32>
    %c9_272 = arith.constant 9 : index
    %c0_273 = arith.constant 0 : index
    %c0_274 = arith.constant 0 : index
    %435 = vector.load %arg0[%c9_272, %c0_273, %c0_274] : memref<16x16x176xf32, #tpu.memory_space<vmem>>, vector<1x16x176xf32>
    %436 = vector.shape_cast %435 : vector<1x16x176xf32> to vector<16x176xf32>
    %437 = vector.broadcast %11 : vector<1x176xf32> to vector<16x176xf32>
    %438 = arith.mulf %436, %437 : vector<16x176xf32>
    %439 = arith.addf %434, %438 : vector<16x176xf32>
    %c9_275 = arith.constant 9 : index
    %c0_276 = arith.constant 0 : index
    %c0_277 = arith.constant 0 : index
    %440 = vector.load %arg6[%c9_275, %c0_276, %c0_277] : memref<16x16x176xf32, #tpu.memory_space<vmem>>, vector<1x16x176xf32>
    %441 = vector.shape_cast %440 : vector<1x16x176xf32> to vector<16x176xf32>
    %442 = vector.broadcast %12 : vector<1x176xf32> to vector<16x176xf32>
    %443 = arith.mulf %441, %442 : vector<16x176xf32>
    %444 = arith.addf %439, %443 : vector<16x176xf32>
    %c9_278 = arith.constant 9 : index
    %c0_279 = arith.constant 0 : index
    %c0_280 = arith.constant 0 : index
    %445 = vector.load %arg7[%c9_278, %c0_279, %c0_280] : memref<16x16x176xf32, #tpu.memory_space<vmem>>, vector<1x16x176xf32>
    %446 = vector.shape_cast %445 : vector<1x16x176xf32> to vector<16x176xf32>
    %447 = vector.broadcast %13 : vector<1x176xf32> to vector<16x176xf32>
    %448 = arith.mulf %446, %447 : vector<16x176xf32>
    %449 = arith.addf %444, %448 : vector<16x176xf32>
    %c10 = arith.constant 10 : index
    %c0_281 = arith.constant 0 : index
    %c0_282 = arith.constant 0 : index
    %450 = vector.load %arg0[%c10, %c0_281, %c0_282] : memref<16x16x176xf32, #tpu.memory_space<vmem>>, vector<1x16x176xf32>
    %451 = vector.shape_cast %450 : vector<1x16x176xf32> to vector<16x176xf32>
    %452 = vector.broadcast %14 : vector<1x176xf32> to vector<16x176xf32>
    %453 = arith.mulf %451, %452 : vector<16x176xf32>
    %454 = arith.addf %449, %453 : vector<16x176xf32>
    %c10_283 = arith.constant 10 : index
    %c0_284 = arith.constant 0 : index
    %c0_285 = arith.constant 0 : index
    %455 = vector.load %arg6[%c10_283, %c0_284, %c0_285] : memref<16x16x176xf32, #tpu.memory_space<vmem>>, vector<1x16x176xf32>
    %456 = vector.shape_cast %455 : vector<1x16x176xf32> to vector<16x176xf32>
    %457 = vector.broadcast %15 : vector<1x176xf32> to vector<16x176xf32>
    %458 = arith.mulf %456, %457 : vector<16x176xf32>
    %459 = arith.addf %454, %458 : vector<16x176xf32>
    %c10_286 = arith.constant 10 : index
    %c0_287 = arith.constant 0 : index
    %c0_288 = arith.constant 0 : index
    %460 = vector.load %arg7[%c10_286, %c0_287, %c0_288] : memref<16x16x176xf32, #tpu.memory_space<vmem>>, vector<1x16x176xf32>
    %461 = vector.shape_cast %460 : vector<1x16x176xf32> to vector<16x176xf32>
    %462 = vector.broadcast %16 : vector<1x176xf32> to vector<16x176xf32>
    %463 = arith.mulf %461, %462 : vector<16x176xf32>
    %464 = arith.addf %459, %463 : vector<16x176xf32>
    %c128 = arith.constant 128 : index
    %c0_289 = arith.constant 0 : index
    %465 = vector.load %arg8[%c128, %c0_289] : memref<224x176xf32, #tpu.memory_space<vmem>>, vector<16x176xf32>
    tpu.vector_store %arg8[%c128, %c0_289], %464 {strides = array<i32>} : memref<224x176xf32, #tpu.memory_space<vmem>>, vector<16x176xf32>,
    %466 = arith.addf %416, %464 : vector<16x176xf32>
    %467 = arith.mulf %464, %464 : vector<16x176xf32>
    %468 = arith.addf %418, %467 : vector<16x176xf32>
    %cst_290 = arith.constant 0.000000e+00 : f32
    %469 = vector.broadcast %cst_290 : f32 to vector<16x176xf32>
    %c9_291 = arith.constant 9 : index
    %c0_292 = arith.constant 0 : index
    %c0_293 = arith.constant 0 : index
    %470 = vector.load %arg0[%c9_291, %c0_292, %c0_293] : memref<16x16x176xf32, #tpu.memory_space<vmem>>, vector<1x16x176xf32>
    %471 = vector.shape_cast %470 : vector<1x16x176xf32> to vector<16x176xf32>
    %472 = vector.broadcast %8 : vector<1x176xf32> to vector<16x176xf32>
    %473 = arith.mulf %471, %472 : vector<16x176xf32>
    %474 = arith.addf %469, %473 : vector<16x176xf32>
    %c9_294 = arith.constant 9 : index
    %c0_295 = arith.constant 0 : index
    %c0_296 = arith.constant 0 : index
    %475 = vector.load %arg6[%c9_294, %c0_295, %c0_296] : memref<16x16x176xf32, #tpu.memory_space<vmem>>, vector<1x16x176xf32>
    %476 = vector.shape_cast %475 : vector<1x16x176xf32> to vector<16x176xf32>
    %477 = vector.broadcast %9 : vector<1x176xf32> to vector<16x176xf32>
    %478 = arith.mulf %476, %477 : vector<16x176xf32>
    %479 = arith.addf %474, %478 : vector<16x176xf32>
    %c9_297 = arith.constant 9 : index
    %c0_298 = arith.constant 0 : index
    %c0_299 = arith.constant 0 : index
    %480 = vector.load %arg7[%c9_297, %c0_298, %c0_299] : memref<16x16x176xf32, #tpu.memory_space<vmem>>, vector<1x16x176xf32>
    %481 = vector.shape_cast %480 : vector<1x16x176xf32> to vector<16x176xf32>
    %482 = vector.broadcast %10 : vector<1x176xf32> to vector<16x176xf32>
    %483 = arith.mulf %481, %482 : vector<16x176xf32>
    %484 = arith.addf %479, %483 : vector<16x176xf32>
    %c10_300 = arith.constant 10 : index
    %c0_301 = arith.constant 0 : index
    %c0_302 = arith.constant 0 : index
    %485 = vector.load %arg0[%c10_300, %c0_301, %c0_302] : memref<16x16x176xf32, #tpu.memory_space<vmem>>, vector<1x16x176xf32>
    %486 = vector.shape_cast %485 : vector<1x16x176xf32> to vector<16x176xf32>
    %487 = vector.broadcast %11 : vector<1x176xf32> to vector<16x176xf32>
    %488 = arith.mulf %486, %487 : vector<16x176xf32>
    %489 = arith.addf %484, %488 : vector<16x176xf32>
    %c10_303 = arith.constant 10 : index
    %c0_304 = arith.constant 0 : index
    %c0_305 = arith.constant 0 : index
    %490 = vector.load %arg6[%c10_303, %c0_304, %c0_305] : memref<16x16x176xf32, #tpu.memory_space<vmem>>, vector<1x16x176xf32>
    %491 = vector.shape_cast %490 : vector<1x16x176xf32> to vector<16x176xf32>
    %492 = vector.broadcast %12 : vector<1x176xf32> to vector<16x176xf32>
    %493 = arith.mulf %491, %492 : vector<16x176xf32>
    %494 = arith.addf %489, %493 : vector<16x176xf32>
    %c10_306 = arith.constant 10 : index
    %c0_307 = arith.constant 0 : index
    %c0_308 = arith.constant 0 : index
    %495 = vector.load %arg7[%c10_306, %c0_307, %c0_308] : memref<16x16x176xf32, #tpu.memory_space<vmem>>, vector<1x16x176xf32>
    %496 = vector.shape_cast %495 : vector<1x16x176xf32> to vector<16x176xf32>
    %497 = vector.broadcast %13 : vector<1x176xf32> to vector<16x176xf32>
    %498 = arith.mulf %496, %497 : vector<16x176xf32>
    %499 = arith.addf %494, %498 : vector<16x176xf32>
    %c11 = arith.constant 11 : index
    %c0_309 = arith.constant 0 : index
    %c0_310 = arith.constant 0 : index
    %500 = vector.load %arg0[%c11, %c0_309, %c0_310] : memref<16x16x176xf32, #tpu.memory_space<vmem>>, vector<1x16x176xf32>
    %501 = vector.shape_cast %500 : vector<1x16x176xf32> to vector<16x176xf32>
    %502 = vector.broadcast %14 : vector<1x176xf32> to vector<16x176xf32>
    %503 = arith.mulf %501, %502 : vector<16x176xf32>
    %504 = arith.addf %499, %503 : vector<16x176xf32>
    %c11_311 = arith.constant 11 : index
    %c0_312 = arith.constant 0 : index
    %c0_313 = arith.constant 0 : index
    %505 = vector.load %arg6[%c11_311, %c0_312, %c0_313] : memref<16x16x176xf32, #tpu.memory_space<vmem>>, vector<1x16x176xf32>
    %506 = vector.shape_cast %505 : vector<1x16x176xf32> to vector<16x176xf32>
    %507 = vector.broadcast %15 : vector<1x176xf32> to vector<16x176xf32>
    %508 = arith.mulf %506, %507 : vector<16x176xf32>
    %509 = arith.addf %504, %508 : vector<16x176xf32>
    %c11_314 = arith.constant 11 : index
    %c0_315 = arith.constant 0 : index
    %c0_316 = arith.constant 0 : index
    %510 = vector.load %arg7[%c11_314, %c0_315, %c0_316] : memref<16x16x176xf32, #tpu.memory_space<vmem>>, vector<1x16x176xf32>
    %511 = vector.shape_cast %510 : vector<1x16x176xf32> to vector<16x176xf32>
    %512 = vector.broadcast %16 : vector<1x176xf32> to vector<16x176xf32>
    %513 = arith.mulf %511, %512 : vector<16x176xf32>
    %514 = arith.addf %509, %513 : vector<16x176xf32>
    %c144 = arith.constant 144 : index
    %c0_317 = arith.constant 0 : index
    %515 = vector.load %arg8[%c144, %c0_317] : memref<224x176xf32, #tpu.memory_space<vmem>>, vector<16x176xf32>
    tpu.vector_store %arg8[%c144, %c0_317], %514 {strides = array<i32>} : memref<224x176xf32, #tpu.memory_space<vmem>>, vector<16x176xf32>,
    %516 = arith.addf %466, %514 : vector<16x176xf32>
    %517 = arith.mulf %514, %514 : vector<16x176xf32>
    %518 = arith.addf %468, %517 : vector<16x176xf32>
    %cst_318 = arith.constant 0.000000e+00 : f32
    %519 = vector.broadcast %cst_318 : f32 to vector<16x176xf32>
    %c10_319 = arith.constant 10 : index
    %c0_320 = arith.constant 0 : index
    %c0_321 = arith.constant 0 : index
    %520 = vector.load %arg0[%c10_319, %c0_320, %c0_321] : memref<16x16x176xf32, #tpu.memory_space<vmem>>, vector<1x16x176xf32>
    %521 = vector.shape_cast %520 : vector<1x16x176xf32> to vector<16x176xf32>
    %522 = vector.broadcast %8 : vector<1x176xf32> to vector<16x176xf32>
    %523 = arith.mulf %521, %522 : vector<16x176xf32>
    %524 = arith.addf %519, %523 : vector<16x176xf32>
    %c10_322 = arith.constant 10 : index
    %c0_323 = arith.constant 0 : index
    %c0_324 = arith.constant 0 : index
    %525 = vector.load %arg6[%c10_322, %c0_323, %c0_324] : memref<16x16x176xf32, #tpu.memory_space<vmem>>, vector<1x16x176xf32>
    %526 = vector.shape_cast %525 : vector<1x16x176xf32> to vector<16x176xf32>
    %527 = vector.broadcast %9 : vector<1x176xf32> to vector<16x176xf32>
    %528 = arith.mulf %526, %527 : vector<16x176xf32>
    %529 = arith.addf %524, %528 : vector<16x176xf32>
    %c10_325 = arith.constant 10 : index
    %c0_326 = arith.constant 0 : index
    %c0_327 = arith.constant 0 : index
    %530 = vector.load %arg7[%c10_325, %c0_326, %c0_327] : memref<16x16x176xf32, #tpu.memory_space<vmem>>, vector<1x16x176xf32>
    %531 = vector.shape_cast %530 : vector<1x16x176xf32> to vector<16x176xf32>
    %532 = vector.broadcast %10 : vector<1x176xf32> to vector<16x176xf32>
    %533 = arith.mulf %531, %532 : vector<16x176xf32>
    %534 = arith.addf %529, %533 : vector<16x176xf32>
    %c11_328 = arith.constant 11 : index
    %c0_329 = arith.constant 0 : index
    %c0_330 = arith.constant 0 : index
    %535 = vector.load %arg0[%c11_328, %c0_329, %c0_330] : memref<16x16x176xf32, #tpu.memory_space<vmem>>, vector<1x16x176xf32>
    %536 = vector.shape_cast %535 : vector<1x16x176xf32> to vector<16x176xf32>
    %537 = vector.broadcast %11 : vector<1x176xf32> to vector<16x176xf32>
    %538 = arith.mulf %536, %537 : vector<16x176xf32>
    %539 = arith.addf %534, %538 : vector<16x176xf32>
    %c11_331 = arith.constant 11 : index
    %c0_332 = arith.constant 0 : index
    %c0_333 = arith.constant 0 : index
    %540 = vector.load %arg6[%c11_331, %c0_332, %c0_333] : memref<16x16x176xf32, #tpu.memory_space<vmem>>, vector<1x16x176xf32>
    %541 = vector.shape_cast %540 : vector<1x16x176xf32> to vector<16x176xf32>
    %542 = vector.broadcast %12 : vector<1x176xf32> to vector<16x176xf32>
    %543 = arith.mulf %541, %542 : vector<16x176xf32>
    %544 = arith.addf %539, %543 : vector<16x176xf32>
    %c11_334 = arith.constant 11 : index
    %c0_335 = arith.constant 0 : index
    %c0_336 = arith.constant 0 : index
    %545 = vector.load %arg7[%c11_334, %c0_335, %c0_336] : memref<16x16x176xf32, #tpu.memory_space<vmem>>, vector<1x16x176xf32>
    %546 = vector.shape_cast %545 : vector<1x16x176xf32> to vector<16x176xf32>
    %547 = vector.broadcast %13 : vector<1x176xf32> to vector<16x176xf32>
    %548 = arith.mulf %546, %547 : vector<16x176xf32>
    %549 = arith.addf %544, %548 : vector<16x176xf32>
    %c12 = arith.constant 12 : index
    %c0_337 = arith.constant 0 : index
    %c0_338 = arith.constant 0 : index
    %550 = vector.load %arg0[%c12, %c0_337, %c0_338] : memref<16x16x176xf32, #tpu.memory_space<vmem>>, vector<1x16x176xf32>
    %551 = vector.shape_cast %550 : vector<1x16x176xf32> to vector<16x176xf32>
    %552 = vector.broadcast %14 : vector<1x176xf32> to vector<16x176xf32>
    %553 = arith.mulf %551, %552 : vector<16x176xf32>
    %554 = arith.addf %549, %553 : vector<16x176xf32>
    %c12_339 = arith.constant 12 : index
    %c0_340 = arith.constant 0 : index
    %c0_341 = arith.constant 0 : index
    %555 = vector.load %arg6[%c12_339, %c0_340, %c0_341] : memref<16x16x176xf32, #tpu.memory_space<vmem>>, vector<1x16x176xf32>
    %556 = vector.shape_cast %555 : vector<1x16x176xf32> to vector<16x176xf32>
    %557 = vector.broadcast %15 : vector<1x176xf32> to vector<16x176xf32>
    %558 = arith.mulf %556, %557 : vector<16x176xf32>
    %559 = arith.addf %554, %558 : vector<16x176xf32>
    %c12_342 = arith.constant 12 : index
    %c0_343 = arith.constant 0 : index
    %c0_344 = arith.constant 0 : index
    %560 = vector.load %arg7[%c12_342, %c0_343, %c0_344] : memref<16x16x176xf32, #tpu.memory_space<vmem>>, vector<1x16x176xf32>
    %561 = vector.shape_cast %560 : vector<1x16x176xf32> to vector<16x176xf32>
    %562 = vector.broadcast %16 : vector<1x176xf32> to vector<16x176xf32>
    %563 = arith.mulf %561, %562 : vector<16x176xf32>
    %564 = arith.addf %559, %563 : vector<16x176xf32>
    %c160 = arith.constant 160 : index
    %c0_345 = arith.constant 0 : index
    %565 = vector.load %arg8[%c160, %c0_345] : memref<224x176xf32, #tpu.memory_space<vmem>>, vector<16x176xf32>
    tpu.vector_store %arg8[%c160, %c0_345], %564 {strides = array<i32>} : memref<224x176xf32, #tpu.memory_space<vmem>>, vector<16x176xf32>,
    %566 = arith.addf %516, %564 : vector<16x176xf32>
    %567 = arith.mulf %564, %564 : vector<16x176xf32>
    %568 = arith.addf %518, %567 : vector<16x176xf32>
    %cst_346 = arith.constant 0.000000e+00 : f32
    %569 = vector.broadcast %cst_346 : f32 to vector<16x176xf32>
    %c11_347 = arith.constant 11 : index
    %c0_348 = arith.constant 0 : index
    %c0_349 = arith.constant 0 : index
    %570 = vector.load %arg0[%c11_347, %c0_348, %c0_349] : memref<16x16x176xf32, #tpu.memory_space<vmem>>, vector<1x16x176xf32>
    %571 = vector.shape_cast %570 : vector<1x16x176xf32> to vector<16x176xf32>
    %572 = vector.broadcast %8 : vector<1x176xf32> to vector<16x176xf32>
    %573 = arith.mulf %571, %572 : vector<16x176xf32>
    %574 = arith.addf %569, %573 : vector<16x176xf32>
    %c11_350 = arith.constant 11 : index
    %c0_351 = arith.constant 0 : index
    %c0_352 = arith.constant 0 : index
    %575 = vector.load %arg6[%c11_350, %c0_351, %c0_352] : memref<16x16x176xf32, #tpu.memory_space<vmem>>, vector<1x16x176xf32>
    %576 = vector.shape_cast %575 : vector<1x16x176xf32> to vector<16x176xf32>
    %577 = vector.broadcast %9 : vector<1x176xf32> to vector<16x176xf32>
    %578 = arith.mulf %576, %577 : vector<16x176xf32>
    %579 = arith.addf %574, %578 : vector<16x176xf32>
    %c11_353 = arith.constant 11 : index
    %c0_354 = arith.constant 0 : index
    %c0_355 = arith.constant 0 : index
    %580 = vector.load %arg7[%c11_353, %c0_354, %c0_355] : memref<16x16x176xf32, #tpu.memory_space<vmem>>, vector<1x16x176xf32>
    %581 = vector.shape_cast %580 : vector<1x16x176xf32> to vector<16x176xf32>
    %582 = vector.broadcast %10 : vector<1x176xf32> to vector<16x176xf32>
    %583 = arith.mulf %581, %582 : vector<16x176xf32>
    %584 = arith.addf %579, %583 : vector<16x176xf32>
    %c12_356 = arith.constant 12 : index
    %c0_357 = arith.constant 0 : index
    %c0_358 = arith.constant 0 : index
    %585 = vector.load %arg0[%c12_356, %c0_357, %c0_358] : memref<16x16x176xf32, #tpu.memory_space<vmem>>, vector<1x16x176xf32>
    %586 = vector.shape_cast %585 : vector<1x16x176xf32> to vector<16x176xf32>
    %587 = vector.broadcast %11 : vector<1x176xf32> to vector<16x176xf32>
    %588 = arith.mulf %586, %587 : vector<16x176xf32>
    %589 = arith.addf %584, %588 : vector<16x176xf32>
    %c12_359 = arith.constant 12 : index
    %c0_360 = arith.constant 0 : index
    %c0_361 = arith.constant 0 : index
    %590 = vector.load %arg6[%c12_359, %c0_360, %c0_361] : memref<16x16x176xf32, #tpu.memory_space<vmem>>, vector<1x16x176xf32>
    %591 = vector.shape_cast %590 : vector<1x16x176xf32> to vector<16x176xf32>
    %592 = vector.broadcast %12 : vector<1x176xf32> to vector<16x176xf32>
    %593 = arith.mulf %591, %592 : vector<16x176xf32>
    %594 = arith.addf %589, %593 : vector<16x176xf32>
    %c12_362 = arith.constant 12 : index
    %c0_363 = arith.constant 0 : index
    %c0_364 = arith.constant 0 : index
    %595 = vector.load %arg7[%c12_362, %c0_363, %c0_364] : memref<16x16x176xf32, #tpu.memory_space<vmem>>, vector<1x16x176xf32>
    %596 = vector.shape_cast %595 : vector<1x16x176xf32> to vector<16x176xf32>
    %597 = vector.broadcast %13 : vector<1x176xf32> to vector<16x176xf32>
    %598 = arith.mulf %596, %597 : vector<16x176xf32>
    %599 = arith.addf %594, %598 : vector<16x176xf32>
    %c13 = arith.constant 13 : index
    %c0_365 = arith.constant 0 : index
    %c0_366 = arith.constant 0 : index
    %600 = vector.load %arg0[%c13, %c0_365, %c0_366] : memref<16x16x176xf32, #tpu.memory_space<vmem>>, vector<1x16x176xf32>
    %601 = vector.shape_cast %600 : vector<1x16x176xf32> to vector<16x176xf32>
    %602 = vector.broadcast %14 : vector<1x176xf32> to vector<16x176xf32>
    %603 = arith.mulf %601, %602 : vector<16x176xf32>
    %604 = arith.addf %599, %603 : vector<16x176xf32>
    %c13_367 = arith.constant 13 : index
    %c0_368 = arith.constant 0 : index
    %c0_369 = arith.constant 0 : index
    %605 = vector.load %arg6[%c13_367, %c0_368, %c0_369] : memref<16x16x176xf32, #tpu.memory_space<vmem>>, vector<1x16x176xf32>
    %606 = vector.shape_cast %605 : vector<1x16x176xf32> to vector<16x176xf32>
    %607 = vector.broadcast %15 : vector<1x176xf32> to vector<16x176xf32>
    %608 = arith.mulf %606, %607 : vector<16x176xf32>
    %609 = arith.addf %604, %608 : vector<16x176xf32>
    %c13_370 = arith.constant 13 : index
    %c0_371 = arith.constant 0 : index
    %c0_372 = arith.constant 0 : index
    %610 = vector.load %arg7[%c13_370, %c0_371, %c0_372] : memref<16x16x176xf32, #tpu.memory_space<vmem>>, vector<1x16x176xf32>
    %611 = vector.shape_cast %610 : vector<1x16x176xf32> to vector<16x176xf32>
    %612 = vector.broadcast %16 : vector<1x176xf32> to vector<16x176xf32>
    %613 = arith.mulf %611, %612 : vector<16x176xf32>
    %614 = arith.addf %609, %613 : vector<16x176xf32>
    %c176 = arith.constant 176 : index
    %c0_373 = arith.constant 0 : index
    %615 = vector.load %arg8[%c176, %c0_373] : memref<224x176xf32, #tpu.memory_space<vmem>>, vector<16x176xf32>
    tpu.vector_store %arg8[%c176, %c0_373], %614 {strides = array<i32>} : memref<224x176xf32, #tpu.memory_space<vmem>>, vector<16x176xf32>,
    %616 = arith.addf %566, %614 : vector<16x176xf32>
    %617 = arith.mulf %614, %614 : vector<16x176xf32>
    %618 = arith.addf %568, %617 : vector<16x176xf32>
    %cst_374 = arith.constant 0.000000e+00 : f32
    %619 = vector.broadcast %cst_374 : f32 to vector<16x176xf32>
    %c12_375 = arith.constant 12 : index
    %c0_376 = arith.constant 0 : index
    %c0_377 = arith.constant 0 : index
    %620 = vector.load %arg0[%c12_375, %c0_376, %c0_377] : memref<16x16x176xf32, #tpu.memory_space<vmem>>, vector<1x16x176xf32>
    %621 = vector.shape_cast %620 : vector<1x16x176xf32> to vector<16x176xf32>
    %622 = vector.broadcast %8 : vector<1x176xf32> to vector<16x176xf32>
    %623 = arith.mulf %621, %622 : vector<16x176xf32>
    %624 = arith.addf %619, %623 : vector<16x176xf32>
    %c12_378 = arith.constant 12 : index
    %c0_379 = arith.constant 0 : index
    %c0_380 = arith.constant 0 : index
    %625 = vector.load %arg6[%c12_378, %c0_379, %c0_380] : memref<16x16x176xf32, #tpu.memory_space<vmem>>, vector<1x16x176xf32>
    %626 = vector.shape_cast %625 : vector<1x16x176xf32> to vector<16x176xf32>
    %627 = vector.broadcast %9 : vector<1x176xf32> to vector<16x176xf32>
    %628 = arith.mulf %626, %627 : vector<16x176xf32>
    %629 = arith.addf %624, %628 : vector<16x176xf32>
    %c12_381 = arith.constant 12 : index
    %c0_382 = arith.constant 0 : index
    %c0_383 = arith.constant 0 : index
    %630 = vector.load %arg7[%c12_381, %c0_382, %c0_383] : memref<16x16x176xf32, #tpu.memory_space<vmem>>, vector<1x16x176xf32>
    %631 = vector.shape_cast %630 : vector<1x16x176xf32> to vector<16x176xf32>
    %632 = vector.broadcast %10 : vector<1x176xf32> to vector<16x176xf32>
    %633 = arith.mulf %631, %632 : vector<16x176xf32>
    %634 = arith.addf %629, %633 : vector<16x176xf32>
    %c13_384 = arith.constant 13 : index
    %c0_385 = arith.constant 0 : index
    %c0_386 = arith.constant 0 : index
    %635 = vector.load %arg0[%c13_384, %c0_385, %c0_386] : memref<16x16x176xf32, #tpu.memory_space<vmem>>, vector<1x16x176xf32>
    %636 = vector.shape_cast %635 : vector<1x16x176xf32> to vector<16x176xf32>
    %637 = vector.broadcast %11 : vector<1x176xf32> to vector<16x176xf32>
    %638 = arith.mulf %636, %637 : vector<16x176xf32>
    %639 = arith.addf %634, %638 : vector<16x176xf32>
    %c13_387 = arith.constant 13 : index
    %c0_388 = arith.constant 0 : index
    %c0_389 = arith.constant 0 : index
    %640 = vector.load %arg6[%c13_387, %c0_388, %c0_389] : memref<16x16x176xf32, #tpu.memory_space<vmem>>, vector<1x16x176xf32>
    %641 = vector.shape_cast %640 : vector<1x16x176xf32> to vector<16x176xf32>
    %642 = vector.broadcast %12 : vector<1x176xf32> to vector<16x176xf32>
    %643 = arith.mulf %641, %642 : vector<16x176xf32>
    %644 = arith.addf %639, %643 : vector<16x176xf32>
    %c13_390 = arith.constant 13 : index
    %c0_391 = arith.constant 0 : index
    %c0_392 = arith.constant 0 : index
    %645 = vector.load %arg7[%c13_390, %c0_391, %c0_392] : memref<16x16x176xf32, #tpu.memory_space<vmem>>, vector<1x16x176xf32>
    %646 = vector.shape_cast %645 : vector<1x16x176xf32> to vector<16x176xf32>
    %647 = vector.broadcast %13 : vector<1x176xf32> to vector<16x176xf32>
    %648 = arith.mulf %646, %647 : vector<16x176xf32>
    %649 = arith.addf %644, %648 : vector<16x176xf32>
    %c14 = arith.constant 14 : index
    %c0_393 = arith.constant 0 : index
    %c0_394 = arith.constant 0 : index
    %650 = vector.load %arg0[%c14, %c0_393, %c0_394] : memref<16x16x176xf32, #tpu.memory_space<vmem>>, vector<1x16x176xf32>
    %651 = vector.shape_cast %650 : vector<1x16x176xf32> to vector<16x176xf32>
    %652 = vector.broadcast %14 : vector<1x176xf32> to vector<16x176xf32>
    %653 = arith.mulf %651, %652 : vector<16x176xf32>
    %654 = arith.addf %649, %653 : vector<16x176xf32>
    %c14_395 = arith.constant 14 : index
    %c0_396 = arith.constant 0 : index
    %c0_397 = arith.constant 0 : index
    %655 = vector.load %arg6[%c14_395, %c0_396, %c0_397] : memref<16x16x176xf32, #tpu.memory_space<vmem>>, vector<1x16x176xf32>
    %656 = vector.shape_cast %655 : vector<1x16x176xf32> to vector<16x176xf32>
    %657 = vector.broadcast %15 : vector<1x176xf32> to vector<16x176xf32>
    %658 = arith.mulf %656, %657 : vector<16x176xf32>
    %659 = arith.addf %654, %658 : vector<16x176xf32>
    %c14_398 = arith.constant 14 : index
    %c0_399 = arith.constant 0 : index
    %c0_400 = arith.constant 0 : index
    %660 = vector.load %arg7[%c14_398, %c0_399, %c0_400] : memref<16x16x176xf32, #tpu.memory_space<vmem>>, vector<1x16x176xf32>
    %661 = vector.shape_cast %660 : vector<1x16x176xf32> to vector<16x176xf32>
    %662 = vector.broadcast %16 : vector<1x176xf32> to vector<16x176xf32>
    %663 = arith.mulf %661, %662 : vector<16x176xf32>
    %664 = arith.addf %659, %663 : vector<16x176xf32>
    %c192 = arith.constant 192 : index
    %c0_401 = arith.constant 0 : index
    %665 = vector.load %arg8[%c192, %c0_401] : memref<224x176xf32, #tpu.memory_space<vmem>>, vector<16x176xf32>
    tpu.vector_store %arg8[%c192, %c0_401], %664 {strides = array<i32>} : memref<224x176xf32, #tpu.memory_space<vmem>>, vector<16x176xf32>,
    %666 = arith.addf %616, %664 : vector<16x176xf32>
    %667 = arith.mulf %664, %664 : vector<16x176xf32>
    %668 = arith.addf %618, %667 : vector<16x176xf32>
    %cst_402 = arith.constant 0.000000e+00 : f32
    %669 = vector.broadcast %cst_402 : f32 to vector<16x176xf32>
    %c13_403 = arith.constant 13 : index
    %c0_404 = arith.constant 0 : index
    %c0_405 = arith.constant 0 : index
    %670 = vector.load %arg0[%c13_403, %c0_404, %c0_405] : memref<16x16x176xf32, #tpu.memory_space<vmem>>, vector<1x16x176xf32>
    %671 = vector.shape_cast %670 : vector<1x16x176xf32> to vector<16x176xf32>
    %672 = vector.broadcast %8 : vector<1x176xf32> to vector<16x176xf32>
    %673 = arith.mulf %671, %672 : vector<16x176xf32>
    %674 = arith.addf %669, %673 : vector<16x176xf32>
    %c13_406 = arith.constant 13 : index
    %c0_407 = arith.constant 0 : index
    %c0_408 = arith.constant 0 : index
    %675 = vector.load %arg6[%c13_406, %c0_407, %c0_408] : memref<16x16x176xf32, #tpu.memory_space<vmem>>, vector<1x16x176xf32>
    %676 = vector.shape_cast %675 : vector<1x16x176xf32> to vector<16x176xf32>
    %677 = vector.broadcast %9 : vector<1x176xf32> to vector<16x176xf32>
    %678 = arith.mulf %676, %677 : vector<16x176xf32>
    %679 = arith.addf %674, %678 : vector<16x176xf32>
    %c13_409 = arith.constant 13 : index
    %c0_410 = arith.constant 0 : index
    %c0_411 = arith.constant 0 : index
    %680 = vector.load %arg7[%c13_409, %c0_410, %c0_411] : memref<16x16x176xf32, #tpu.memory_space<vmem>>, vector<1x16x176xf32>
    %681 = vector.shape_cast %680 : vector<1x16x176xf32> to vector<16x176xf32>
    %682 = vector.broadcast %10 : vector<1x176xf32> to vector<16x176xf32>
    %683 = arith.mulf %681, %682 : vector<16x176xf32>
    %684 = arith.addf %679, %683 : vector<16x176xf32>
    %c14_412 = arith.constant 14 : index
    %c0_413 = arith.constant 0 : index
    %c0_414 = arith.constant 0 : index
    %685 = vector.load %arg0[%c14_412, %c0_413, %c0_414] : memref<16x16x176xf32, #tpu.memory_space<vmem>>, vector<1x16x176xf32>
    %686 = vector.shape_cast %685 : vector<1x16x176xf32> to vector<16x176xf32>
    %687 = vector.broadcast %11 : vector<1x176xf32> to vector<16x176xf32>
    %688 = arith.mulf %686, %687 : vector<16x176xf32>
    %689 = arith.addf %684, %688 : vector<16x176xf32>
    %c14_415 = arith.constant 14 : index
    %c0_416 = arith.constant 0 : index
    %c0_417 = arith.constant 0 : index
    %690 = vector.load %arg6[%c14_415, %c0_416, %c0_417] : memref<16x16x176xf32, #tpu.memory_space<vmem>>, vector<1x16x176xf32>
    %691 = vector.shape_cast %690 : vector<1x16x176xf32> to vector<16x176xf32>
    %692 = vector.broadcast %12 : vector<1x176xf32> to vector<16x176xf32>
    %693 = arith.mulf %691, %692 : vector<16x176xf32>
    %694 = arith.addf %689, %693 : vector<16x176xf32>
    %c14_418 = arith.constant 14 : index
    %c0_419 = arith.constant 0 : index
    %c0_420 = arith.constant 0 : index
    %695 = vector.load %arg7[%c14_418, %c0_419, %c0_420] : memref<16x16x176xf32, #tpu.memory_space<vmem>>, vector<1x16x176xf32>
    %696 = vector.shape_cast %695 : vector<1x16x176xf32> to vector<16x176xf32>
    %697 = vector.broadcast %13 : vector<1x176xf32> to vector<16x176xf32>
    %698 = arith.mulf %696, %697 : vector<16x176xf32>
    %699 = arith.addf %694, %698 : vector<16x176xf32>
    %c15 = arith.constant 15 : index
    %c0_421 = arith.constant 0 : index
    %c0_422 = arith.constant 0 : index
    %700 = vector.load %arg0[%c15, %c0_421, %c0_422] : memref<16x16x176xf32, #tpu.memory_space<vmem>>, vector<1x16x176xf32>
    %701 = vector.shape_cast %700 : vector<1x16x176xf32> to vector<16x176xf32>
    %702 = vector.broadcast %14 : vector<1x176xf32> to vector<16x176xf32>
    %703 = arith.mulf %701, %702 : vector<16x176xf32>
    %704 = arith.addf %699, %703 : vector<16x176xf32>
    %c15_423 = arith.constant 15 : index
    %c0_424 = arith.constant 0 : index
    %c0_425 = arith.constant 0 : index
    %705 = vector.load %arg6[%c15_423, %c0_424, %c0_425] : memref<16x16x176xf32, #tpu.memory_space<vmem>>, vector<1x16x176xf32>
    %706 = vector.shape_cast %705 : vector<1x16x176xf32> to vector<16x176xf32>
    %707 = vector.broadcast %15 : vector<1x176xf32> to vector<16x176xf32>
    %708 = arith.mulf %706, %707 : vector<16x176xf32>
    %709 = arith.addf %704, %708 : vector<16x176xf32>
    %c15_426 = arith.constant 15 : index
    %c0_427 = arith.constant 0 : index
    %c0_428 = arith.constant 0 : index
    %710 = vector.load %arg7[%c15_426, %c0_427, %c0_428] : memref<16x16x176xf32, #tpu.memory_space<vmem>>, vector<1x16x176xf32>
    %711 = vector.shape_cast %710 : vector<1x16x176xf32> to vector<16x176xf32>
    %712 = vector.broadcast %16 : vector<1x176xf32> to vector<16x176xf32>
    %713 = arith.mulf %711, %712 : vector<16x176xf32>
    %714 = arith.addf %709, %713 : vector<16x176xf32>
    %c208 = arith.constant 208 : index
    %c0_429 = arith.constant 0 : index
    %715 = vector.load %arg8[%c208, %c0_429] : memref<224x176xf32, #tpu.memory_space<vmem>>, vector<16x176xf32>
    tpu.vector_store %arg8[%c208, %c0_429], %714 {strides = array<i32>} : memref<224x176xf32, #tpu.memory_space<vmem>>, vector<16x176xf32>,
    %716 = arith.addf %666, %714 : vector<16x176xf32>
    %717 = arith.mulf %714, %714 : vector<16x176xf32>
    %718 = arith.addf %668, %717 : vector<16x176xf32>
    %719 = vector.extract_strided_slice %716 {offsets = [0, 0], sizes = [14, 176], strides = [1, 1]} : vector<16x176xf32> to vector<14x176xf32>
    %cst_430 = arith.constant dense<0.000000e+00> : vector<176xf32>
    %720 = vector.multi_reduction <add>, %719, %cst_430 [0] : vector<14x176xf32> to vector<176xf32>
    %721 = vector.shape_cast %720 : vector<176xf32> to vector<1x176xf32>
    %cst_431 = arith.constant 1.960000e+02 : f32
    %722 = vector.broadcast %cst_431 : f32 to vector<1x176xf32>
    %723 = arith.divf %721, %722 : vector<1x176xf32>
    %724 = vector.extract_strided_slice %718 {offsets = [0, 0], sizes = [14, 176], strides = [1, 1]} : vector<16x176xf32> to vector<14x176xf32>
    %cst_432 = arith.constant dense<0.000000e+00> : vector<176xf32>
    %725 = vector.multi_reduction <add>, %724, %cst_432 [0] : vector<14x176xf32> to vector<176xf32>
    %726 = vector.shape_cast %725 : vector<176xf32> to vector<1x176xf32>
    %cst_433 = arith.constant 1.960000e+02 : f32
    %727 = vector.broadcast %cst_433 : f32 to vector<1x176xf32>
    %728 = arith.divf %726, %727 : vector<1x176xf32>
    %729 = arith.mulf %723, %723 : vector<1x176xf32>
    %730 = arith.subf %728, %729 : vector<1x176xf32>
    %cst_434 = arith.constant 9.99999974E-6 : f32
    %731 = vector.broadcast %cst_434 : f32 to vector<1x176xf32>
    %732 = arith.addf %730, %731 : vector<1x176xf32>
    %733 = math.rsqrt %732 : vector<1x176xf32>
    %c0_435 = arith.constant 0 : index
    %c0_436 = arith.constant 0 : index
    %734 = vector.load %arg2[%c0_435, %c0_436] : memref<1x176xf32, #tpu.memory_space<vmem>>, vector<1x176xf32>
    %735 = arith.mulf %734, %733 : vector<1x176xf32>
    %c0_437 = arith.constant 0 : index
    %c0_438 = arith.constant 0 : index
    %736 = vector.load %arg3[%c0_437, %c0_438] : memref<1x176xf32, #tpu.memory_space<vmem>>, vector<1x176xf32>
    %737 = arith.mulf %723, %735 : vector<1x176xf32>
    %738 = arith.subf %736, %737 : vector<1x176xf32>
    %739 = vector.shape_cast %735 : vector<1x176xf32> to vector<1x176xf32>
    %740 = vector.broadcast %739 : vector<1x176xf32> to vector<16x176xf32>
    %741 = vector.shape_cast %738 : vector<1x176xf32> to vector<1x176xf32>
    %742 = vector.broadcast %741 : vector<1x176xf32> to vector<16x176xf32>
    %c0_439 = arith.constant 0 : index
    %c0_440 = arith.constant 0 : index
    %743 = vector.load %arg8[%c0_439, %c0_440] : memref<224x176xf32, #tpu.memory_space<vmem>>, vector<16x176xf32>
    %744 = arith.mulf %743, %740 : vector<16x176xf32>
    %745 = arith.addf %744, %742 : vector<16x176xf32>
    %746 = arith.truncf %745 : vector<16x176xf32> to vector<16x176xbf16>
    %c0_441 = arith.constant 0 : index
    %c0_442 = arith.constant 0 : index
    %747 = vector.load %arg9[%c0_441, %c0_442] : memref<224x176xbf16, #tpu.memory_space<vmem>>, vector<16x176xbf16>
    tpu.vector_store %arg9[%c0_441, %c0_442], %746 {strides = array<i32>} : memref<224x176xbf16, #tpu.memory_space<vmem>>, vector<16x176xbf16>,
    %c16_443 = arith.constant 16 : index
    %c0_444 = arith.constant 0 : index
    %748 = vector.load %arg8[%c16_443, %c0_444] : memref<224x176xf32, #tpu.memory_space<vmem>>, vector<16x176xf32>
    %749 = arith.mulf %748, %740 : vector<16x176xf32>
    %750 = arith.addf %749, %742 : vector<16x176xf32>
    %751 = arith.truncf %750 : vector<16x176xf32> to vector<16x176xbf16>
    %c16_445 = arith.constant 16 : index
    %c0_446 = arith.constant 0 : index
    %752 = vector.load %arg9[%c16_445, %c0_446] : memref<224x176xbf16, #tpu.memory_space<vmem>>, vector<16x176xbf16>
    tpu.vector_store %arg9[%c16_445, %c0_446], %751 {strides = array<i32>} : memref<224x176xbf16, #tpu.memory_space<vmem>>, vector<16x176xbf16>,
    %c32_447 = arith.constant 32 : index
    %c0_448 = arith.constant 0 : index
    %753 = vector.load %arg8[%c32_447, %c0_448] : memref<224x176xf32, #tpu.memory_space<vmem>>, vector<16x176xf32>
    %754 = arith.mulf %753, %740 : vector<16x176xf32>
    %755 = arith.addf %754, %742 : vector<16x176xf32>
    %756 = arith.truncf %755 : vector<16x176xf32> to vector<16x176xbf16>
    %c32_449 = arith.constant 32 : index
    %c0_450 = arith.constant 0 : index
    %757 = vector.load %arg9[%c32_449, %c0_450] : memref<224x176xbf16, #tpu.memory_space<vmem>>, vector<16x176xbf16>
    tpu.vector_store %arg9[%c32_449, %c0_450], %756 {strides = array<i32>} : memref<224x176xbf16, #tpu.memory_space<vmem>>, vector<16x176xbf16>,
    %c48_451 = arith.constant 48 : index
    %c0_452 = arith.constant 0 : index
    %758 = vector.load %arg8[%c48_451, %c0_452] : memref<224x176xf32, #tpu.memory_space<vmem>>, vector<16x176xf32>
    %759 = arith.mulf %758, %740 : vector<16x176xf32>
    %760 = arith.addf %759, %742 : vector<16x176xf32>
    %761 = arith.truncf %760 : vector<16x176xf32> to vector<16x176xbf16>
    %c48_453 = arith.constant 48 : index
    %c0_454 = arith.constant 0 : index
    %762 = vector.load %arg9[%c48_453, %c0_454] : memref<224x176xbf16, #tpu.memory_space<vmem>>, vector<16x176xbf16>
    tpu.vector_store %arg9[%c48_453, %c0_454], %761 {strides = array<i32>} : memref<224x176xbf16, #tpu.memory_space<vmem>>, vector<16x176xbf16>,
    %c64_455 = arith.constant 64 : index
    %c0_456 = arith.constant 0 : index
    %763 = vector.load %arg8[%c64_455, %c0_456] : memref<224x176xf32, #tpu.memory_space<vmem>>, vector<16x176xf32>
    %764 = arith.mulf %763, %740 : vector<16x176xf32>
    %765 = arith.addf %764, %742 : vector<16x176xf32>
    %766 = arith.truncf %765 : vector<16x176xf32> to vector<16x176xbf16>
    %c64_457 = arith.constant 64 : index
    %c0_458 = arith.constant 0 : index
    %767 = vector.load %arg9[%c64_457, %c0_458] : memref<224x176xbf16, #tpu.memory_space<vmem>>, vector<16x176xbf16>
    tpu.vector_store %arg9[%c64_457, %c0_458], %766 {strides = array<i32>} : memref<224x176xbf16, #tpu.memory_space<vmem>>, vector<16x176xbf16>,
    %c80_459 = arith.constant 80 : index
    %c0_460 = arith.constant 0 : index
    %768 = vector.load %arg8[%c80_459, %c0_460] : memref<224x176xf32, #tpu.memory_space<vmem>>, vector<16x176xf32>
    %769 = arith.mulf %768, %740 : vector<16x176xf32>
    %770 = arith.addf %769, %742 : vector<16x176xf32>
    %771 = arith.truncf %770 : vector<16x176xf32> to vector<16x176xbf16>
    %c80_461 = arith.constant 80 : index
    %c0_462 = arith.constant 0 : index
    %772 = vector.load %arg9[%c80_461, %c0_462] : memref<224x176xbf16, #tpu.memory_space<vmem>>, vector<16x176xbf16>
    tpu.vector_store %arg9[%c80_461, %c0_462], %771 {strides = array<i32>} : memref<224x176xbf16, #tpu.memory_space<vmem>>, vector<16x176xbf16>,
    %c96_463 = arith.constant 96 : index
    %c0_464 = arith.constant 0 : index
    %773 = vector.load %arg8[%c96_463, %c0_464] : memref<224x176xf32, #tpu.memory_space<vmem>>, vector<16x176xf32>
    %774 = arith.mulf %773, %740 : vector<16x176xf32>
    %775 = arith.addf %774, %742 : vector<16x176xf32>
    %776 = arith.truncf %775 : vector<16x176xf32> to vector<16x176xbf16>
    %c96_465 = arith.constant 96 : index
    %c0_466 = arith.constant 0 : index
    %777 = vector.load %arg9[%c96_465, %c0_466] : memref<224x176xbf16, #tpu.memory_space<vmem>>, vector<16x176xbf16>
    tpu.vector_store %arg9[%c96_465, %c0_466], %776 {strides = array<i32>} : memref<224x176xbf16, #tpu.memory_space<vmem>>, vector<16x176xbf16>,
    %c112_467 = arith.constant 112 : index
    %c0_468 = arith.constant 0 : index
    %778 = vector.load %arg8[%c112_467, %c0_468] : memref<224x176xf32, #tpu.memory_space<vmem>>, vector<16x176xf32>
    %779 = arith.mulf %778, %740 : vector<16x176xf32>
    %780 = arith.addf %779, %742 : vector<16x176xf32>
    %781 = arith.truncf %780 : vector<16x176xf32> to vector<16x176xbf16>
    %c112_469 = arith.constant 112 : index
    %c0_470 = arith.constant 0 : index
    %782 = vector.load %arg9[%c112_469, %c0_470] : memref<224x176xbf16, #tpu.memory_space<vmem>>, vector<16x176xbf16>
    tpu.vector_store %arg9[%c112_469, %c0_470], %781 {strides = array<i32>} : memref<224x176xbf16, #tpu.memory_space<vmem>>, vector<16x176xbf16>,
    %c128_471 = arith.constant 128 : index
    %c0_472 = arith.constant 0 : index
    %783 = vector.load %arg8[%c128_471, %c0_472] : memref<224x176xf32, #tpu.memory_space<vmem>>, vector<16x176xf32>
    %784 = arith.mulf %783, %740 : vector<16x176xf32>
    %785 = arith.addf %784, %742 : vector<16x176xf32>
    %786 = arith.truncf %785 : vector<16x176xf32> to vector<16x176xbf16>
    %c128_473 = arith.constant 128 : index
    %c0_474 = arith.constant 0 : index
    %787 = vector.load %arg9[%c128_473, %c0_474] : memref<224x176xbf16, #tpu.memory_space<vmem>>, vector<16x176xbf16>
    tpu.vector_store %arg9[%c128_473, %c0_474], %786 {strides = array<i32>} : memref<224x176xbf16, #tpu.memory_space<vmem>>, vector<16x176xbf16>,
    %c144_475 = arith.constant 144 : index
    %c0_476 = arith.constant 0 : index
    %788 = vector.load %arg8[%c144_475, %c0_476] : memref<224x176xf32, #tpu.memory_space<vmem>>, vector<16x176xf32>
    %789 = arith.mulf %788, %740 : vector<16x176xf32>
    %790 = arith.addf %789, %742 : vector<16x176xf32>
    %791 = arith.truncf %790 : vector<16x176xf32> to vector<16x176xbf16>
    %c144_477 = arith.constant 144 : index
    %c0_478 = arith.constant 0 : index
    %792 = vector.load %arg9[%c144_477, %c0_478] : memref<224x176xbf16, #tpu.memory_space<vmem>>, vector<16x176xbf16>
    tpu.vector_store %arg9[%c144_477, %c0_478], %791 {strides = array<i32>} : memref<224x176xbf16, #tpu.memory_space<vmem>>, vector<16x176xbf16>,
    %c160_479 = arith.constant 160 : index
    %c0_480 = arith.constant 0 : index
    %793 = vector.load %arg8[%c160_479, %c0_480] : memref<224x176xf32, #tpu.memory_space<vmem>>, vector<16x176xf32>
    %794 = arith.mulf %793, %740 : vector<16x176xf32>
    %795 = arith.addf %794, %742 : vector<16x176xf32>
    %796 = arith.truncf %795 : vector<16x176xf32> to vector<16x176xbf16>
    %c160_481 = arith.constant 160 : index
    %c0_482 = arith.constant 0 : index
    %797 = vector.load %arg9[%c160_481, %c0_482] : memref<224x176xbf16, #tpu.memory_space<vmem>>, vector<16x176xbf16>
    tpu.vector_store %arg9[%c160_481, %c0_482], %796 {strides = array<i32>} : memref<224x176xbf16, #tpu.memory_space<vmem>>, vector<16x176xbf16>,
    %c176_483 = arith.constant 176 : index
    %c0_484 = arith.constant 0 : index
    %798 = vector.load %arg8[%c176_483, %c0_484] : memref<224x176xf32, #tpu.memory_space<vmem>>, vector<16x176xf32>
    %799 = arith.mulf %798, %740 : vector<16x176xf32>
    %800 = arith.addf %799, %742 : vector<16x176xf32>
    %801 = arith.truncf %800 : vector<16x176xf32> to vector<16x176xbf16>
    %c176_485 = arith.constant 176 : index
    %c0_486 = arith.constant 0 : index
    %802 = vector.load %arg9[%c176_485, %c0_486] : memref<224x176xbf16, #tpu.memory_space<vmem>>, vector<16x176xbf16>
    tpu.vector_store %arg9[%c176_485, %c0_486], %801 {strides = array<i32>} : memref<224x176xbf16, #tpu.memory_space<vmem>>, vector<16x176xbf16>,
    %c192_487 = arith.constant 192 : index
    %c0_488 = arith.constant 0 : index
    %803 = vector.load %arg8[%c192_487, %c0_488] : memref<224x176xf32, #tpu.memory_space<vmem>>, vector<16x176xf32>
    %804 = arith.mulf %803, %740 : vector<16x176xf32>
    %805 = arith.addf %804, %742 : vector<16x176xf32>
    %806 = arith.truncf %805 : vector<16x176xf32> to vector<16x176xbf16>
    %c192_489 = arith.constant 192 : index
    %c0_490 = arith.constant 0 : index
    %807 = vector.load %arg9[%c192_489, %c0_490] : memref<224x176xbf16, #tpu.memory_space<vmem>>, vector<16x176xbf16>
    tpu.vector_store %arg9[%c192_489, %c0_490], %806 {strides = array<i32>} : memref<224x176xbf16, #tpu.memory_space<vmem>>, vector<16x176xbf16>,
    %c208_491 = arith.constant 208 : index
    %c0_492 = arith.constant 0 : index
    %808 = vector.load %arg8[%c208_491, %c0_492] : memref<224x176xf32, #tpu.memory_space<vmem>>, vector<16x176xf32>
    %809 = arith.mulf %808, %740 : vector<16x176xf32>
    %810 = arith.addf %809, %742 : vector<16x176xf32>
    %811 = arith.truncf %810 : vector<16x176xf32> to vector<16x176xbf16>
    %c208_493 = arith.constant 208 : index
    %c0_494 = arith.constant 0 : index
    %812 = vector.load %arg9[%c208_493, %c0_494] : memref<224x176xbf16, #tpu.memory_space<vmem>>, vector<16x176xbf16>
    tpu.vector_store %arg9[%c208_493, %c0_494], %811 {strides = array<i32>} : memref<224x176xbf16, #tpu.memory_space<vmem>>, vector<16x176xbf16>,
    %c0_495 = arith.constant 0 : index
    %c0_496 = arith.constant 0 : index
    %813 = vector.load %arg9[%c0_495, %c0_496] : memref<224x176xbf16, #tpu.memory_space<vmem>>, vector<224x176xbf16>
    %c0_497 = arith.constant 0 : index
    %c0_498 = arith.constant 0 : index
    %814 = vector.load %arg4[%c0_497, %c0_498] : memref<176x176xbf16, #tpu.memory_space<vmem>>, vector<176x176xbf16>
    %cst_499 = arith.constant dense<0.000000e+00> : vector<224x176xf32>
    %815 = tpu.matmul %813, %814, %cst_499 {dimension_numbers = #tpu.dot_dimension_numbers<[1], [0], [0], [1], [0, 0, 1, 1], [], []>} : vector<224x176xbf16>, vector<176x176xbf16>, vector<224x176xf32> -> vector<224x176xf32>
    %c0_500 = arith.constant 0 : index
    %c0_501 = arith.constant 0 : index
    %816 = vector.load %arg5[%c0_500, %c0_501] : memref<224x176xf32, #tpu.memory_space<vmem>>, vector<224x176xf32>
    tpu.vector_store %arg5[%c0_500, %c0_501], %815 {strides = array<i32>} : memref<224x176xf32, #tpu.memory_space<vmem>>, vector<224x176xf32>,
    return
  }
}

</mosaic_0001>

<llo_original>
// kernel: fused_forward.1
$region0: #{fused_forward.1}
  #allocation0 [shape = 'u32[]', space=smem, size = 0x4, offset = 0x4, fixed_abs, tag = 'smem constant byte address 0x4 - core index']
  #allocation1 [shape = 'u32[72,128]{1,0:T(1,128)}', space=vmem, size = 0x9000, scoped, tag = 'internal scratch']
  #allocation2 [shape = 'f32[16,16,176]{2,1,0:T(8,128)}', space=vmem, size = 0x40000, scoped, tag = 'scratch operand']
  #allocation3 [shape = 'f32[16,16,176]{2,1,0:T(8,128)}', space=vmem, size = 0x40000, scoped, tag = 'scratch operand']
  #allocation4 [shape = 'f32[224,176]{1,0:T(8,128)}', space=vmem, size = 0x38000, scoped, tag = 'scratch operand']
  #allocation5 [shape = 'bf16[224,176]{1,0:T(8,128)(2,1)}', space=vmem, size = 0x1c000, scoped, tag = 'scratch operand']
  %s0 = inlined_call_operand.vmem [shape: f32[16,16,176], index: 0, kind: input, shape index: {}]
  %s1 = inlined_call_operand.vmem [shape: f32[9,176], index: 1, kind: input, shape index: {}]
  %s2 = inlined_call_operand.vmem [shape: f32[1,176], index: 2, kind: input, shape index: {}]
  %s3 = inlined_call_operand.vmem [shape: f32[1,176], index: 3, kind: input, shape index: {}]
  %s4 = inlined_call_operand.vmem [shape: bf16[176,176], index: 4, kind: input, shape index: {}]
  %s5 = inlined_call_operand.vmem [shape: f32[224,176], index: 5, kind: output, shape index: {}]
  %s6 = sld [smem:[#allocation0]]
  $region30: #{fused_forward.1} parent=0
    _
  %s8 = ssub.s32 1, %s6
  %s9 = scalar_select 0, %s8, %s6
  // Predicated region
  $region2: #{fused_forward.1} parent=0 // pred_check
    _
  $region3: #{fused_forward.1} parent=0 // pred_check_branch
    %11 = sbr.rel (0) target = $region5
  $region4: #{fused_forward.1} parent=0 // pred_region
    _
  $region5: #{fused_forward.1} parent=0 // pred_fallthru
    _
  // Predicated region
  $region6: #{fused_forward.1} parent=0 // pred_check
    _
  $region7: #{fused_forward.1} parent=0 // pred_check_branch
    %13 = sbr.rel (0) target = $region9
  $region8: #{fused_forward.1} parent=0 // pred_region
    _
  $region9: #{fused_forward.1} parent=0 // pred_fallthru
    _
  // Predicated region
  $region10: #{fused_forward.1} parent=0 // pred_check
    _
  $region11: #{fused_forward.1} parent=0 // pred_check_branch
    %15 = sbr.rel (0) target = $region13
  $region12: #{fused_forward.1} parent=0 // pred_region
    _
  $region13: #{fused_forward.1} parent=0 // pred_fallthru
    _
  // Predicated region
  $region14: #{fused_forward.1} parent=0 // pred_check
    _
  $region15: #{fused_forward.1} parent=0 // pred_check_branch
    %17 = sbr.rel (0) target = $region17
  $region16: #{fused_forward.1} parent=0 // pred_region
    _
  $region17: #{fused_forward.1} parent=0 // pred_fallthru
    _
  // Predicated region
  $region18: #{fused_forward.1} parent=0 // pred_check
    _
  $region19: #{fused_forward.1} parent=0 // pred_check_branch
    %19 = sbr.rel (0) target = $region21
  $region20: #{fused_forward.1} parent=0 // pred_region
    _
  $region21: #{fused_forward.1} parent=0 // pred_fallthru
    _
  %21 = vst [vmem:[#allocation2] sm:$0xff] 0.0
  %vm22 = vcmask 392192
  %23 = vst.msk [vmem:[#allocation2 + $0x8] sm:$0xff] %vm22, 0.0
  %24 = vst [vmem:[#allocation2 + $0x10] sm:$0xff] 0.0
  %25 = vst.msk [vmem:[#allocation2 + $0x18] sm:$0xff] %vm22, 0.0
  %26 = vst [vmem:[#allocation2 + $0x20] sm:$0xff] 0.0
  %27 = vst.msk [vmem:[#allocation2 + $0x28] sm:$0xff] %vm22, 0.0
  %28 = vst [vmem:[#allocation2 + $0x30] sm:$0xff] 0.0
  %29 = vst.msk [vmem:[#allocation2 + $0x38] sm:$0xff] %vm22, 0.0
  %30 = vst [vmem:[#allocation2 + $0x40] sm:$0xff] 0.0
  %31 = vst.msk [vmem:[#allocation2 + $0x48] sm:$0xff] %vm22, 0.0
  %32 = vst [vmem:[#allocation2 + $0x50] sm:$0xff] 0.0
  %33 = vst.msk [vmem:[#allocation2 + $0x58] sm:$0xff] %vm22, 0.0
  %34 = vst [vmem:[#allocation2 + $0x60] sm:$0xff] 0.0
  %35 = vst.msk [vmem:[#allocation2 + $0x68] sm:$0xff] %vm22, 0.0
  %36 = vst [vmem:[#allocation2 + $0x70] sm:$0xff] 0.0
  %37 = vst.msk [vmem:[#allocation2 + $0x78] sm:$0xff] %vm22, 0.0
  %38 = vst [vmem:[#allocation2 + $0x80] sm:$0xff] 0.0
  %39 = vst.msk [vmem:[#allocation2 + $0x88] sm:$0xff] %vm22, 0.0
  %40 = vst [vmem:[#allocation2 + $0x90] sm:$0xff] 0.0
  %41 = vst.msk [vmem:[#allocation2 + $0x98] sm:$0xff] %vm22, 0.0
  %42 = vst [vmem:[#allocation2 + $0xa0] sm:$0xff] 0.0
  %43 = vst.msk [vmem:[#allocation2 + $0xa8] sm:$0xff] %vm22, 0.0
  %44 = vst [vmem:[#allocation2 + $0xb0] sm:$0xff] 0.0
  %45 = vst.msk [vmem:[#allocation2 + $0xb8] sm:$0xff] %vm22, 0.0
  %46 = vst [vmem:[#allocation2 + $0xc0] sm:$0xff] 0.0
  %47 = vst.msk [vmem:[#allocation2 + $0xc8] sm:$0xff] %vm22, 0.0
  %48 = vst [vmem:[#allocation2 + $0xd0] sm:$0xff] 0.0
  %49 = vst.msk [vmem:[#allocation2 + $0xd8] sm:$0xff] %vm22, 0.0
  %50 = vst [vmem:[#allocation2 + $0xe0] sm:$0xff] 0.0
  %51 = vst.msk [vmem:[#allocation2 + $0xe8] sm:$0xff] %vm22, 0.0
  %52 = vst [vmem:[#allocation2 + $0xf0] sm:$0xff] 0.0
  %53 = vst.msk [vmem:[#allocation2 + $0xf8] sm:$0xff] %vm22, 0.0
  %54 = vst [vmem:[#allocation2 + $0x100] sm:$0xff] 0.0
  %55 = vst.msk [vmem:[#allocation2 + $0x108] sm:$0xff] %vm22, 0.0
  %56 = vst [vmem:[#allocation2 + $0x110] sm:$0xff] 0.0
  %57 = vst.msk [vmem:[#allocation2 + $0x118] sm:$0xff] %vm22, 0.0
  %58 = vst [vmem:[#allocation2 + $0x120] sm:$0xff] 0.0
  %59 = vst.msk [vmem:[#allocation2 + $0x128] sm:$0xff] %vm22, 0.0
  %60 = vst [vmem:[#allocation2 + $0x130] sm:$0xff] 0.0
  %61 = vst.msk [vmem:[#allocation2 + $0x138] sm:$0xff] %vm22, 0.0
  %62 = vst [vmem:[#allocation2 + $0x140] sm:$0xff] 0.0
  %63 = vst.msk [vmem:[#allocation2 + $0x148] sm:$0xff] %vm22, 0.0
  %64 = vst [vmem:[#allocation2 + $0x150] sm:$0xff] 0.0
  %65 = vst.msk [vmem:[#allocation2 + $0x158] sm:$0xff] %vm22, 0.0
  %66 = vst [vmem:[#allocation2 + $0x160] sm:$0xff] 0.0
  %67 = vst.msk [vmem:[#allocation2 + $0x168] sm:$0xff] %vm22, 0.0
  %68 = vst [vmem:[#allocation2 + $0x170] sm:$0xff] 0.0
  %69 = vst.msk [vmem:[#allocation2 + $0x178] sm:$0xff] %vm22, 0.0
  %70 = vst [vmem:[#allocation2 + $0x180] sm:$0xff] 0.0
  %71 = vst.msk [vmem:[#allocation2 + $0x188] sm:$0xff] %vm22, 0.0
  %72 = vst [vmem:[#allocation2 + $0x190] sm:$0xff] 0.0
  %73 = vst.msk [vmem:[#allocation2 + $0x198] sm:$0xff] %vm22, 0.0
  %74 = vst [vmem:[#allocation2 + $0x1a0] sm:$0xff] 0.0
  %75 = vst.msk [vmem:[#allocation2 + $0x1a8] sm:$0xff] %vm22, 0.0
  %76 = vst [vmem:[#allocation2 + $0x1b0] sm:$0xff] 0.0
  %77 = vst.msk [vmem:[#allocation2 + $0x1b8] sm:$0xff] %vm22, 0.0
  %78 = vst [vmem:[#allocation2 + $0x1c0] sm:$0xff] 0.0
  %79 = vst.msk [vmem:[#allocation2 + $0x1c8] sm:$0xff] %vm22, 0.0
  %80 = vst [vmem:[#allocation2 + $0x1d0] sm:$0xff] 0.0
  %81 = vst.msk [vmem:[#allocation2 + $0x1d8] sm:$0xff] %vm22, 0.0
  %82 = vst [vmem:[#allocation2 + $0x1e0] sm:$0xff] 0.0
  %83 = vst.msk [vmem:[#allocation2 + $0x1e8] sm:$0xff] %vm22, 0.0
  %84 = vst [vmem:[#allocation2 + $0x1f0] sm:$0xff] 0.0
  %85 = vst.msk [vmem:[#allocation2 + $0x1f8] sm:$0xff] %vm22, 0.0
  %86 = vst [vmem:[#allocation3] sm:$0xff] 0.0
  %87 = vst.msk [vmem:[#allocation3 + $0x8] sm:$0xff] %vm22, 0.0
  %88 = vst [vmem:[#allocation3 + $0x10] sm:$0xff] 0.0
  %89 = vst.msk [vmem:[#allocation3 + $0x18] sm:$0xff] %vm22, 0.0
  %90 = vst [vmem:[#allocation3 + $0x20] sm:$0xff] 0.0
  %91 = vst.msk [vmem:[#allocation3 + $0x28] sm:$0xff] %vm22, 0.0
  %92 = vst [vmem:[#allocation3 + $0x30] sm:$0xff] 0.0
  %93 = vst.msk [vmem:[#allocation3 + $0x38] sm:$0xff] %vm22, 0.0
  %94 = vst [vmem:[#allocation3 + $0x40] sm:$0xff] 0.0
  %95 = vst.msk [vmem:[#allocation3 + $0x48] sm:$0xff] %vm22, 0.0
  %96 = vst [vmem:[#allocation3 + $0x50] sm:$0xff] 0.0
  %97 = vst.msk [vmem:[#allocation3 + $0x58] sm:$0xff] %vm22, 0.0
  %98 = vst [vmem:[#allocation3 + $0x60] sm:$0xff] 0.0
  %99 = vst.msk [vmem:[#allocation3 + $0x68] sm:$0xff] %vm22, 0.0
  %100 = vst [vmem:[#allocation3 + $0x70] sm:$0xff] 0.0
  %101 = vst.msk [vmem:[#allocation3 + $0x78] sm:$0xff] %vm22, 0.0
  %102 = vst [vmem:[#allocation3 + $0x80] sm:$0xff] 0.0
  %103 = vst.msk [vmem:[#allocation3 + $0x88] sm:$0xff] %vm22, 0.0
  %104 = vst [vmem:[#allocation3 + $0x90] sm:$0xff] 0.0
  %105 = vst.msk [vmem:[#allocation3 + $0x98] sm:$0xff] %vm22, 0.0
  %106 = vst [vmem:[#allocation3 + $0xa0] sm:$0xff] 0.0
  %107 = vst.msk [vmem:[#allocation3 + $0xa8] sm:$0xff] %vm22, 0.0
  %108 = vst [vmem:[#allocation3 + $0xb0] sm:$0xff] 0.0
  %109 = vst.msk [vmem:[#allocation3 + $0xb8] sm:$0xff] %vm22, 0.0
  %110 = vst [vmem:[#allocation3 + $0xc0] sm:$0xff] 0.0
  %111 = vst.msk [vmem:[#allocation3 + $0xc8] sm:$0xff] %vm22, 0.0
  %112 = vst [vmem:[#allocation3 + $0xd0] sm:$0xff] 0.0
  %113 = vst.msk [vmem:[#allocation3 + $0xd8] sm:$0xff] %vm22, 0.0
  %114 = vst [vmem:[#allocation3 + $0xe0] sm:$0xff] 0.0
  %115 = vst.msk [vmem:[#allocation3 + $0xe8] sm:$0xff] %vm22, 0.0
  %116 = vst [vmem:[#allocation3 + $0xf0] sm:$0xff] 0.0
  %117 = vst.msk [vmem:[#allocation3 + $0xf8] sm:$0xff] %vm22, 0.0
  %118 = vst [vmem:[#allocation3 + $0x100] sm:$0xff] 0.0
  %119 = vst.msk [vmem:[#allocation3 + $0x108] sm:$0xff] %vm22, 0.0
  %120 = vst [vmem:[#allocation3 + $0x110] sm:$0xff] 0.0
  %121 = vst.msk [vmem:[#allocation3 + $0x118] sm:$0xff] %vm22, 0.0
  %122 = vst [vmem:[#allocation3 + $0x120] sm:$0xff] 0.0
  %123 = vst.msk [vmem:[#allocation3 + $0x128] sm:$0xff] %vm22, 0.0
  %124 = vst [vmem:[#allocation3 + $0x130] sm:$0xff] 0.0
  %125 = vst.msk [vmem:[#allocation3 + $0x138] sm:$0xff] %vm22, 0.0
  %126 = vst [vmem:[#allocation3 + $0x140] sm:$0xff] 0.0
  %127 = vst.msk [vmem:[#allocation3 + $0x148] sm:$0xff] %vm22, 0.0
  %128 = vst [vmem:[#allocation3 + $0x150] sm:$0xff] 0.0
  %129 = vst.msk [vmem:[#allocation3 + $0x158] sm:$0xff] %vm22, 0.0
  %130 = vst [vmem:[#allocation3 + $0x160] sm:$0xff] 0.0
  %131 = vst.msk [vmem:[#allocation3 + $0x168] sm:$0xff] %vm22, 0.0
  %132 = vst [vmem:[#allocation3 + $0x170] sm:$0xff] 0.0
  %133 = vst.msk [vmem:[#allocation3 + $0x178] sm:$0xff] %vm22, 0.0
  %134 = vst [vmem:[#allocation3 + $0x180] sm:$0xff] 0.0
  %135 = vst.msk [vmem:[#allocation3 + $0x188] sm:$0xff] %vm22, 0.0
  %136 = vst [vmem:[#allocation3 + $0x190] sm:$0xff] 0.0
  %137 = vst.msk [vmem:[#allocation3 + $0x198] sm:$0xff] %vm22, 0.0
  %138 = vst [vmem:[#allocation3 + $0x1a0] sm:$0xff] 0.0
  %139 = vst.msk [vmem:[#allocation3 + $0x1a8] sm:$0xff] %vm22, 0.0
  %140 = vst [vmem:[#allocation3 + $0x1b0] sm:$0xff] 0.0
  %141 = vst.msk [vmem:[#allocation3 + $0x1b8] sm:$0xff] %vm22, 0.0
  %142 = vst [vmem:[#allocation3 + $0x1c0] sm:$0xff] 0.0
  %143 = vst.msk [vmem:[#allocation3 + $0x1c8] sm:$0xff] %vm22, 0.0
  %144 = vst [vmem:[#allocation3 + $0x1d0] sm:$0xff] 0.0
  %145 = vst.msk [vmem:[#allocation3 + $0x1d8] sm:$0xff] %vm22, 0.0
  %146 = vst [vmem:[#allocation3 + $0x1e0] sm:$0xff] 0.0
  %147 = vst.msk [vmem:[#allocation3 + $0x1e8] sm:$0xff] %vm22, 0.0
  %148 = vst [vmem:[#allocation3 + $0x1f0] sm:$0xff] 0.0
  %149 = vst.msk [vmem:[#allocation3 + $0x1f8] sm:$0xff] %vm22, 0.0
  %v150 = vld [vmem:[%s0] sm:$0xfe]
  %v151 = vld [vmem:[%s0 + $0x8] sm:$0xfe]
  %v152 = vld [vmem:[%s0 + $0x10] sm:$0x7f]
  %v153 = vld [vmem:[%s0 + $0x18] sm:$0x7f]
  %v154 = vld [vmem:[%s0 + $0x20] sm:$0xfe]
  %v155 = vld [vmem:[%s0 + $0x28] sm:$0xfe]
  %v156 = vld [vmem:[%s0 + $0x30] sm:$0x7f]
  %v157 = vld [vmem:[%s0 + $0x38] sm:$0x7f]
  %v158 = vld [vmem:[%s0 + $0x40] sm:$0xfe]
  %v159 = vld [vmem:[%s0 + $0x48] sm:$0xfe]
  %v160 = vld [vmem:[%s0 + $0x50] sm:$0x7f]
  %v161 = vld [vmem:[%s0 + $0x58] sm:$0x7f]
  %v162 = vld [vmem:[%s0 + $0x60] sm:$0xfe]
  %v163 = vld [vmem:[%s0 + $0x68] sm:$0xfe]
  %v164 = vld [vmem:[%s0 + $0x70] sm:$0x7f]
  %v165 = vld [vmem:[%s0 + $0x78] sm:$0x7f]
  %v166 = vld [vmem:[%s0 + $0x80] sm:$0xfe]
  %v167 = vld [vmem:[%s0 + $0x88] sm:$0xfe]
  %v168 = vld [vmem:[%s0 + $0x90] sm:$0x7f]
  %v169 = vld [vmem:[%s0 + $0x98] sm:$0x7f]
  %v170 = vld [vmem:[%s0 + $0xa0] sm:$0xfe]
  %v171 = vld [vmem:[%s0 + $0xa8] sm:$0xfe]
  %v172 = vld [vmem:[%s0 + $0xb0] sm:$0x7f]
  %v173 = vld [vmem:[%s0 + $0xb8] sm:$0x7f]
  %v174 = vld [vmem:[%s0 + $0xc0] sm:$0xfe]
  %v175 = vld [vmem:[%s0 + $0xc8] sm:$0xfe]
  %v176 = vld [vmem:[%s0 + $0xd0] sm:$0x7f]
  %v177 = vld [vmem:[%s0 + $0xd8] sm:$0x7f]
  %v178 = vld [vmem:[%s0 + $0xe0] sm:$0xfe]
  %v179 = vld [vmem:[%s0 + $0xe8] sm:$0xfe]
  %v180 = vld [vmem:[%s0 + $0xf0] sm:$0x7f]
  %v181 = vld [vmem:[%s0 + $0xf8] sm:$0x7f]
  %v182 = vld [vmem:[%s0 + $0x100] sm:$0xfe]
  %v183 = vld [vmem:[%s0 + $0x108] sm:$0xfe]
  %v184 = vld [vmem:[%s0 + $0x110] sm:$0x7f]
  %v185 = vld [vmem:[%s0 + $0x118] sm:$0x7f]
  %v186 = vld [vmem:[%s0 + $0x120] sm:$0xfe]
  %v187 = vld [vmem:[%s0 + $0x128] sm:$0xfe]
  %v188 = vld [vmem:[%s0 + $0x130] sm:$0x7f]
  %v189 = vld [vmem:[%s0 + $0x138] sm:$0x7f]
  %v190 = vld [vmem:[%s0 + $0x140] sm:$0xfe]
  %v191 = vld [vmem:[%s0 + $0x148] sm:$0xfe]
  %v192 = vld [vmem:[%s0 + $0x150] sm:$0x7f]
  %v193 = vld [vmem:[%s0 + $0x158] sm:$0x7f]
  %v194 = vld [vmem:[%s0 + $0x160] sm:$0xfe]
  %v195 = vld [vmem:[%s0 + $0x168] sm:$0xfe]
  %v196 = vld [vmem:[%s0 + $0x170] sm:$0x7f]
  %v197 = vld [vmem:[%s0 + $0x178] sm:$0x7f]
  %v198 = vld [vmem:[%s0 + $0x180] sm:$0xfe]
  %v199 = vld [vmem:[%s0 + $0x188] sm:$0xfe]
  %v200 = vld [vmem:[%s0 + $0x190] sm:$0x7f]
  %v201 = vld [vmem:[%s0 + $0x198] sm:$0x7f]
  %v202 = vld [vmem:[%s0 + $0x1a0] sm:$0xfe]
  %v203 = vld [vmem:[%s0 + $0x1a8] sm:$0xfe]
  %v204 = vld [vmem:[%s0 + $0x1b0] sm:$0x7f]
  %v205 = vld [vmem:[%s0 + $0x1b8] sm:$0x7f]
  %v206 = vld [vmem:[%s0 + $0x1c0] sm:$0xfe]
  %v207 = vld [vmem:[%s0 + $0x1c8] sm:$0xfe]
  %v208 = vld [vmem:[%s0 + $0x1d0] sm:$0x7f]
  %v209 = vld [vmem:[%s0 + $0x1d8] sm:$0x7f]
  %v210 = vld [vmem:[%s0 + $0x1e0] sm:$0xfe]
  %v211 = vld [vmem:[%s0 + $0x1e8] sm:$0xfe]
  %v212 = vld [vmem:[%s0 + $0x1f0] sm:$0x7f]
  %v213 = vld [vmem:[%s0 + $0x1f8] sm:$0x7f]
  %vm278 = vcmask 1046528
  %v279 = vrot.slane %v150, 1
  %v280 = vrot.slane %v152, 1
  %v281 = vsel %vm278, %v279, %v280
  %v282 = vrot.slane %v151, 1
  %v283 = vrot.slane %v153, 1
  %v284 = vsel %vm278, %v282, %v283
  %v285 = vrot.slane %v154, 1
  %v286 = vrot.slane %v156, 1
  %v287 = vsel %vm278, %v285, %v286
  %v288 = vrot.slane %v155, 1
  %v289 = vrot.slane %v157, 1
  %v290 = vsel %vm278, %v288, %v289
  %v291 = vrot.slane %v158, 1
  %v292 = vrot.slane %v160, 1
  %v293 = vsel %vm278, %v291, %v292
  %v294 = vrot.slane %v159, 1
  %v295 = vrot.slane %v161, 1
  %v296 = vsel %vm278, %v294, %v295
  %v297 = vrot.slane %v162, 1
  %v298 = vrot.slane %v164, 1
  %v299 = vsel %vm278, %v297, %v298
  %v300 = vrot.slane %v163, 1
  %v301 = vrot.slane %v165, 1
  %v302 = vsel %vm278, %v300, %v301
  %v303 = vrot.slane %v166, 1
  %v304 = vrot.slane %v168, 1
  %v305 = vsel %vm278, %v303, %v304
  %v306 = vrot.slane %v167, 1
  %v307 = vrot.slane %v169, 1
  %v308 = vsel %vm278, %v306, %v307
  %v309 = vrot.slane %v170, 1
  %v310 = vrot.slane %v172, 1
  %v311 = vsel %vm278, %v309, %v310
  %v312 = vrot.slane %v171, 1
  %v313 = vrot.slane %v173, 1
  %v314 = vsel %vm278, %v312, %v313
  %v315 = vrot.slane %v174, 1
  %v316 = vrot.slane %v176, 1
  %v317 = vsel %vm278, %v315, %v316
  %v318 = vrot.slane %v175, 1
  %v319 = vrot.slane %v177, 1
  %v320 = vsel %vm278, %v318, %v319
  %v321 = vrot.slane %v178, 1
  %v322 = vrot.slane %v180, 1
  %v323 = vsel %vm278, %v321, %v322
  %v324 = vrot.slane %v179, 1
  %v325 = vrot.slane %v181, 1
  %v326 = vsel %vm278, %v324, %v325
  %v327 = vrot.slane %v182, 1
  %v328 = vrot.slane %v184, 1
  %v329 = vsel %vm278, %v327, %v328
  %v330 = vrot.slane %v183, 1
  %v331 = vrot.slane %v185, 1
  %v332 = vsel %vm278, %v330, %v331
  %v333 = vrot.slane %v186, 1
  %v334 = vrot.slane %v188, 1
  %v335 = vsel %vm278, %v333, %v334
  %v336 = vrot.slane %v187, 1
  %v337 = vrot.slane %v189, 1
  %v338 = vsel %vm278, %v336, %v337
  %v339 = vrot.slane %v190, 1
  %v340 = vrot.slane %v192, 1
  %v341 = vsel %vm278, %v339, %v340
  %v342 = vrot.slane %v191, 1
  %v343 = vrot.slane %v193, 1
  %v344 = vsel %vm278, %v342, %v343
  %v345 = vrot.slane %v194, 1
  %v346 = vrot.slane %v196, 1
  %v347 = vsel %vm278, %v345, %v346
  %v348 = vrot.slane %v195, 1
  %v349 = vrot.slane %v197, 1
  %v350 = vsel %vm278, %v348, %v349
  %v351 = vrot.slane %v198, 1
  %v352 = vrot.slane %v200, 1
  %v353 = vsel %vm278, %v351, %v352
  %v354 = vrot.slane %v199, 1
  %v355 = vrot.slane %v201, 1
  %v356 = vsel %vm278, %v354, %v355
  %v357 = vrot.slane %v202, 1
  %v358 = vrot.slane %v204, 1
  %v359 = vsel %vm278, %v357, %v358
  %v360 = vrot.slane %v203, 1
  %v361 = vrot.slane %v205, 1
  %v362 = vsel %vm278, %v360, %v361
  %v363 = vrot.slane %v206, 1
  %v364 = vrot.slane %v208, 1
  %v365 = vsel %vm278, %v363, %v364
  %v366 = vrot.slane %v207, 1
  %v367 = vrot.slane %v209, 1
  %v368 = vsel %vm278, %v366, %v367
  %v369 = vrot.slane %v210, 1
  %v370 = vrot.slane %v212, 1
  %v371 = vsel %vm278, %v369, %v370
  %v372 = vrot.slane %v211, 1
  %v373 = vrot.slane %v213, 1
  %v374 = vsel %vm278, %v372, %v373
  %439 = vst [vmem:[#allocation2] sm:$0xff] %v281
  %440 = vst.msk [vmem:[#allocation2 + $0x8] sm:$0xff] %vm22, %v284
  %441 = vst [vmem:[#allocation2 + $0x10] sm:$0x3f] %v280
  %vm442 = vcmask 390144
  %443 = vst.msk [vmem:[#allocation2 + $0x18] sm:$0x3f] %vm442, %v283
  %444 = vst [vmem:[#allocation2 + $0x20] sm:$0xff] %v287
  %445 = vst.msk [vmem:[#allocation2 + $0x28] sm:$0xff] %vm22, %v290
  %446 = vst [vmem:[#allocation2 + $0x30] sm:$0x3f] %v286
  %447 = vst.msk [vmem:[#allocation2 + $0x38] sm:$0x3f] %vm442, %v289
  %448 = vst [vmem:[#allocation2 + $0x40] sm:$0xff] %v293
  %449 = vst.msk [vmem:[#allocation2 + $0x48] sm:$0xff] %vm22, %v296
  %450 = vst [vmem:[#allocation2 + $0x50] sm:$0x3f] %v292
  %451 = vst.msk [vmem:[#allocation2 + $0x58] sm:$0x3f] %vm442, %v295
  %452 = vst [vmem:[#allocation2 + $0x60] sm:$0xff] %v299
  %453 = vst.msk [vmem:[#allocation2 + $0x68] sm:$0xff] %vm22, %v302
  %454 = vst [vmem:[#allocation2 + $0x70] sm:$0x3f] %v298
  %455 = vst.msk [vmem:[#allocation2 + $0x78] sm:$0x3f] %vm442, %v301
  %456 = vst [vmem:[#allocation2 + $0x80] sm:$0xff] %v305
  %457 = vst.msk [vmem:[#allocation2 + $0x88] sm:$0xff] %vm22, %v308
  %458 = vst [vmem:[#allocation2 + $0x90] sm:$0x3f] %v304
  %459 = vst.msk [vmem:[#allocation2 + $0x98] sm:$0x3f] %vm442, %v307
  %460 = vst [vmem:[#allocation2 + $0xa0] sm:$0xff] %v311
  %461 = vst.msk [vmem:[#allocation2 + $0xa8] sm:$0xff] %vm22, %v314
  %462 = vst [vmem:[#allocation2 + $0xb0] sm:$0x3f] %v310
  %463 = vst.msk [vmem:[#allocation2 + $0xb8] sm:$0x3f] %vm442, %v313
  %464 = vst [vmem:[#allocation2 + $0xc0] sm:$0xff] %v317
  %465 = vst.msk [vmem:[#allocation2 + $0xc8] sm:$0xff] %vm22, %v320
  %466 = vst [vmem:[#allocation2 + $0xd0] sm:$0x3f] %v316
  %467 = vst.msk [vmem:[#allocation2 + $0xd8] sm:$0x3f] %vm442, %v319
  %468 = vst [vmem:[#allocation2 + $0xe0] sm:$0xff] %v323
  %469 = vst.msk [vmem:[#allocation2 + $0xe8] sm:$0xff] %vm22, %v326
  %470 = vst [vmem:[#allocation2 + $0xf0] sm:$0x3f] %v322
  %471 = vst.msk [vmem:[#allocation2 + $0xf8] sm:$0x3f] %vm442, %v325
  %472 = vst [vmem:[#allocation2 + $0x100] sm:$0xff] %v329
  %473 = vst.msk [vmem:[#allocation2 + $0x108] sm:$0xff] %vm22, %v332
  %474 = vst [vmem:[#allocation2 + $0x110] sm:$0x3f] %v328
  %475 = vst.msk [vmem:[#allocation2 + $0x118] sm:$0x3f] %vm442, %v331
  %476 = vst [vmem:[#allocation2 + $0x120] sm:$0xff] %v335
  %477 = vst.msk [vmem:[#allocation2 + $0x128] sm:$0xff] %vm22, %v338
  %478 = vst [vmem:[#allocation2 + $0x130] sm:$0x3f] %v334
  %479 = vst.msk [vmem:[#allocation2 + $0x138] sm:$0x3f] %vm442, %v337
  %480 = vst [vmem:[#allocation2 + $0x140] sm:$0xff] %v341
  %481 = vst.msk [vmem:[#allocation2 + $0x148] sm:$0xff] %vm22, %v344
  %482 = vst [vmem:[#allocation2 + $0x150] sm:$0x3f] %v340
  %483 = vst.msk [vmem:[#allocation2 + $0x158] sm:$0x3f] %vm442, %v343
  %484 = vst [vmem:[#allocation2 + $0x160] sm:$0xff] %v347
  %485 = vst.msk [vmem:[#allocation2 + $0x168] sm:$0xff] %vm22, %v350
  %486 = vst [vmem:[#allocation2 + $0x170] sm:$0x3f] %v346
  %487 = vst.msk [vmem:[#allocation2 + $0x178] sm:$0x3f] %vm442, %v349
  %488 = vst [vmem:[#allocation2 + $0x180] sm:$0xff] %v353
  %489 = vst.msk [vmem:[#allocation2 + $0x188] sm:$0xff] %vm22, %v356
  %490 = vst [vmem:[#allocation2 + $0x190] sm:$0x3f] %v352
  %491 = vst.msk [vmem:[#allocation2 + $0x198] sm:$0x3f] %vm442, %v355
  %492 = vst [vmem:[#allocation2 + $0x1a0] sm:$0xff] %v359
  %493 = vst.msk [vmem:[#allocation2 + $0x1a8] sm:$0xff] %vm22, %v362
  %494 = vst [vmem:[#allocation2 + $0x1b0] sm:$0x3f] %v358
  %495 = vst.msk [vmem:[#allocation2 + $0x1b8] sm:$0x3f] %vm442, %v361
  %496 = vst [vmem:[#allocation2 + $0x1c0] sm:$0xff] %v365
  %497 = vst.msk [vmem:[#allocation2 + $0x1c8] sm:$0xff] %vm22, %v368
  %498 = vst [vmem:[#allocation2 + $0x1d0] sm:$0x3f] %v364
  %499 = vst.msk [vmem:[#allocation2 + $0x1d8] sm:$0x3f] %vm442, %v367
  %500 = vst [vmem:[#allocation2 + $0x1e0] sm:$0xff] %v371
  %501 = vst.msk [vmem:[#allocation2 + $0x1e8] sm:$0xff] %vm22, %v374
  %502 = vst [vmem:[#allocation2 + $0x1f0] sm:$0x3f] %v370
  %503 = vst.msk [vmem:[#allocation2 + $0x1f8] sm:$0x3f] %vm442, %v373
  %v504 = vld [vmem:[%s0] sm:$0xfc]
  %v505 = vld [vmem:[%s0 + $0x8] sm:$0xfc]
  %v506 = vld [vmem:[%s0 + $0x10] sm:$0xff]
  %v507 = vld [vmem:[%s0 + $0x18] sm:$0xff]
  %v508 = vld [vmem:[%s0 + $0x20] sm:$0xfc]
  %v509 = vld [vmem:[%s0 + $0x28] sm:$0xfc]
  %v510 = vld [vmem:[%s0 + $0x30] sm:$0xff]
  %v511 = vld [vmem:[%s0 + $0x38] sm:$0xff]
  %v512 = vld [vmem:[%s0 + $0x40] sm:$0xfc]
  %v513 = vld [vmem:[%s0 + $0x48] sm:$0xfc]
  %v514 = vld [vmem:[%s0 + $0x50] sm:$0xff]
  %v515 = vld [vmem:[%s0 + $0x58] sm:$0xff]
  %v516 = vld [vmem:[%s0 + $0x60] sm:$0xfc]
  %v517 = vld [vmem:[%s0 + $0x68] sm:$0xfc]
  %v518 = vld [vmem:[%s0 + $0x70] sm:$0xff]
  %v519 = vld [vmem:[%s0 + $0x78] sm:$0xff]
  %v520 = vld [vmem:[%s0 + $0x80] sm:$0xfc]
  %v521 = vld [vmem:[%s0 + $0x88] sm:$0xfc]
  %v522 = vld [vmem:[%s0 + $0x90] sm:$0xff]
  %v523 = vld [vmem:[%s0 + $0x98] sm:$0xff]
  %v524 = vld [vmem:[%s0 + $0xa0] sm:$0xfc]
  %v525 = vld [vmem:[%s0 + $0xa8] sm:$0xfc]
  %v526 = vld [vmem:[%s0 + $0xb0] sm:$0xff]
  %v527 = vld [vmem:[%s0 + $0xb8] sm:$0xff]
  %v528 = vld [vmem:[%s0 + $0xc0] sm:$0xfc]
  %v529 = vld [vmem:[%s0 + $0xc8] sm:$0xfc]
  %v530 = vld [vmem:[%s0 + $0xd0] sm:$0xff]
  %v531 = vld [vmem:[%s0 + $0xd8] sm:$0xff]
  %v532 = vld [vmem:[%s0 + $0xe0] sm:$0xfc]
  %v533 = vld [vmem:[%s0 + $0xe8] sm:$0xfc]
  %v534 = vld [vmem:[%s0 + $0xf0] sm:$0xff]
  %v535 = vld [vmem:[%s0 + $0xf8] sm:$0xff]
  %v536 = vld [vmem:[%s0 + $0x100] sm:$0xfc]
  %v537 = vld [vmem:[%s0 + $0x108] sm:$0xfc]
  %v538 = vld [vmem:[%s0 + $0x110] sm:$0xff]
  %v539 = vld [vmem:[%s0 + $0x118] sm:$0xff]
  %v540 = vld [vmem:[%s0 + $0x120] sm:$0xfc]
  %v541 = vld [vmem:[%s0 + $0x128] sm:$0xfc]
  %v542 = vld [vmem:[%s0 + $0x130] sm:$0xff]
  %v543 = vld [vmem:[%s0 + $0x138] sm:$0xff]
  %v544 = vld [vmem:[%s0 + $0x140] sm:$0xfc]
  %v545 = vld [vmem:[%s0 + $0x148] sm:$0xfc]
  %v546 = vld [vmem:[%s0 + $0x150] sm:$0xff]
  %v547 = vld [vmem:[%s0 + $0x158] sm:$0xff]
  %v548 = vld [vmem:[%s0 + $0x160] sm:$0xfc]
  %v549 = vld [vmem:[%s0 + $0x168] sm:$0xfc]
  %v550 = vld [vmem:[%s0 + $0x170] sm:$0xff]
  %v551 = vld [vmem:[%s0 + $0x178] sm:$0xff]
  %v552 = vld [vmem:[%s0 + $0x180] sm:$0xfc]
  %v553 = vld [vmem:[%s0 + $0x188] sm:$0xfc]
  %v554 = vld [vmem:[%s0 + $0x190] sm:$0xff]
  %v555 = vld [vmem:[%s0 + $0x198] sm:$0xff]
  %v556 = vld [vmem:[%s0 + $0x1a0] sm:$0xfc]
  %v557 = vld [vmem:[%s0 + $0x1a8] sm:$0xfc]
  %v558 = vld [vmem:[%s0 + $0x1b0] sm:$0xff]
  %v559 = vld [vmem:[%s0 + $0x1b8] sm:$0xff]
  %v560 = vld [vmem:[%s0 + $0x1c0] sm:$0xfc]
  %v561 = vld [vmem:[%s0 + $0x1c8] sm:$0xfc]
  %v562 = vld [vmem:[%s0 + $0x1d0] sm:$0xff]
  %v563 = vld [vmem:[%s0 + $0x1d8] sm:$0xff]
  %v564 = vld [vmem:[%s0 + $0x1e0] sm:$0xfc]
  %v565 = vld [vmem:[%s0 + $0x1e8] sm:$0xfc]
  %v566 = vld [vmem:[%s0 + $0x1f0] sm:$0xff]
  %v567 = vld [vmem:[%s0 + $0x1f8] sm:$0xff]
  %vm632 = vcmask 1045504
  %v633 = vrot.slane %v504, 2
  %v634 = vrot.slane %v506, 2
  %v635 = vsel %vm632, %v633, %v634
  %v636 = vrot.slane %v505, 2
  %v637 = vrot.slane %v507, 2
  %v638 = vsel %vm632, %v636, %v637
  %v639 = vrot.slane %v508, 2
  %v640 = vrot.slane %v510, 2
  %v641 = vsel %vm632, %v639, %v640
  %v642 = vrot.slane %v509, 2
  %v643 = vrot.slane %v511, 2
  %v644 = vsel %vm632, %v642, %v643
  %v645 = vrot.slane %v512, 2
  %v646 = vrot.slane %v514, 2
  %v647 = vsel %vm632, %v645, %v646
  %v648 = vrot.slane %v513, 2
  %v649 = vrot.slane %v515, 2
  %v650 = vsel %vm632, %v648, %v649
  %v651 = vrot.slane %v516, 2
  %v652 = vrot.slane %v518, 2
  %v653 = vsel %vm632, %v651, %v652
  %v654 = vrot.slane %v517, 2
  %v655 = vrot.slane %v519, 2
  %v656 = vsel %vm632, %v654, %v655
  %v657 = vrot.slane %v520, 2
  %v658 = vrot.slane %v522, 2
  %v659 = vsel %vm632, %v657, %v658
  %v660 = vrot.slane %v521, 2
  %v661 = vrot.slane %v523, 2
  %v662 = vsel %vm632, %v660, %v661
  %v663 = vrot.slane %v524, 2
  %v664 = vrot.slane %v526, 2
  %v665 = vsel %vm632, %v663, %v664
  %v666 = vrot.slane %v525, 2
  %v667 = vrot.slane %v527, 2
  %v668 = vsel %vm632, %v666, %v667
  %v669 = vrot.slane %v528, 2
  %v670 = vrot.slane %v530, 2
  %v671 = vsel %vm632, %v669, %v670
  %v672 = vrot.slane %v529, 2
  %v673 = vrot.slane %v531, 2
  %v674 = vsel %vm632, %v672, %v673
  %v675 = vrot.slane %v532, 2
  %v676 = vrot.slane %v534, 2
  %v677 = vsel %vm632, %v675, %v676
  %v678 = vrot.slane %v533, 2
  %v679 = vrot.slane %v535, 2
  %v680 = vsel %vm632, %v678, %v679
  %v681 = vrot.slane %v536, 2
  %v682 = vrot.slane %v538, 2
  %v683 = vsel %vm632, %v681, %v682
  %v684 = vrot.slane %v537, 2
  %v685 = vrot.slane %v539, 2
  %v686 = vsel %vm632, %v684, %v685
  %v687 = vrot.slane %v540, 2
  %v688 = vrot.slane %v542, 2
  %v689 = vsel %vm632, %v687, %v688
  %v690 = vrot.slane %v541, 2
  %v691 = vrot.slane %v543, 2
  %v692 = vsel %vm632, %v690, %v691
  %v693 = vrot.slane %v544, 2
  %v694 = vrot.slane %v546, 2
  %v695 = vsel %vm632, %v693, %v694
  %v696 = vrot.slane %v545, 2
  %v697 = vrot.slane %v547, 2
  %v698 = vsel %vm632, %v696, %v697
  %v699 = vrot.slane %v548, 2
  %v700 = vrot.slane %v550, 2
  %v701 = vsel %vm632, %v699, %v700
  %v702 = vrot.slane %v549, 2
  %v703 = vrot.slane %v551, 2
  %v704 = vsel %vm632, %v702, %v703
  %v705 = vrot.slane %v552, 2
  %v706 = vrot.slane %v554, 2
  %v707 = vsel %vm632, %v705, %v706
  %v708 = vrot.slane %v553, 2
  %v709 = vrot.slane %v555, 2
  %v710 = vsel %vm632, %v708, %v709
  %v711 = vrot.slane %v556, 2
  %v712 = vrot.slane %v558, 2
  %v713 = vsel %vm632, %v711, %v712
  %v714 = vrot.slane %v557, 2
  %v715 = vrot.slane %v559, 2
  %v716 = vsel %vm632, %v714, %v715
  %v717 = vrot.slane %v560, 2
  %v718 = vrot.slane %v562, 2
  %v719 = vsel %vm632, %v717, %v718
  %v720 = vrot.slane %v561, 2
  %v721 = vrot.slane %v563, 2
  %v722 = vsel %vm632, %v720, %v721
  %v723 = vrot.slane %v564, 2
  %v724 = vrot.slane %v566, 2
  %v725 = vsel %vm632, %v723, %v724
  %v726 = vrot.slane %v565, 2
  %v727 = vrot.slane %v567, 2
  %v728 = vsel %vm632, %v726, %v727
  %793 = vst [vmem:[#allocation3] sm:$0xff] %v635
  %794 = vst.msk [vmem:[#allocation3 + $0x8] sm:$0xff] %vm22, %v638
  %795 = vst [vmem:[#allocation3 + $0x10] sm:$0x3f] %v634
  %796 = vst.msk [vmem:[#allocation3 + $0x18] sm:$0x3f] %vm442, %v637
  %797 = vst [vmem:[#allocation3 + $0x20] sm:$0xff] %v641
  %798 = vst.msk [vmem:[#allocation3 + $0x28] sm:$0xff] %vm22, %v644
  %799 = vst [vmem:[#allocation3 + $0x30] sm:$0x3f] %v640
  %800 = vst.msk [vmem:[#allocation3 + $0x38] sm:$0x3f] %vm442, %v643
  %801 = vst [vmem:[#allocation3 + $0x40] sm:$0xff] %v647
  %802 = vst.msk [vmem:[#allocation3 + $0x48] sm:$0xff] %vm22, %v650
  %803 = vst [vmem:[#allocation3 + $0x50] sm:$0x3f] %v646
  %804 = vst.msk [vmem:[#allocation3 + $0x58] sm:$0x3f] %vm442, %v649
  %805 = vst [vmem:[#allocation3 + $0x60] sm:$0xff] %v653
  %806 = vst.msk [vmem:[#allocation3 + $0x68] sm:$0xff] %vm22, %v656
  %807 = vst [vmem:[#allocation3 + $0x70] sm:$0x3f] %v652
  %808 = vst.msk [vmem:[#allocation3 + $0x78] sm:$0x3f] %vm442, %v655
  %809 = vst [vmem:[#allocation3 + $0x80] sm:$0xff] %v659
  %810 = vst.msk [vmem:[#allocation3 + $0x88] sm:$0xff] %vm22, %v662
  %811 = vst [vmem:[#allocation3 + $0x90] sm:$0x3f] %v658
  %812 = vst.msk [vmem:[#allocation3 + $0x98] sm:$0x3f] %vm442, %v661
  %813 = vst [vmem:[#allocation3 + $0xa0] sm:$0xff] %v665
  %814 = vst.msk [vmem:[#allocation3 + $0xa8] sm:$0xff] %vm22, %v668
  %815 = vst [vmem:[#allocation3 + $0xb0] sm:$0x3f] %v664
  %816 = vst.msk [vmem:[#allocation3 + $0xb8] sm:$0x3f] %vm442, %v667
  %817 = vst [vmem:[#allocation3 + $0xc0] sm:$0xff] %v671
  %818 = vst.msk [vmem:[#allocation3 + $0xc8] sm:$0xff] %vm22, %v674
  %819 = vst [vmem:[#allocation3 + $0xd0] sm:$0x3f] %v670
  %820 = vst.msk [vmem:[#allocation3 + $0xd8] sm:$0x3f] %vm442, %v673
  %821 = vst [vmem:[#allocation3 + $0xe0] sm:$0xff] %v677
  %822 = vst.msk [vmem:[#allocation3 + $0xe8] sm:$0xff] %vm22, %v680
  %823 = vst [vmem:[#allocation3 + $0xf0] sm:$0x3f] %v676
  %824 = vst.msk [vmem:[#allocation3 + $0xf8] sm:$0x3f] %vm442, %v679
  %825 = vst [vmem:[#allocation3 + $0x100] sm:$0xff] %v683
  %826 = vst.msk [vmem:[#allocation3 + $0x108] sm:$0xff] %vm22, %v686
  %827 = vst [vmem:[#allocation3 + $0x110] sm:$0x3f] %v682
  %828 = vst.msk [vmem:[#allocation3 + $0x118] sm:$0x3f] %vm442, %v685
  %829 = vst [vmem:[#allocation3 + $0x120] sm:$0xff] %v689
  %830 = vst.msk [vmem:[#allocation3 + $0x128] sm:$0xff] %vm22, %v692
  %831 = vst [vmem:[#allocation3 + $0x130] sm:$0x3f] %v688
  %832 = vst.msk [vmem:[#allocation3 + $0x138] sm:$0x3f] %vm442, %v691
  %833 = vst [vmem:[#allocation3 + $0x140] sm:$0xff] %v695
  %834 = vst.msk [vmem:[#allocation3 + $0x148] sm:$0xff] %vm22, %v698
  %835 = vst [vmem:[#allocation3 + $0x150] sm:$0x3f] %v694
  %836 = vst.msk [vmem:[#allocation3 + $0x158] sm:$0x3f] %vm442, %v697
  %837 = vst [vmem:[#allocation3 + $0x160] sm:$0xff] %v701
  %838 = vst.msk [vmem:[#allocation3 + $0x168] sm:$0xff] %vm22, %v704
  %839 = vst [vmem:[#allocation3 + $0x170] sm:$0x3f] %v700
  %840 = vst.msk [vmem:[#allocation3 + $0x178] sm:$0x3f] %vm442, %v703
  %841 = vst [vmem:[#allocation3 + $0x180] sm:$0xff] %v707
  %842 = vst.msk [vmem:[#allocation3 + $0x188] sm:$0xff] %vm22, %v710
  %843 = vst [vmem:[#allocation3 + $0x190] sm:$0x3f] %v706
  %844 = vst.msk [vmem:[#allocation3 + $0x198] sm:$0x3f] %vm442, %v709
  %845 = vst [vmem:[#allocation3 + $0x1a0] sm:$0xff] %v713
  %846 = vst.msk [vmem:[#allocation3 + $0x1a8] sm:$0xff] %vm22, %v716
  %847 = vst [vmem:[#allocation3 + $0x1b0] sm:$0x3f] %v712
  %848 = vst.msk [vmem:[#allocation3 + $0x1b8] sm:$0x3f] %vm442, %v715
  %849 = vst [vmem:[#allocation3 + $0x1c0] sm:$0xff] %v719
  %850 = vst.msk [vmem:[#allocation3 + $0x1c8] sm:$0xff] %vm22, %v722
  %851 = vst [vmem:[#allocation3 + $0x1d0] sm:$0x3f] %v718
  %852 = vst.msk [vmem:[#allocation3 + $0x1d8] sm:$0x3f] %vm442, %v721
  %853 = vst [vmem:[#allocation3 + $0x1e0] sm:$0xff] %v725
  %854 = vst.msk [vmem:[#allocation3 + $0x1e8] sm:$0xff] %vm22, %v728
  %855 = vst [vmem:[#allocation3 + $0x1f0] sm:$0x3f] %v724
  %856 = vst.msk [vmem:[#allocation3 + $0x1f8] sm:$0x3f] %vm442, %v727
  %v857 = vld [vmem:[%s1] ss:$8 sm:$0x3]
  %s858 = scalar_lea.vmem %s1, 1
  %v859 = vld [vmem:[%s858] ss:$8 sm:$0x3]
  %s860 = scalar_lea.vmem %s1, 2
  %v861 = vld [vmem:[%s860] ss:$8 sm:$0x3]
  %s862 = scalar_lea.vmem %s1, 3
  %v863 = vld [vmem:[%s862] ss:$8 sm:$0x3]
  %s864 = scalar_lea.vmem %s1, 4
  %v865 = vld [vmem:[%s864] ss:$8 sm:$0x3]
  %s866 = scalar_lea.vmem %s1, 5
  %v867 = vld [vmem:[%s866] ss:$8 sm:$0x3]
  %s868 = scalar_lea.vmem %s1, 6
  %v869 = vld [vmem:[%s868] ss:$8 sm:$0x3]
  %s870 = scalar_lea.vmem %s1, 7
  %v871 = vld [vmem:[%s870] ss:$8 sm:$0x3]
  %s872 = scalar_lea.vmem %s1, 16
  %v873 = vld [vmem:[%s872] ss:$8 sm:$0x3]
  %v874 = vld [vmem:[%s0] sm:$0xff]
  %v875 = vld [vmem:[%s0 + $0x8] sm:$0xff]
  %v876 = vld [vmem:[%s0 + $0x10] sm:$0xff]
  %v877 = vld [vmem:[%s0 + $0x18] sm:$0xff]
  %v879 = vperm.slane %v857, 0
  %v880 = vperm.slane %v857, 1
  %v883 = vmul.f32 %v874, %v879
  %v884 = vmul.f32 %v875, %v880
  %v885 = vmul.f32 %v876, %v879
  %v886 = vmul.f32 %v877, %v880
  %v887 = vadd.f32 %v883, 0.0
  %v888 = vadd.f32 %v884, 0.0
  %v889 = vadd.f32 %v885, 0.0
  %v890 = vadd.f32 %v886, 0.0
  %v891 = vld [vmem:[#allocation2] sm:$0xff]
  %v892 = vld [vmem:[#allocation2 + $0x8] sm:$0xff]
  %v893 = vld [vmem:[#allocation2 + $0x10] sm:$0xff]
  %v894 = vld [vmem:[#allocation2 + $0x18] sm:$0xff]
  %v896 = vperm.slane %v859, 0
  %v897 = vperm.slane %v859, 1
  %v900 = vmul.f32 %v891, %v896
  %v901 = vmul.f32 %v892, %v897
  %v902 = vmul.f32 %v893, %v896
  %v903 = vmul.f32 %v894, %v897
  %v904 = vadd.f32 %v887, %v900
  %v905 = vadd.f32 %v888, %v901
  %v906 = vadd.f32 %v889, %v902
  %v907 = vadd.f32 %v890, %v903
  %v908 = vld [vmem:[#allocation3] sm:$0xff]
  %v909 = vld [vmem:[#allocation3 + $0x8] sm:$0xff]
  %v910 = vld [vmem:[#allocation3 + $0x10] sm:$0xff]
  %v911 = vld [vmem:[#allocation3 + $0x18] sm:$0xff]
  %v913 = vperm.slane %v861, 0
  %v914 = vperm.slane %v861, 1
  %v917 = vmul.f32 %v908, %v913
  %v918 = vmul.f32 %v909, %v914
  %v919 = vmul.f32 %v910, %v913
  %v920 = vmul.f32 %v911, %v914
  %v921 = vadd.f32 %v904, %v917
  %v922 = vadd.f32 %v905, %v918
  %v923 = vadd.f32 %v906, %v919
  %v924 = vadd.f32 %v907, %v920
  %s925 = scalar_lea.vmem %s0, 32
  %v926 = vld [vmem:[%s925] sm:$0xff]
  %v927 = vld [vmem:[%s925 + $0x8] sm:$0xff]
  %v928 = vld [vmem:[%s925 + $0x10] sm:$0xff]
  %v929 = vld [vmem:[%s925 + $0x18] sm:$0xff]
  %v931 = vperm.slane %v863, 0
  %v932 = vperm.slane %v863, 1
  %v935 = vmul.f32 %v926, %v931
  %v936 = vmul.f32 %v927, %v932
  %v937 = vmul.f32 %v928, %v931
  %v938 = vmul.f32 %v929, %v932
  %v939 = vadd.f32 %v921, %v935
  %v940 = vadd.f32 %v922, %v936
  %v941 = vadd.f32 %v923, %v937
  %v942 = vadd.f32 %v924, %v938
  %s943 = scalar_lea.vmem [#allocation2], 32
  %v944 = vld [vmem:[%s943] sm:$0xff]
  %v945 = vld [vmem:[%s943 + $0x8] sm:$0xff]
  %v946 = vld [vmem:[%s943 + $0x10] sm:$0xff]
  %v947 = vld [vmem:[%s943 + $0x18] sm:$0xff]
  %v949 = vperm.slane %v865, 0
  %v950 = vperm.slane %v865, 1
  %v953 = vmul.f32 %v944, %v949
  %v954 = vmul.f32 %v945, %v950
  %v955 = vmul.f32 %v946, %v949
  %v956 = vmul.f32 %v947, %v950
  %v957 = vadd.f32 %v939, %v953
  %v958 = vadd.f32 %v940, %v954
  %v959 = vadd.f32 %v941, %v955
  %v960 = vadd.f32 %v942, %v956
  %s961 = scalar_lea.vmem [#allocation3], 32
  %v962 = vld [vmem:[%s961] sm:$0xff]
  %v963 = vld [vmem:[%s961 + $0x8] sm:$0xff]
  %v964 = vld [vmem:[%s961 + $0x10] sm:$0xff]
  %v965 = vld [vmem:[%s961 + $0x18] sm:$0xff]
  %v967 = vperm.slane %v867, 0
  %v968 = vperm.slane %v867, 1
  %v971 = vmul.f32 %v962, %v967
  %v972 = vmul.f32 %v963, %v968
  %v973 = vmul.f32 %v964, %v967
  %v974 = vmul.f32 %v965, %v968
  %v975 = vadd.f32 %v957, %v971
  %v976 = vadd.f32 %v958, %v972
  %v977 = vadd.f32 %v959, %v973
  %v978 = vadd.f32 %v960, %v974
  %s979 = scalar_lea.vmem %s0, 64
  %v980 = vld [vmem:[%s979] sm:$0xff]
  %v981 = vld [vmem:[%s979 + $0x8] sm:$0xff]
  %v982 = vld [vmem:[%s979 + $0x10] sm:$0xff]
  %v983 = vld [vmem:[%s979 + $0x18] sm:$0xff]
  %v985 = vperm.slane %v869, 0
  %v986 = vperm.slane %v869, 1
  %v989 = vmul.f32 %v980, %v985
  %v990 = vmul.f32 %v981, %v986
  %v991 = vmul.f32 %v982, %v985
  %v992 = vmul.f32 %v983, %v986
  %v993 = vadd.f32 %v975, %v989
  %v994 = vadd.f32 %v976, %v990
  %v995 = vadd.f32 %v977, %v991
  %v996 = vadd.f32 %v978, %v992
  %s997 = scalar_lea.vmem [#allocation2], 64
  %v998 = vld [vmem:[%s997] sm:$0xff]
  %v999 = vld [vmem:[%s997 + $0x8] sm:$0xff]
  %v1000 = vld [vmem:[%s997 + $0x10] sm:$0xff]
  %v1001 = vld [vmem:[%s997 + $0x18] sm:$0xff]
  %v1003 = vperm.slane %v871, 0
  %v1004 = vperm.slane %v871, 1
  %v1007 = vmul.f32 %v998, %v1003
  %v1008 = vmul.f32 %v999, %v1004
  %v1009 = vmul.f32 %v1000, %v1003
  %v1010 = vmul.f32 %v1001, %v1004
  %v1011 = vadd.f32 %v993, %v1007
  %v1012 = vadd.f32 %v994, %v1008
  %v1013 = vadd.f32 %v995, %v1009
  %v1014 = vadd.f32 %v996, %v1010
  %s1015 = scalar_lea.vmem [#allocation3], 64
  %v1016 = vld [vmem:[%s1015] sm:$0xff]
  %v1017 = vld [vmem:[%s1015 + $0x8] sm:$0xff]
  %v1018 = vld [vmem:[%s1015 + $0x10] sm:$0xff]
  %v1019 = vld [vmem:[%s1015 + $0x18] sm:$0xff]
  %v1021 = vperm.slane %v873, 0
  %v1022 = vperm.slane %v873, 1
  %v1025 = vmul.f32 %v1016, %v1021
  %v1026 = vmul.f32 %v1017, %v1022
  %v1027 = vmul.f32 %v1018, %v1021
  %v1028 = vmul.f32 %v1019, %v1022
  %v1029 = vadd.f32 %v1011, %v1025
  %v1030 = vadd.f32 %v1012, %v1026
  %v1031 = vadd.f32 %v1013, %v1027
  %v1032 = vadd.f32 %v1014, %v1028
  %1033 = vst [vmem:[#allocation4] sm:$0xff] %v1029
  %1034 = vst.msk [vmem:[#allocation4 + $0x8] sm:$0xff] %vm22, %v1030
  %1035 = vst [vmem:[#allocation4 + $0x10] sm:$0xff] %v1031
  %1036 = vst.msk [vmem:[#allocation4 + $0x18] sm:$0xff] %vm22, %v1032
  %v1037 = vadd.f32 %v1029, 0.0
  %v1038 = vadd.f32 %v1030, 0.0
  %v1039 = vadd.f32 %v1031, 0.0
  %v1040 = vadd.f32 %v1032, 0.0
  %v1041 = vmul.f32 %v1029, %v1029
  %v1042 = vmul.f32 %v1030, %v1030
  %v1043 = vmul.f32 %v1031, %v1031
  %v1044 = vmul.f32 %v1032, %v1032
  %v1045 = vadd.f32 %v1041, 0.0
  %v1046 = vadd.f32 %v1042, 0.0
  %v1047 = vadd.f32 %v1043, 0.0
  %v1048 = vadd.f32 %v1044, 0.0
  %v1049 = vld [vmem:[%s925] sm:$0xff]
  %v1050 = vld [vmem:[%s925 + $0x8] sm:$0xff]
  %v1051 = vld [vmem:[%s925 + $0x10] sm:$0xff]
  %v1052 = vld [vmem:[%s925 + $0x18] sm:$0xff]
  %v1053 = vmul.f32 %v1049, %v879
  %v1054 = vmul.f32 %v1050, %v880
  %v1055 = vmul.f32 %v1051, %v879
  %v1056 = vmul.f32 %v1052, %v880
  %v1057 = vadd.f32 %v1053, 0.0
  %v1058 = vadd.f32 %v1054, 0.0
  %v1059 = vadd.f32 %v1055, 0.0
  %v1060 = vadd.f32 %v1056, 0.0
  %v1061 = vld [vmem:[%s943] sm:$0xff]
  %v1062 = vld [vmem:[%s943 + $0x8] sm:$0xff]
  %v1063 = vld [vmem:[%s943 + $0x10] sm:$0xff]
  %v1064 = vld [vmem:[%s943 + $0x18] sm:$0xff]
  %v1065 = vmul.f32 %v1061, %v896
  %v1066 = vmul.f32 %v1062, %v897
  %v1067 = vmul.f32 %v1063, %v896
  %v1068 = vmul.f32 %v1064, %v897
  %v1069 = vadd.f32 %v1057, %v1065
  %v1070 = vadd.f32 %v1058, %v1066
  %v1071 = vadd.f32 %v1059, %v1067
  %v1072 = vadd.f32 %v1060, %v1068
  %v1073 = vld [vmem:[%s961] sm:$0xff]
  %v1074 = vld [vmem:[%s961 + $0x8] sm:$0xff]
  %v1075 = vld [vmem:[%s961 + $0x10] sm:$0xff]
  %v1076 = vld [vmem:[%s961 + $0x18] sm:$0xff]
  %v1077 = vmul.f32 %v1073, %v913
  %v1078 = vmul.f32 %v1074, %v914
  %v1079 = vmul.f32 %v1075, %v913
  %v1080 = vmul.f32 %v1076, %v914
  %v1081 = vadd.f32 %v1069, %v1077
  %v1082 = vadd.f32 %v1070, %v1078
  %v1083 = vadd.f32 %v1071, %v1079
  %v1084 = vadd.f32 %v1072, %v1080
  %v1085 = vld [vmem:[%s979] sm:$0xff]
  %v1086 = vld [vmem:[%s979 + $0x8] sm:$0xff]
  %v1087 = vld [vmem:[%s979 + $0x10] sm:$0xff]
  %v1088 = vld [vmem:[%s979 + $0x18] sm:$0xff]
  %v1089 = vmul.f32 %v1085, %v931
  %v1090 = vmul.f32 %v1086, %v932
  %v1091 = vmul.f32 %v1087, %v931
  %v1092 = vmul.f32 %v1088, %v932
  %v1093 = vadd.f32 %v1081, %v1089
  %v1094 = vadd.f32 %v1082, %v1090
  %v1095 = vadd.f32 %v1083, %v1091
  %v1096 = vadd.f32 %v1084, %v1092
  %v1097 = vld [vmem:[%s997] sm:$0xff]
  %v1098 = vld [vmem:[%s997 + $0x8] sm:$0xff]
  %v1099 = vld [vmem:[%s997 + $0x10] sm:$0xff]
  %v1100 = vld [vmem:[%s997 + $0x18] sm:$0xff]
  %v1101 = vmul.f32 %v1097, %v949
  %v1102 = vmul.f32 %v1098, %v950
  %v1103 = vmul.f32 %v1099, %v949
  %v1104 = vmul.f32 %v1100, %v950
  %v1105 = vadd.f32 %v1093, %v1101
  %v1106 = vadd.f32 %v1094, %v1102
  %v1107 = vadd.f32 %v1095, %v1103
  %v1108 = vadd.f32 %v1096, %v1104
  %v1109 = vld [vmem:[%s1015] sm:$0xff]
  %v1110 = vld [vmem:[%s1015 + $0x8] sm:$0xff]
  %v1111 = vld [vmem:[%s1015 + $0x10] sm:$0xff]
  %v1112 = vld [vmem:[%s1015 + $0x18] sm:$0xff]
  %v1113 = vmul.f32 %v1109, %v967
  %v1114 = vmul.f32 %v1110, %v968
  %v1115 = vmul.f32 %v1111, %v967
  %v1116 = vmul.f32 %v1112, %v968
  %v1117 = vadd.f32 %v1105, %v1113
  %v1118 = vadd.f32 %v1106, %v1114
  %v1119 = vadd.f32 %v1107, %v1115
  %v1120 = vadd.f32 %v1108, %v1116
  %s1121 = scalar_lea.vmem %s0, 96
  %v1122 = vld [vmem:[%s1121] sm:$0xff]
  %v1123 = vld [vmem:[%s1121 + $0x8] sm:$0xff]
  %v1124 = vld [vmem:[%s1121 + $0x10] sm:$0xff]
  %v1125 = vld [vmem:[%s1121 + $0x18] sm:$0xff]
  %v1126 = vmul.f32 %v1122, %v985
  %v1127 = vmul.f32 %v1123, %v986
  %v1128 = vmul.f32 %v1124, %v985
  %v1129 = vmul.f32 %v1125, %v986
  %v1130 = vadd.f32 %v1117, %v1126
  %v1131 = vadd.f32 %v1118, %v1127
  %v1132 = vadd.f32 %v1119, %v1128
  %v1133 = vadd.f32 %v1120, %v1129
  %s1134 = scalar_lea.vmem [#allocation2], 96
  %v1135 = vld [vmem:[%s1134] sm:$0xff]
  %v1136 = vld [vmem:[%s1134 + $0x8] sm:$0xff]
  %v1137 = vld [vmem:[%s1134 + $0x10] sm:$0xff]
  %v1138 = vld [vmem:[%s1134 + $0x18] sm:$0xff]
  %v1139 = vmul.f32 %v1135, %v1003
  %v1140 = vmul.f32 %v1136, %v1004
  %v1141 = vmul.f32 %v1137, %v1003
  %v1142 = vmul.f32 %v1138, %v1004
  %v1143 = vadd.f32 %v1130, %v1139
  %v1144 = vadd.f32 %v1131, %v1140
  %v1145 = vadd.f32 %v1132, %v1141
  %v1146 = vadd.f32 %v1133, %v1142
  %s1147 = scalar_lea.vmem [#allocation3], 96
  %v1148 = vld [vmem:[%s1147] sm:$0xff]
  %v1149 = vld [vmem:[%s1147 + $0x8] sm:$0xff]
  %v1150 = vld [vmem:[%s1147 + $0x10] sm:$0xff]
  %v1151 = vld [vmem:[%s1147 + $0x18] sm:$0xff]
  %v1152 = vmul.f32 %v1148, %v1021
  %v1153 = vmul.f32 %v1149, %v1022
  %v1154 = vmul.f32 %v1150, %v1021
  %v1155 = vmul.f32 %v1151, %v1022
  %v1156 = vadd.f32 %v1143, %v1152
  %v1157 = vadd.f32 %v1144, %v1153
  %v1158 = vadd.f32 %v1145, %v1154
  %v1159 = vadd.f32 %v1146, %v1155
  %1160 = vst [vmem:[#allocation4 + $0x20] sm:$0xff] %v1156
  %1161 = vst.msk [vmem:[#allocation4 + $0x28] sm:$0xff] %vm22, %v1157
  %1162 = vst [vmem:[#allocation4 + $0x30] sm:$0xff] %v1158
  %1163 = vst.msk [vmem:[#allocation4 + $0x38] sm:$0xff] %vm22, %v1159
  %v1164 = vadd.f32 %v1037, %v1156
  %v1165 = vadd.f32 %v1038, %v1157
  %v1166 = vadd.f32 %v1039, %v1158
  %v1167 = vadd.f32 %v1040, %v1159
  %v1168 = vmul.f32 %v1156, %v1156
  %v1169 = vmul.f32 %v1157, %v1157
  %v1170 = vmul.f32 %v1158, %v1158
  %v1171 = vmul.f32 %v1159, %v1159
  %v1172 = vadd.f32 %v1045, %v1168
  %v1173 = vadd.f32 %v1046, %v1169
  %v1174 = vadd.f32 %v1047, %v1170
  %v1175 = vadd.f32 %v1048, %v1171
  %v1176 = vld [vmem:[%s979] sm:$0xff]
  %v1177 = vld [vmem:[%s979 + $0x8] sm:$0xff]
  %v1178 = vld [vmem:[%s979 + $0x10] sm:$0xff]
  %v1179 = vld [vmem:[%s979 + $0x18] sm:$0xff]
  %v1180 = vmul.f32 %v1176, %v879
  %v1181 = vmul.f32 %v1177, %v880
  %v1182 = vmul.f32 %v1178, %v879
  %v1183 = vmul.f32 %v1179, %v880
  %v1184 = vadd.f32 %v1180, 0.0
  %v1185 = vadd.f32 %v1181, 0.0
  %v1186 = vadd.f32 %v1182, 0.0
  %v1187 = vadd.f32 %v1183, 0.0
  %v1188 = vld [vmem:[%s997] sm:$0xff]
  %v1189 = vld [vmem:[%s997 + $0x8] sm:$0xff]
  %v1190 = vld [vmem:[%s997 + $0x10] sm:$0xff]
  %v1191 = vld [vmem:[%s997 + $0x18] sm:$0xff]
  %v1192 = vmul.f32 %v1188, %v896
  %v1193 = vmul.f32 %v1189, %v897
  %v1194 = vmul.f32 %v1190, %v896
  %v1195 = vmul.f32 %v1191, %v897
  %v1196 = vadd.f32 %v1184, %v1192
  %v1197 = vadd.f32 %v1185, %v1193
  %v1198 = vadd.f32 %v1186, %v1194
  %v1199 = vadd.f32 %v1187, %v1195
  %v1200 = vld [vmem:[%s1015] sm:$0xff]
  %v1201 = vld [vmem:[%s1015 + $0x8] sm:$0xff]
  %v1202 = vld [vmem:[%s1015 + $0x10] sm:$0xff]
  %v1203 = vld [vmem:[%s1015 + $0x18] sm:$0xff]
  %v1204 = vmul.f32 %v1200, %v913
  %v1205 = vmul.f32 %v1201, %v914
  %v1206 = vmul.f32 %v1202, %v913
  %v1207 = vmul.f32 %v1203, %v914
  %v1208 = vadd.f32 %v1196, %v1204
  %v1209 = vadd.f32 %v1197, %v1205
  %v1210 = vadd.f32 %v1198, %v1206
  %v1211 = vadd.f32 %v1199, %v1207
  %v1212 = vld [vmem:[%s1121] sm:$0xff]
  %v1213 = vld [vmem:[%s1121 + $0x8] sm:$0xff]
  %v1214 = vld [vmem:[%s1121 + $0x10] sm:$0xff]
  %v1215 = vld [vmem:[%s1121 + $0x18] sm:$0xff]
  %v1216 = vmul.f32 %v1212, %v931
  %v1217 = vmul.f32 %v1213, %v932
  %v1218 = vmul.f32 %v1214, %v931
  %v1219 = vmul.f32 %v1215, %v932
  %v1220 = vadd.f32 %v1208, %v1216
  %v1221 = vadd.f32 %v1209, %v1217
  %v1222 = vadd.f32 %v1210, %v1218
  %v1223 = vadd.f32 %v1211, %v1219
  %v1224 = vld [vmem:[%s1134] sm:$0xff]
  %v1225 = vld [vmem:[%s1134 + $0x8] sm:$0xff]
  %v1226 = vld [vmem:[%s1134 + $0x10] sm:$0xff]
  %v1227 = vld [vmem:[%s1134 + $0x18] sm:$0xff]
  %v1228 = vmul.f32 %v1224, %v949
  %v1229 = vmul.f32 %v1225, %v950
  %v1230 = vmul.f32 %v1226, %v949
  %v1231 = vmul.f32 %v1227, %v950
  %v1232 = vadd.f32 %v1220, %v1228
  %v1233 = vadd.f32 %v1221, %v1229
  %v1234 = vadd.f32 %v1222, %v1230
  %v1235 = vadd.f32 %v1223, %v1231
  %v1236 = vld [vmem:[%s1147] sm:$0xff]
  %v1237 = vld [vmem:[%s1147 + $0x8] sm:$0xff]
  %v1238 = vld [vmem:[%s1147 + $0x10] sm:$0xff]
  %v1239 = vld [vmem:[%s1147 + $0x18] sm:$0xff]
  %v1240 = vmul.f32 %v1236, %v967
  %v1241 = vmul.f32 %v1237, %v968
  %v1242 = vmul.f32 %v1238, %v967
  %v1243 = vmul.f32 %v1239, %v968
  %v1244 = vadd.f32 %v1232, %v1240
  %v1245 = vadd.f32 %v1233, %v1241
  %v1246 = vadd.f32 %v1234, %v1242
  %v1247 = vadd.f32 %v1235, %v1243
  %s1248 = scalar_lea.vmem %s0, 128
  %v1249 = vld [vmem:[%s1248] sm:$0xff]
  %v1250 = vld [vmem:[%s1248 + $0x8] sm:$0xff]
  %v1251 = vld [vmem:[%s1248 + $0x10] sm:$0xff]
  %v1252 = vld [vmem:[%s1248 + $0x18] sm:$0xff]
  %v1253 = vmul.f32 %v1249, %v985
  %v1254 = vmul.f32 %v1250, %v986
  %v1255 = vmul.f32 %v1251, %v985
  %v1256 = vmul.f32 %v1252, %v986
  %v1257 = vadd.f32 %v1244, %v1253
  %v1258 = vadd.f32 %v1245, %v1254
  %v1259 = vadd.f32 %v1246, %v1255
  %v1260 = vadd.f32 %v1247, %v1256
  %s1261 = scalar_lea.vmem [#allocation2], 128
  %v1262 = vld [vmem:[%s1261] sm:$0xff]
  %v1263 = vld [vmem:[%s1261 + $0x8] sm:$0xff]
  %v1264 = vld [vmem:[%s1261 + $0x10] sm:$0xff]
  %v1265 = vld [vmem:[%s1261 + $0x18] sm:$0xff]
  %v1266 = vmul.f32 %v1262, %v1003
  %v1267 = vmul.f32 %v1263, %v1004
  %v1268 = vmul.f32 %v1264, %v1003
  %v1269 = vmul.f32 %v1265, %v1004
  %v1270 = vadd.f32 %v1257, %v1266
  %v1271 = vadd.f32 %v1258, %v1267
  %v1272 = vadd.f32 %v1259, %v1268
  %v1273 = vadd.f32 %v1260, %v1269
  %s1274 = scalar_lea.vmem [#allocation3], 128
  %v1275 = vld [vmem:[%s1274] sm:$0xff]
  %v1276 = vld [vmem:[%s1274 + $0x8] sm:$0xff]
  %v1277 = vld [vmem:[%s1274 + $0x10] sm:$0xff]
  %v1278 = vld [vmem:[%s1274 + $0x18] sm:$0xff]
  %v1279 = vmul.f32 %v1275, %v1021
  %v1280 = vmul.f32 %v1276, %v1022
  %v1281 = vmul.f32 %v1277, %v1021
  %v1282 = vmul.f32 %v1278, %v1022
  %v1283 = vadd.f32 %v1270, %v1279
  %v1284 = vadd.f32 %v1271, %v1280
  %v1285 = vadd.f32 %v1272, %v1281
  %v1286 = vadd.f32 %v1273, %v1282
  %1287 = vst [vmem:[#allocation4 + $0x40] sm:$0xff] %v1283
  %1288 = vst.msk [vmem:[#allocation4 + $0x48] sm:$0xff] %vm22, %v1284
  %1289 = vst [vmem:[#allocation4 + $0x50] sm:$0xff] %v1285
  %1290 = vst.msk [vmem:[#allocation4 + $0x58] sm:$0xff] %vm22, %v1286
  %v1291 = vadd.f32 %v1164, %v1283
  %v1292 = vadd.f32 %v1165, %v1284
  %v1293 = vadd.f32 %v1166, %v1285
  %v1294 = vadd.f32 %v1167, %v1286
  %v1295 = vmul.f32 %v1283, %v1283
  %v1296 = vmul.f32 %v1284, %v1284
  %v1297 = vmul.f32 %v1285, %v1285
  %v1298 = vmul.f32 %v1286, %v1286
  %v1299 = vadd.f32 %v1172, %v1295
  %v1300 = vadd.f32 %v1173, %v1296
  %v1301 = vadd.f32 %v1174, %v1297
  %v1302 = vadd.f32 %v1175, %v1298
  %v1303 = vld [vmem:[%s1121] sm:$0xff]
  %v1304 = vld [vmem:[%s1121 + $0x8] sm:$0xff]
  %v1305 = vld [vmem:[%s1121 + $0x10] sm:$0xff]
  %v1306 = vld [vmem:[%s1121 + $0x18] sm:$0xff]
  %v1307 = vmul.f32 %v1303, %v879
  %v1308 = vmul.f32 %v1304, %v880
  %v1309 = vmul.f32 %v1305, %v879
  %v1310 = vmul.f32 %v1306, %v880
  %v1311 = vadd.f32 %v1307, 0.0
  %v1312 = vadd.f32 %v1308, 0.0
  %v1313 = vadd.f32 %v1309, 0.0
  %v1314 = vadd.f32 %v1310, 0.0
  %v1315 = vld [vmem:[%s1134] sm:$0xff]
  %v1316 = vld [vmem:[%s1134 + $0x8] sm:$0xff]
  %v1317 = vld [vmem:[%s1134 + $0x10] sm:$0xff]
  %v1318 = vld [vmem:[%s1134 + $0x18] sm:$0xff]
  %v1319 = vmul.f32 %v1315, %v896
  %v1320 = vmul.f32 %v1316, %v897
  %v1321 = vmul.f32 %v1317, %v896
  %v1322 = vmul.f32 %v1318, %v897
  %v1323 = vadd.f32 %v1311, %v1319
  %v1324 = vadd.f32 %v1312, %v1320
  %v1325 = vadd.f32 %v1313, %v1321
  %v1326 = vadd.f32 %v1314, %v1322
  %v1327 = vld [vmem:[%s1147] sm:$0xff]
  %v1328 = vld [vmem:[%s1147 + $0x8] sm:$0xff]
  %v1329 = vld [vmem:[%s1147 + $0x10] sm:$0xff]
  %v1330 = vld [vmem:[%s1147 + $0x18] sm:$0xff]
  %v1331 = vmul.f32 %v1327, %v913
  %v1332 = vmul.f32 %v1328, %v914
  %v1333 = vmul.f32 %v1329, %v913
  %v1334 = vmul.f32 %v1330, %v914
  %v1335 = vadd.f32 %v1323, %v1331
  %v1336 = vadd.f32 %v1324, %v1332
  %v1337 = vadd.f32 %v1325, %v1333
  %v1338 = vadd.f32 %v1326, %v1334
  %v1339 = vld [vmem:[%s1248] sm:$0xff]
  %v1340 = vld [vmem:[%s1248 + $0x8] sm:$0xff]
  %v1341 = vld [vmem:[%s1248 + $0x10] sm:$0xff]
  %v1342 = vld [vmem:[%s1248 + $0x18] sm:$0xff]
  %v1343 = vmul.f32 %v1339, %v931
  %v1344 = vmul.f32 %v1340, %v932
  %v1345 = vmul.f32 %v1341, %v931
  %v1346 = vmul.f32 %v1342, %v932
  %v1347 = vadd.f32 %v1335, %v1343
  %v1348 = vadd.f32 %v1336, %v1344
  %v1349 = vadd.f32 %v1337, %v1345
  %v1350 = vadd.f32 %v1338, %v1346
  %v1351 = vld [vmem:[%s1261] sm:$0xff]
  %v1352 = vld [vmem:[%s1261 + $0x8] sm:$0xff]
  %v1353 = vld [vmem:[%s1261 + $0x10] sm:$0xff]
  %v1354 = vld [vmem:[%s1261 + $0x18] sm:$0xff]
  %v1355 = vmul.f32 %v1351, %v949
  %v1356 = vmul.f32 %v1352, %v950
  %v1357 = vmul.f32 %v1353, %v949
  %v1358 = vmul.f32 %v1354, %v950
  %v1359 = vadd.f32 %v1347, %v1355
  %v1360 = vadd.f32 %v1348, %v1356
  %v1361 = vadd.f32 %v1349, %v1357
  %v1362 = vadd.f32 %v1350, %v1358
  %v1363 = vld [vmem:[%s1274] sm:$0xff]
  %v1364 = vld [vmem:[%s1274 + $0x8] sm:$0xff]
  %v1365 = vld [vmem:[%s1274 + $0x10] sm:$0xff]
  %v1366 = vld [vmem:[%s1274 + $0x18] sm:$0xff]
  %v1367 = vmul.f32 %v1363, %v967
  %v1368 = vmul.f32 %v1364, %v968
  %v1369 = vmul.f32 %v1365, %v967
  %v1370 = vmul.f32 %v1366, %v968
  %v1371 = vadd.f32 %v1359, %v1367
  %v1372 = vadd.f32 %v1360, %v1368
  %v1373 = vadd.f32 %v1361, %v1369
  %v1374 = vadd.f32 %v1362, %v1370
  %s1375 = scalar_lea.vmem %s0, 160
  %v1376 = vld [vmem:[%s1375] sm:$0xff]
  %v1377 = vld [vmem:[%s1375 + $0x8] sm:$0xff]
  %v1378 = vld [vmem:[%s1375 + $0x10] sm:$0xff]
  %v1379 = vld [vmem:[%s1375 + $0x18] sm:$0xff]
  %v1380 = vmul.f32 %v1376, %v985
  %v1381 = vmul.f32 %v1377, %v986
  %v1382 = vmul.f32 %v1378, %v985
  %v1383 = vmul.f32 %v1379, %v986
  %v1384 = vadd.f32 %v1371, %v1380
  %v1385 = vadd.f32 %v1372, %v1381
  %v1386 = vadd.f32 %v1373, %v1382
  %v1387 = vadd.f32 %v1374, %v1383
  %s1388 = scalar_lea.vmem [#allocation2], 160
  %v1389 = vld [vmem:[%s1388] sm:$0xff]
  %v1390 = vld [vmem:[%s1388 + $0x8] sm:$0xff]
  %v1391 = vld [vmem:[%s1388 + $0x10] sm:$0xff]
  %v1392 = vld [vmem:[%s1388 + $0x18] sm:$0xff]
  %v1393 = vmul.f32 %v1389, %v1003
  %v1394 = vmul.f32 %v1390, %v1004
  %v1395 = vmul.f32 %v1391, %v1003
  %v1396 = vmul.f32 %v1392, %v1004
  %v1397 = vadd.f32 %v1384, %v1393
  %v1398 = vadd.f32 %v1385, %v1394
  %v1399 = vadd.f32 %v1386, %v1395
  %v1400 = vadd.f32 %v1387, %v1396
  %s1401 = scalar_lea.vmem [#allocation3], 160
  %v1402 = vld [vmem:[%s1401] sm:$0xff]
  %v1403 = vld [vmem:[%s1401 + $0x8] sm:$0xff]
  %v1404 = vld [vmem:[%s1401 + $0x10] sm:$0xff]
  %v1405 = vld [vmem:[%s1401 + $0x18] sm:$0xff]
  %v1406 = vmul.f32 %v1402, %v1021
  %v1407 = vmul.f32 %v1403, %v1022
  %v1408 = vmul.f32 %v1404, %v1021
  %v1409 = vmul.f32 %v1405, %v1022
  %v1410 = vadd.f32 %v1397, %v1406
  %v1411 = vadd.f32 %v1398, %v1407
  %v1412 = vadd.f32 %v1399, %v1408
  %v1413 = vadd.f32 %v1400, %v1409
  %1414 = vst [vmem:[#allocation4 + $0x60] sm:$0xff] %v1410
  %1415 = vst.msk [vmem:[#allocation4 + $0x68] sm:$0xff] %vm22, %v1411
  %1416 = vst [vmem:[#allocation4 + $0x70] sm:$0xff] %v1412
  %1417 = vst.msk [vmem:[#allocation4 + $0x78] sm:$0xff] %vm22, %v1413
  %v1418 = vadd.f32 %v1291, %v1410
  %v1419 = vadd.f32 %v1292, %v1411
  %v1420 = vadd.f32 %v1293, %v1412
  %v1421 = vadd.f32 %v1294, %v1413
  %v1422 = vmul.f32 %v1410, %v1410
  %v1423 = vmul.f32 %v1411, %v1411
  %v1424 = vmul.f32 %v1412, %v1412
  %v1425 = vmul.f32 %v1413, %v1413
  %v1426 = vadd.f32 %v1299, %v1422
  %v1427 = vadd.f32 %v1300, %v1423
  %v1428 = vadd.f32 %v1301, %v1424
  %v1429 = vadd.f32 %v1302, %v1425
  %v1430 = vld [vmem:[%s1248] sm:$0xff]
  %v1431 = vld [vmem:[%s1248 + $0x8] sm:$0xff]
  %v1432 = vld [vmem:[%s1248 + $0x10] sm:$0xff]
  %v1433 = vld [vmem:[%s1248 + $0x18] sm:$0xff]
  %v1434 = vmul.f32 %v1430, %v879
  %v1435 = vmul.f32 %v1431, %v880
  %v1436 = vmul.f32 %v1432, %v879
  %v1437 = vmul.f32 %v1433, %v880
  %v1438 = vadd.f32 %v1434, 0.0
  %v1439 = vadd.f32 %v1435, 0.0
  %v1440 = vadd.f32 %v1436, 0.0
  %v1441 = vadd.f32 %v1437, 0.0
  %v1442 = vld [vmem:[%s1261] sm:$0xff]
  %v1443 = vld [vmem:[%s1261 + $0x8] sm:$0xff]
  %v1444 = vld [vmem:[%s1261 + $0x10] sm:$0xff]
  %v1445 = vld [vmem:[%s1261 + $0x18] sm:$0xff]
  %v1446 = vmul.f32 %v1442, %v896
  %v1447 = vmul.f32 %v1443, %v897
  %v1448 = vmul.f32 %v1444, %v896
  %v1449 = vmul.f32 %v1445, %v897
  %v1450 = vadd.f32 %v1438, %v1446
  %v1451 = vadd.f32 %v1439, %v1447
  %v1452 = vadd.f32 %v1440, %v1448
  %v1453 = vadd.f32 %v1441, %v1449
  %v1454 = vld [vmem:[%s1274] sm:$0xff]
  %v1455 = vld [vmem:[%s1274 + $0x8] sm:$0xff]
  %v1456 = vld [vmem:[%s1274 + $0x10] sm:$0xff]
  %v1457 = vld [vmem:[%s1274 + $0x18] sm:$0xff]
  %v1458 = vmul.f32 %v1454, %v913
  %v1459 = vmul.f32 %v1455, %v914
  %v1460 = vmul.f32 %v1456, %v913
  %v1461 = vmul.f32 %v1457, %v914
  %v1462 = vadd.f32 %v1450, %v1458
  %v1463 = vadd.f32 %v1451, %v1459
  %v1464 = vadd.f32 %v1452, %v1460
  %v1465 = vadd.f32 %v1453, %v1461
  %v1466 = vld [vmem:[%s1375] sm:$0xff]
  %v1467 = vld [vmem:[%s1375 + $0x8] sm:$0xff]
  %v1468 = vld [vmem:[%s1375 + $0x10] sm:$0xff]
  %v1469 = vld [vmem:[%s1375 + $0x18] sm:$0xff]
  %v1470 = vmul.f32 %v1466, %v931
  %v1471 = vmul.f32 %v1467, %v932
  %v1472 = vmul.f32 %v1468, %v931
  %v1473 = vmul.f32 %v1469, %v932
  %v1474 = vadd.f32 %v1462, %v1470
  %v1475 = vadd.f32 %v1463, %v1471
  %v1476 = vadd.f32 %v1464, %v1472
  %v1477 = vadd.f32 %v1465, %v1473
  %v1478 = vld [vmem:[%s1388] sm:$0xff]
  %v1479 = vld [vmem:[%s1388 + $0x8] sm:$0xff]
  %v1480 = vld [vmem:[%s1388 + $0x10] sm:$0xff]
  %v1481 = vld [vmem:[%s1388 + $0x18] sm:$0xff]
  %v1482 = vmul.f32 %v1478, %v949
  %v1483 = vmul.f32 %v1479, %v950
  %v1484 = vmul.f32 %v1480, %v949
  %v1485 = vmul.f32 %v1481, %v950
  %v1486 = vadd.f32 %v1474, %v1482
  %v1487 = vadd.f32 %v1475, %v1483
  %v1488 = vadd.f32 %v1476, %v1484
  %v1489 = vadd.f32 %v1477, %v1485
  %v1490 = vld [vmem:[%s1401] sm:$0xff]
  %v1491 = vld [vmem:[%s1401 + $0x8] sm:$0xff]
  %v1492 = vld [vmem:[%s1401 + $0x10] sm:$0xff]
  %v1493 = vld [vmem:[%s1401 + $0x18] sm:$0xff]
  %v1494 = vmul.f32 %v1490, %v967
  %v1495 = vmul.f32 %v1491, %v968
  %v1496 = vmul.f32 %v1492, %v967
  %v1497 = vmul.f32 %v1493, %v968
  %v1498 = vadd.f32 %v1486, %v1494
  %v1499 = vadd.f32 %v1487, %v1495
  %v1500 = vadd.f32 %v1488, %v1496
  %v1501 = vadd.f32 %v1489, %v1497
  %s1502 = scalar_lea.vmem %s0, 192
  %v1503 = vld [vmem:[%s1502] sm:$0xff]
  %v1504 = vld [vmem:[%s1502 + $0x8] sm:$0xff]
  %v1505 = vld [vmem:[%s1502 + $0x10] sm:$0xff]
  %v1506 = vld [vmem:[%s1502 + $0x18] sm:$0xff]
  %v1507 = vmul.f32 %v1503, %v985
  %v1508 = vmul.f32 %v1504, %v986
  %v1509 = vmul.f32 %v1505, %v985
  %v1510 = vmul.f32 %v1506, %v986
  %v1511 = vadd.f32 %v1498, %v1507
  %v1512 = vadd.f32 %v1499, %v1508
  %v1513 = vadd.f32 %v1500, %v1509
  %v1514 = vadd.f32 %v1501, %v1510
  %s1515 = scalar_lea.vmem [#allocation2], 192
  %v1516 = vld [vmem:[%s1515] sm:$0xff]
  %v1517 = vld [vmem:[%s1515 + $0x8] sm:$0xff]
  %v1518 = vld [vmem:[%s1515 + $0x10] sm:$0xff]
  %v1519 = vld [vmem:[%s1515 + $0x18] sm:$0xff]
  %v1520 = vmul.f32 %v1516, %v1003
  %v1521 = vmul.f32 %v1517, %v1004
  %v1522 = vmul.f32 %v1518, %v1003
  %v1523 = vmul.f32 %v1519, %v1004
  %v1524 = vadd.f32 %v1511, %v1520
  %v1525 = vadd.f32 %v1512, %v1521
  %v1526 = vadd.f32 %v1513, %v1522
  %v1527 = vadd.f32 %v1514, %v1523
  %s1528 = scalar_lea.vmem [#allocation3], 192
  %v1529 = vld [vmem:[%s1528] sm:$0xff]
  %v1530 = vld [vmem:[%s1528 + $0x8] sm:$0xff]
  %v1531 = vld [vmem:[%s1528 + $0x10] sm:$0xff]
  %v1532 = vld [vmem:[%s1528 + $0x18] sm:$0xff]
  %v1533 = vmul.f32 %v1529, %v1021
  %v1534 = vmul.f32 %v1530, %v1022
  %v1535 = vmul.f32 %v1531, %v1021
  %v1536 = vmul.f32 %v1532, %v1022
  %v1537 = vadd.f32 %v1524, %v1533
  %v1538 = vadd.f32 %v1525, %v1534
  %v1539 = vadd.f32 %v1526, %v1535
  %v1540 = vadd.f32 %v1527, %v1536
  %1541 = vst [vmem:[#allocation4 + $0x80] sm:$0xff] %v1537
  %1542 = vst.msk [vmem:[#allocation4 + $0x88] sm:$0xff] %vm22, %v1538
  %1543 = vst [vmem:[#allocation4 + $0x90] sm:$0xff] %v1539
  %1544 = vst.msk [vmem:[#allocation4 + $0x98] sm:$0xff] %vm22, %v1540
  %v1545 = vadd.f32 %v1418, %v1537
  %v1546 = vadd.f32 %v1419, %v1538
  %v1547 = vadd.f32 %v1420, %v1539
  %v1548 = vadd.f32 %v1421, %v1540
  %v1549 = vmul.f32 %v1537, %v1537
  %v1550 = vmul.f32 %v1538, %v1538
  %v1551 = vmul.f32 %v1539, %v1539
  %v1552 = vmul.f32 %v1540, %v1540
  %v1553 = vadd.f32 %v1426, %v1549
  %v1554 = vadd.f32 %v1427, %v1550
  %v1555 = vadd.f32 %v1428, %v1551
  %v1556 = vadd.f32 %v1429, %v1552
  %v1557 = vld [vmem:[%s1375] sm:$0xff]
  %v1558 = vld [vmem:[%s1375 + $0x8] sm:$0xff]
  %v1559 = vld [vmem:[%s1375 + $0x10] sm:$0xff]
  %v1560 = vld [vmem:[%s1375 + $0x18] sm:$0xff]
  %v1561 = vmul.f32 %v1557, %v879
  %v1562 = vmul.f32 %v1558, %v880
  %v1563 = vmul.f32 %v1559, %v879
  %v1564 = vmul.f32 %v1560, %v880
  %v1565 = vadd.f32 %v1561, 0.0
  %v1566 = vadd.f32 %v1562, 0.0
  %v1567 = vadd.f32 %v1563, 0.0
  %v1568 = vadd.f32 %v1564, 0.0
  %v1569 = vld [vmem:[%s1388] sm:$0xff]
  %v1570 = vld [vmem:[%s1388 + $0x8] sm:$0xff]
  %v1571 = vld [vmem:[%s1388 + $0x10] sm:$0xff]
  %v1572 = vld [vmem:[%s1388 + $0x18] sm:$0xff]
  %v1573 = vmul.f32 %v1569, %v896
  %v1574 = vmul.f32 %v1570, %v897
  %v1575 = vmul.f32 %v1571, %v896
  %v1576 = vmul.f32 %v1572, %v897
  %v1577 = vadd.f32 %v1565, %v1573
  %v1578 = vadd.f32 %v1566, %v1574
  %v1579 = vadd.f32 %v1567, %v1575
  %v1580 = vadd.f32 %v1568, %v1576
  %v1581 = vld [vmem:[%s1401] sm:$0xff]
  %v1582 = vld [vmem:[%s1401 + $0x8] sm:$0xff]
  %v1583 = vld [vmem:[%s1401 + $0x10] sm:$0xff]
  %v1584 = vld [vmem:[%s1401 + $0x18] sm:$0xff]
  %v1585 = vmul.f32 %v1581, %v913
  %v1586 = vmul.f32 %v1582, %v914
  %v1587 = vmul.f32 %v1583, %v913
  %v1588 = vmul.f32 %v1584, %v914
  %v1589 = vadd.f32 %v1577, %v1585
  %v1590 = vadd.f32 %v1578, %v1586
  %v1591 = vadd.f32 %v1579, %v1587
  %v1592 = vadd.f32 %v1580, %v1588
  %v1593 = vld [vmem:[%s1502] sm:$0xff]
  %v1594 = vld [vmem:[%s1502 + $0x8] sm:$0xff]
  %v1595 = vld [vmem:[%s1502 + $0x10] sm:$0xff]
  %v1596 = vld [vmem:[%s1502 + $0x18] sm:$0xff]
  %v1597 = vmul.f32 %v1593, %v931
  %v1598 = vmul.f32 %v1594, %v932
  %v1599 = vmul.f32 %v1595, %v931
  %v1600 = vmul.f32 %v1596, %v932
  %v1601 = vadd.f32 %v1589, %v1597
  %v1602 = vadd.f32 %v1590, %v1598
  %v1603 = vadd.f32 %v1591, %v1599
  %v1604 = vadd.f32 %v1592, %v1600
  %v1605 = vld [vmem:[%s1515] sm:$0xff]
  %v1606 = vld [vmem:[%s1515 + $0x8] sm:$0xff]
  %v1607 = vld [vmem:[%s1515 + $0x10] sm:$0xff]
  %v1608 = vld [vmem:[%s1515 + $0x18] sm:$0xff]
  %v1609 = vmul.f32 %v1605, %v949
  %v1610 = vmul.f32 %v1606, %v950
  %v1611 = vmul.f32 %v1607, %v949
  %v1612 = vmul.f32 %v1608, %v950
  %v1613 = vadd.f32 %v1601, %v1609
  %v1614 = vadd.f32 %v1602, %v1610
  %v1615 = vadd.f32 %v1603, %v1611
  %v1616 = vadd.f32 %v1604, %v1612
  %v1617 = vld [vmem:[%s1528] sm:$0xff]
  %v1618 = vld [vmem:[%s1528 + $0x8] sm:$0xff]
  %v1619 = vld [vmem:[%s1528 + $0x10] sm:$0xff]
  %v1620 = vld [vmem:[%s1528 + $0x18] sm:$0xff]
  %v1621 = vmul.f32 %v1617, %v967
  %v1622 = vmul.f32 %v1618, %v968
  %v1623 = vmul.f32 %v1619, %v967
  %v1624 = vmul.f32 %v1620, %v968
  %v1625 = vadd.f32 %v1613, %v1621
  %v1626 = vadd.f32 %v1614, %v1622
  %v1627 = vadd.f32 %v1615, %v1623
  %v1628 = vadd.f32 %v1616, %v1624
  %s1629 = scalar_lea.vmem %s0, 224
  %v1630 = vld [vmem:[%s1629] sm:$0xff]
  %v1631 = vld [vmem:[%s1629 + $0x8] sm:$0xff]
  %v1632 = vld [vmem:[%s1629 + $0x10] sm:$0xff]
  %v1633 = vld [vmem:[%s1629 + $0x18] sm:$0xff]
  %v1634 = vmul.f32 %v1630, %v985
  %v1635 = vmul.f32 %v1631, %v986
  %v1636 = vmul.f32 %v1632, %v985
  %v1637 = vmul.f32 %v1633, %v986
  %v1638 = vadd.f32 %v1625, %v1634
  %v1639 = vadd.f32 %v1626, %v1635
  %v1640 = vadd.f32 %v1627, %v1636
  %v1641 = vadd.f32 %v1628, %v1637
  %s1642 = scalar_lea.vmem [#allocation2], 224
  %v1643 = vld [vmem:[%s1642] sm:$0xff]
  %v1644 = vld [vmem:[%s1642 + $0x8] sm:$0xff]
  %v1645 = vld [vmem:[%s1642 + $0x10] sm:$0xff]
  %v1646 = vld [vmem:[%s1642 + $0x18] sm:$0xff]
  %v1647 = vmul.f32 %v1643, %v1003
  %v1648 = vmul.f32 %v1644, %v1004
  %v1649 = vmul.f32 %v1645, %v1003
  %v1650 = vmul.f32 %v1646, %v1004
  %v1651 = vadd.f32 %v1638, %v1647
  %v1652 = vadd.f32 %v1639, %v1648
  %v1653 = vadd.f32 %v1640, %v1649
  %v1654 = vadd.f32 %v1641, %v1650
  %s1655 = scalar_lea.vmem [#allocation3], 224
  %v1656 = vld [vmem:[%s1655] sm:$0xff]
  %v1657 = vld [vmem:[%s1655 + $0x8] sm:$0xff]
  %v1658 = vld [vmem:[%s1655 + $0x10] sm:$0xff]
  %v1659 = vld [vmem:[%s1655 + $0x18] sm:$0xff]
  %v1660 = vmul.f32 %v1656, %v1021
  %v1661 = vmul.f32 %v1657, %v1022
  %v1662 = vmul.f32 %v1658, %v1021
  %v1663 = vmul.f32 %v1659, %v1022
  %v1664 = vadd.f32 %v1651, %v1660
  %v1665 = vadd.f32 %v1652, %v1661
  %v1666 = vadd.f32 %v1653, %v1662
  %v1667 = vadd.f32 %v1654, %v1663
  %1668 = vst [vmem:[#allocation4 + $0xa0] sm:$0xff] %v1664
  %1669 = vst.msk [vmem:[#allocation4 + $0xa8] sm:$0xff] %vm22, %v1665
  %1670 = vst [vmem:[#allocation4 + $0xb0] sm:$0xff] %v1666
  %1671 = vst.msk [vmem:[#allocation4 + $0xb8] sm:$0xff] %vm22, %v1667
  %v1672 = vadd.f32 %v1545, %v1664
  %v1673 = vadd.f32 %v1546, %v1665
  %v1674 = vadd.f32 %v1547, %v1666
  %v1675 = vadd.f32 %v1548, %v1667
  %v1676 = vmul.f32 %v1664, %v1664
  %v1677 = vmul.f32 %v1665, %v1665
  %v1678 = vmul.f32 %v1666, %v1666
  %v1679 = vmul.f32 %v1667, %v1667
  %v1680 = vadd.f32 %v1553, %v1676
  %v1681 = vadd.f32 %v1554, %v1677
  %v1682 = vadd.f32 %v1555, %v1678
  %v1683 = vadd.f32 %v1556, %v1679
  %v1684 = vld [vmem:[%s1502] sm:$0xff]
  %v1685 = vld [vmem:[%s1502 + $0x8] sm:$0xff]
  %v1686 = vld [vmem:[%s1502 + $0x10] sm:$0xff]
  %v1687 = vld [vmem:[%s1502 + $0x18] sm:$0xff]
  %v1688 = vmul.f32 %v1684, %v879
  %v1689 = vmul.f32 %v1685, %v880
  %v1690 = vmul.f32 %v1686, %v879
  %v1691 = vmul.f32 %v1687, %v880
  %v1692 = vadd.f32 %v1688, 0.0
  %v1693 = vadd.f32 %v1689, 0.0
  %v1694 = vadd.f32 %v1690, 0.0
  %v1695 = vadd.f32 %v1691, 0.0
  %v1696 = vld [vmem:[%s1515] sm:$0xff]
  %v1697 = vld [vmem:[%s1515 + $0x8] sm:$0xff]
  %v1698 = vld [vmem:[%s1515 + $0x10] sm:$0xff]
  %v1699 = vld [vmem:[%s1515 + $0x18] sm:$0xff]
  %v1700 = vmul.f32 %v1696, %v896
  %v1701 = vmul.f32 %v1697, %v897
  %v1702 = vmul.f32 %v1698, %v896
  %v1703 = vmul.f32 %v1699, %v897
  %v1704 = vadd.f32 %v1692, %v1700
  %v1705 = vadd.f32 %v1693, %v1701
  %v1706 = vadd.f32 %v1694, %v1702
  %v1707 = vadd.f32 %v1695, %v1703
  %v1708 = vld [vmem:[%s1528] sm:$0xff]
  %v1709 = vld [vmem:[%s1528 + $0x8] sm:$0xff]
  %v1710 = vld [vmem:[%s1528 + $0x10] sm:$0xff]
  %v1711 = vld [vmem:[%s1528 + $0x18] sm:$0xff]
  %v1712 = vmul.f32 %v1708, %v913
  %v1713 = vmul.f32 %v1709, %v914
  %v1714 = vmul.f32 %v1710, %v913
  %v1715 = vmul.f32 %v1711, %v914
  %v1716 = vadd.f32 %v1704, %v1712
  %v1717 = vadd.f32 %v1705, %v1713
  %v1718 = vadd.f32 %v1706, %v1714
  %v1719 = vadd.f32 %v1707, %v1715
  %v1720 = vld [vmem:[%s1629] sm:$0xff]
  %v1721 = vld [vmem:[%s1629 + $0x8] sm:$0xff]
  %v1722 = vld [vmem:[%s1629 + $0x10] sm:$0xff]
  %v1723 = vld [vmem:[%s1629 + $0x18] sm:$0xff]
  %v1724 = vmul.f32 %v1720, %v931
  %v1725 = vmul.f32 %v1721, %v932
  %v1726 = vmul.f32 %v1722, %v931
  %v1727 = vmul.f32 %v1723, %v932
  %v1728 = vadd.f32 %v1716, %v1724
  %v1729 = vadd.f32 %v1717, %v1725
  %v1730 = vadd.f32 %v1718, %v1726
  %v1731 = vadd.f32 %v1719, %v1727
  %v1732 = vld [vmem:[%s1642] sm:$0xff]
  %v1733 = vld [vmem:[%s1642 + $0x8] sm:$0xff]
  %v1734 = vld [vmem:[%s1642 + $0x10] sm:$0xff]
  %v1735 = vld [vmem:[%s1642 + $0x18] sm:$0xff]
  %v1736 = vmul.f32 %v1732, %v949
  %v1737 = vmul.f32 %v1733, %v950
  %v1738 = vmul.f32 %v1734, %v949
  %v1739 = vmul.f32 %v1735, %v950
  %v1740 = vadd.f32 %v1728, %v1736
  %v1741 = vadd.f32 %v1729, %v1737
  %v1742 = vadd.f32 %v1730, %v1738
  %v1743 = vadd.f32 %v1731, %v1739
  %v1744 = vld [vmem:[%s1655] sm:$0xff]
  %v1745 = vld [vmem:[%s1655 + $0x8] sm:$0xff]
  %v1746 = vld [vmem:[%s1655 + $0x10] sm:$0xff]
  %v1747 = vld [vmem:[%s1655 + $0x18] sm:$0xff]
  %v1748 = vmul.f32 %v1744, %v967
  %v1749 = vmul.f32 %v1745, %v968
  %v1750 = vmul.f32 %v1746, %v967
  %v1751 = vmul.f32 %v1747, %v968
  %v1752 = vadd.f32 %v1740, %v1748
  %v1753 = vadd.f32 %v1741, %v1749
  %v1754 = vadd.f32 %v1742, %v1750
  %v1755 = vadd.f32 %v1743, %v1751
  %s1756 = scalar_lea.vmem %s0, 256
  %v1757 = vld [vmem:[%s1756] sm:$0xff]
  %v1758 = vld [vmem:[%s1756 + $0x8] sm:$0xff]
  %v1759 = vld [vmem:[%s1756 + $0x10] sm:$0xff]
  %v1760 = vld [vmem:[%s1756 + $0x18] sm:$0xff]
  %v1761 = vmul.f32 %v1757, %v985
  %v1762 = vmul.f32 %v1758, %v986
  %v1763 = vmul.f32 %v1759, %v985
  %v1764 = vmul.f32 %v1760, %v986
  %v1765 = vadd.f32 %v1752, %v1761
  %v1766 = vadd.f32 %v1753, %v1762
  %v1767 = vadd.f32 %v1754, %v1763
  %v1768 = vadd.f32 %v1755, %v1764
  %s1769 = scalar_lea.vmem [#allocation2], 256
  %v1770 = vld [vmem:[%s1769] sm:$0xff]
  %v1771 = vld [vmem:[%s1769 + $0x8] sm:$0xff]
  %v1772 = vld [vmem:[%s1769 + $0x10] sm:$0xff]
  %v1773 = vld [vmem:[%s1769 + $0x18] sm:$0xff]
  %v1774 = vmul.f32 %v1770, %v1003
  %v1775 = vmul.f32 %v1771, %v1004
  %v1776 = vmul.f32 %v1772, %v1003
  %v1777 = vmul.f32 %v1773, %v1004
  %v1778 = vadd.f32 %v1765, %v1774
  %v1779 = vadd.f32 %v1766, %v1775
  %v1780 = vadd.f32 %v1767, %v1776
  %v1781 = vadd.f32 %v1768, %v1777
  %s1782 = scalar_lea.vmem [#allocation3], 256
  %v1783 = vld [vmem:[%s1782] sm:$0xff]
  %v1784 = vld [vmem:[%s1782 + $0x8] sm:$0xff]
  %v1785 = vld [vmem:[%s1782 + $0x10] sm:$0xff]
  %v1786 = vld [vmem:[%s1782 + $0x18] sm:$0xff]
  %v1787 = vmul.f32 %v1783, %v1021
  %v1788 = vmul.f32 %v1784, %v1022
  %v1789 = vmul.f32 %v1785, %v1021
  %v1790 = vmul.f32 %v1786, %v1022
  %v1791 = vadd.f32 %v1778, %v1787
  %v1792 = vadd.f32 %v1779, %v1788
  %v1793 = vadd.f32 %v1780, %v1789
  %v1794 = vadd.f32 %v1781, %v1790
  %1795 = vst [vmem:[#allocation4 + $0xc0] sm:$0xff] %v1791
  %1796 = vst.msk [vmem:[#allocation4 + $0xc8] sm:$0xff] %vm22, %v1792
  %1797 = vst [vmem:[#allocation4 + $0xd0] sm:$0xff] %v1793
  %1798 = vst.msk [vmem:[#allocation4 + $0xd8] sm:$0xff] %vm22, %v1794
  %v1799 = vadd.f32 %v1672, %v1791
  %v1800 = vadd.f32 %v1673, %v1792
  %v1801 = vadd.f32 %v1674, %v1793
  %v1802 = vadd.f32 %v1675, %v1794
  %v1803 = vmul.f32 %v1791, %v1791
  %v1804 = vmul.f32 %v1792, %v1792
  %v1805 = vmul.f32 %v1793, %v1793
  %v1806 = vmul.f32 %v1794, %v1794
  %v1807 = vadd.f32 %v1680, %v1803
  %v1808 = vadd.f32 %v1681, %v1804
  %v1809 = vadd.f32 %v1682, %v1805
  %v1810 = vadd.f32 %v1683, %v1806
  %v1811 = vld [vmem:[%s1629] sm:$0xff]
  %v1812 = vld [vmem:[%s1629 + $0x8] sm:$0xff]
  %v1813 = vld [vmem:[%s1629 + $0x10] sm:$0xff]
  %v1814 = vld [vmem:[%s1629 + $0x18] sm:$0xff]
  %v1815 = vmul.f32 %v1811, %v879
  %v1816 = vmul.f32 %v1812, %v880
  %v1817 = vmul.f32 %v1813, %v879
  %v1818 = vmul.f32 %v1814, %v880
  %v1819 = vadd.f32 %v1815, 0.0
  %v1820 = vadd.f32 %v1816, 0.0
  %v1821 = vadd.f32 %v1817, 0.0
  %v1822 = vadd.f32 %v1818, 0.0
  %v1823 = vld [vmem:[%s1642] sm:$0xff]
  %v1824 = vld [vmem:[%s1642 + $0x8] sm:$0xff]
  %v1825 = vld [vmem:[%s1642 + $0x10] sm:$0xff]
  %v1826 = vld [vmem:[%s1642 + $0x18] sm:$0xff]
  %v1827 = vmul.f32 %v1823, %v896
  %v1828 = vmul.f32 %v1824, %v897
  %v1829 = vmul.f32 %v1825, %v896
  %v1830 = vmul.f32 %v1826, %v897
  %v1831 = vadd.f32 %v1819, %v1827
  %v1832 = vadd.f32 %v1820, %v1828
  %v1833 = vadd.f32 %v1821, %v1829
  %v1834 = vadd.f32 %v1822, %v1830
  %v1835 = vld [vmem:[%s1655] sm:$0xff]
  %v1836 = vld [vmem:[%s1655 + $0x8] sm:$0xff]
  %v1837 = vld [vmem:[%s1655 + $0x10] sm:$0xff]
  %v1838 = vld [vmem:[%s1655 + $0x18] sm:$0xff]
  %v1839 = vmul.f32 %v1835, %v913
  %v1840 = vmul.f32 %v1836, %v914
  %v1841 = vmul.f32 %v1837, %v913
  %v1842 = vmul.f32 %v1838, %v914
  %v1843 = vadd.f32 %v1831, %v1839
  %v1844 = vadd.f32 %v1832, %v1840
  %v1845 = vadd.f32 %v1833, %v1841
  %v1846 = vadd.f32 %v1834, %v1842
  %v1847 = vld [vmem:[%s1756] sm:$0xff]
  %v1848 = vld [vmem:[%s1756 + $0x8] sm:$0xff]
  %v1849 = vld [vmem:[%s1756 + $0x10] sm:$0xff]
  %v1850 = vld [vmem:[%s1756 + $0x18] sm:$0xff]
  %v1851 = vmul.f32 %v1847, %v931
  %v1852 = vmul.f32 %v1848, %v932
  %v1853 = vmul.f32 %v1849, %v931
  %v1854 = vmul.f32 %v1850, %v932
  %v1855 = vadd.f32 %v1843, %v1851
  %v1856 = vadd.f32 %v1844, %v1852
  %v1857 = vadd.f32 %v1845, %v1853
  %v1858 = vadd.f32 %v1846, %v1854
  %v1859 = vld [vmem:[%s1769] sm:$0xff]
  %v1860 = vld [vmem:[%s1769 + $0x8] sm:$0xff]
  %v1861 = vld [vmem:[%s1769 + $0x10] sm:$0xff]
  %v1862 = vld [vmem:[%s1769 + $0x18] sm:$0xff]
  %v1863 = vmul.f32 %v1859, %v949
  %v1864 = vmul.f32 %v1860, %v950
  %v1865 = vmul.f32 %v1861, %v949
  %v1866 = vmul.f32 %v1862, %v950
  %v1867 = vadd.f32 %v1855, %v1863
  %v1868 = vadd.f32 %v1856, %v1864
  %v1869 = vadd.f32 %v1857, %v1865
  %v1870 = vadd.f32 %v1858, %v1866
  %v1871 = vld [vmem:[%s1782] sm:$0xff]
  %v1872 = vld [vmem:[%s1782 + $0x8] sm:$0xff]
  %v1873 = vld [vmem:[%s1782 + $0x10] sm:$0xff]
  %v1874 = vld [vmem:[%s1782 + $0x18] sm:$0xff]
  %v1875 = vmul.f32 %v1871, %v967
  %v1876 = vmul.f32 %v1872, %v968
  %v1877 = vmul.f32 %v1873, %v967
  %v1878 = vmul.f32 %v1874, %v968
  %v1879 = vadd.f32 %v1867, %v1875
  %v1880 = vadd.f32 %v1868, %v1876
  %v1881 = vadd.f32 %v1869, %v1877
  %v1882 = vadd.f32 %v1870, %v1878
  %s1883 = scalar_lea.vmem %s0, 288
  %v1884 = vld [vmem:[%s1883] sm:$0xff]
  %v1885 = vld [vmem:[%s1883 + $0x8] sm:$0xff]
  %v1886 = vld [vmem:[%s1883 + $0x10] sm:$0xff]
  %v1887 = vld [vmem:[%s1883 + $0x18] sm:$0xff]
  %v1888 = vmul.f32 %v1884, %v985
  %v1889 = vmul.f32 %v1885, %v986
  %v1890 = vmul.f32 %v1886, %v985
  %v1891 = vmul.f32 %v1887, %v986
  %v1892 = vadd.f32 %v1879, %v1888
  %v1893 = vadd.f32 %v1880, %v1889
  %v1894 = vadd.f32 %v1881, %v1890
  %v1895 = vadd.f32 %v1882, %v1891
  %s1896 = scalar_lea.vmem [#allocation2], 288
  %v1897 = vld [vmem:[%s1896] sm:$0xff]
  %v1898 = vld [vmem:[%s1896 + $0x8] sm:$0xff]
  %v1899 = vld [vmem:[%s1896 + $0x10] sm:$0xff]
  %v1900 = vld [vmem:[%s1896 + $0x18] sm:$0xff]
  %v1901 = vmul.f32 %v1897, %v1003
  %v1902 = vmul.f32 %v1898, %v1004
  %v1903 = vmul.f32 %v1899, %v1003
  %v1904 = vmul.f32 %v1900, %v1004
  %v1905 = vadd.f32 %v1892, %v1901
  %v1906 = vadd.f32 %v1893, %v1902
  %v1907 = vadd.f32 %v1894, %v1903
  %v1908 = vadd.f32 %v1895, %v1904
  %s1909 = scalar_lea.vmem [#allocation3], 288
  %v1910 = vld [vmem:[%s1909] sm:$0xff]
  %v1911 = vld [vmem:[%s1909 + $0x8] sm:$0xff]
  %v1912 = vld [vmem:[%s1909 + $0x10] sm:$0xff]
  %v1913 = vld [vmem:[%s1909 + $0x18] sm:$0xff]
  %v1914 = vmul.f32 %v1910, %v1021
  %v1915 = vmul.f32 %v1911, %v1022
  %v1916 = vmul.f32 %v1912, %v1021
  %v1917 = vmul.f32 %v1913, %v1022
  %v1918 = vadd.f32 %v1905, %v1914
  %v1919 = vadd.f32 %v1906, %v1915
  %v1920 = vadd.f32 %v1907, %v1916
  %v1921 = vadd.f32 %v1908, %v1917
  %1922 = vst [vmem:[#allocation4 + $0xe0] sm:$0xff] %v1918
  %1923 = vst.msk [vmem:[#allocation4 + $0xe8] sm:$0xff] %vm22, %v1919
  %1924 = vst [vmem:[#allocation4 + $0xf0] sm:$0xff] %v1920
  %1925 = vst.msk [vmem:[#allocation4 + $0xf8] sm:$0xff] %vm22, %v1921
  %v1926 = vadd.f32 %v1799, %v1918
  %v1927 = vadd.f32 %v1800, %v1919
  %v1928 = vadd.f32 %v1801, %v1920
  %v1929 = vadd.f32 %v1802, %v1921
  %v1930 = vmul.f32 %v1918, %v1918
  %v1931 = vmul.f32 %v1919, %v1919
  %v1932 = vmul.f32 %v1920, %v1920
  %v1933 = vmul.f32 %v1921, %v1921
  %v1934 = vadd.f32 %v1807, %v1930
  %v1935 = vadd.f32 %v1808, %v1931
  %v1936 = vadd.f32 %v1809, %v1932
  %v1937 = vadd.f32 %v1810, %v1933
  %v1938 = vld [vmem:[%s1756] sm:$0xff]
  %v1939 = vld [vmem:[%s1756 + $0x8] sm:$0xff]
  %v1940 = vld [vmem:[%s1756 + $0x10] sm:$0xff]
  %v1941 = vld [vmem:[%s1756 + $0x18] sm:$0xff]
  %v1942 = vmul.f32 %v1938, %v879
  %v1943 = vmul.f32 %v1939, %v880
  %v1944 = vmul.f32 %v1940, %v879
  %v1945 = vmul.f32 %v1941, %v880
  %v1946 = vadd.f32 %v1942, 0.0
  %v1947 = vadd.f32 %v1943, 0.0
  %v1948 = vadd.f32 %v1944, 0.0
  %v1949 = vadd.f32 %v1945, 0.0
  %v1950 = vld [vmem:[%s1769] sm:$0xff]
  %v1951 = vld [vmem:[%s1769 + $0x8] sm:$0xff]
  %v1952 = vld [vmem:[%s1769 + $0x10] sm:$0xff]
  %v1953 = vld [vmem:[%s1769 + $0x18] sm:$0xff]
  %v1954 = vmul.f32 %v1950, %v896
  %v1955 = vmul.f32 %v1951, %v897
  %v1956 = vmul.f32 %v1952, %v896
  %v1957 = vmul.f32 %v1953, %v897
  %v1958 = vadd.f32 %v1946, %v1954
  %v1959 = vadd.f32 %v1947, %v1955
  %v1960 = vadd.f32 %v1948, %v1956
  %v1961 = vadd.f32 %v1949, %v1957
  %v1962 = vld [vmem:[%s1782] sm:$0xff]
  %v1963 = vld [vmem:[%s1782 + $0x8] sm:$0xff]
  %v1964 = vld [vmem:[%s1782 + $0x10] sm:$0xff]
  %v1965 = vld [vmem:[%s1782 + $0x18] sm:$0xff]
  %v1966 = vmul.f32 %v1962, %v913
  %v1967 = vmul.f32 %v1963, %v914
  %v1968 = vmul.f32 %v1964, %v913
  %v1969 = vmul.f32 %v1965, %v914
  %v1970 = vadd.f32 %v1958, %v1966
  %v1971 = vadd.f32 %v1959, %v1967
  %v1972 = vadd.f32 %v1960, %v1968
  %v1973 = vadd.f32 %v1961, %v1969
  %v1974 = vld [vmem:[%s1883] sm:$0xff]
  %v1975 = vld [vmem:[%s1883 + $0x8] sm:$0xff]
  %v1976 = vld [vmem:[%s1883 + $0x10] sm:$0xff]
  %v1977 = vld [vmem:[%s1883 + $0x18] sm:$0xff]
  %v1978 = vmul.f32 %v1974, %v931
  %v1979 = vmul.f32 %v1975, %v932
  %v1980 = vmul.f32 %v1976, %v931
  %v1981 = vmul.f32 %v1977, %v932
  %v1982 = vadd.f32 %v1970, %v1978
  %v1983 = vadd.f32 %v1971, %v1979
  %v1984 = vadd.f32 %v1972, %v1980
  %v1985 = vadd.f32 %v1973, %v1981
  %v1986 = vld [vmem:[%s1896] sm:$0xff]
  %v1987 = vld [vmem:[%s1896 + $0x8] sm:$0xff]
  %v1988 = vld [vmem:[%s1896 + $0x10] sm:$0xff]
  %v1989 = vld [vmem:[%s1896 + $0x18] sm:$0xff]
  %v1990 = vmul.f32 %v1986, %v949
  %v1991 = vmul.f32 %v1987, %v950
  %v1992 = vmul.f32 %v1988, %v949
  %v1993 = vmul.f32 %v1989, %v950
  %v1994 = vadd.f32 %v1982, %v1990
  %v1995 = vadd.f32 %v1983, %v1991
  %v1996 = vadd.f32 %v1984, %v1992
  %v1997 = vadd.f32 %v1985, %v1993
  %v1998 = vld [vmem:[%s1909] sm:$0xff]
  %v1999 = vld [vmem:[%s1909 + $0x8] sm:$0xff]
  %v2000 = vld [vmem:[%s1909 + $0x10] sm:$0xff]
  %v2001 = vld [vmem:[%s1909 + $0x18] sm:$0xff]
  %v2002 = vmul.f32 %v1998, %v967
  %v2003 = vmul.f32 %v1999, %v968
  %v2004 = vmul.f32 %v2000, %v967
  %v2005 = vmul.f32 %v2001, %v968
  %v2006 = vadd.f32 %v1994, %v2002
  %v2007 = vadd.f32 %v1995, %v2003
  %v2008 = vadd.f32 %v1996, %v2004
  %v2009 = vadd.f32 %v1997, %v2005
  %s2010 = scalar_lea.vmem %s0, 320
  %v2011 = vld [vmem:[%s2010] sm:$0xff]
  %v2012 = vld [vmem:[%s2010 + $0x8] sm:$0xff]
  %v2013 = vld [vmem:[%s2010 + $0x10] sm:$0xff]
  %v2014 = vld [vmem:[%s2010 + $0x18] sm:$0xff]
  %v2015 = vmul.f32 %v2011, %v985
  %v2016 = vmul.f32 %v2012, %v986
  %v2017 = vmul.f32 %v2013, %v985
  %v2018 = vmul.f32 %v2014, %v986
  %v2019 = vadd.f32 %v2006, %v2015
  %v2020 = vadd.f32 %v2007, %v2016
  %v2021 = vadd.f32 %v2008, %v2017
  %v2022 = vadd.f32 %v2009, %v2018
  %s2023 = scalar_lea.vmem [#allocation2], 320
  %v2024 = vld [vmem:[%s2023] sm:$0xff]
  %v2025 = vld [vmem:[%s2023 + $0x8] sm:$0xff]
  %v2026 = vld [vmem:[%s2023 + $0x10] sm:$0xff]
  %v2027 = vld [vmem:[%s2023 + $0x18] sm:$0xff]
  %v2028 = vmul.f32 %v2024, %v1003
  %v2029 = vmul.f32 %v2025, %v1004
  %v2030 = vmul.f32 %v2026, %v1003
  %v2031 = vmul.f32 %v2027, %v1004
  %v2032 = vadd.f32 %v2019, %v2028
  %v2033 = vadd.f32 %v2020, %v2029
  %v2034 = vadd.f32 %v2021, %v2030
  %v2035 = vadd.f32 %v2022, %v2031
  %s2036 = scalar_lea.vmem [#allocation3], 320
  %v2037 = vld [vmem:[%s2036] sm:$0xff]
  %v2038 = vld [vmem:[%s2036 + $0x8] sm:$0xff]
  %v2039 = vld [vmem:[%s2036 + $0x10] sm:$0xff]
  %v2040 = vld [vmem:[%s2036 + $0x18] sm:$0xff]
  %v2041 = vmul.f32 %v2037, %v1021
  %v2042 = vmul.f32 %v2038, %v1022
  %v2043 = vmul.f32 %v2039, %v1021
  %v2044 = vmul.f32 %v2040, %v1022
  %v2045 = vadd.f32 %v2032, %v2041
  %v2046 = vadd.f32 %v2033, %v2042
  %v2047 = vadd.f32 %v2034, %v2043
  %v2048 = vadd.f32 %v2035, %v2044
  %2049 = vst [vmem:[#allocation4 + $0x100] sm:$0xff] %v2045
  %2050 = vst.msk [vmem:[#allocation4 + $0x108] sm:$0xff] %vm22, %v2046
  %2051 = vst [vmem:[#allocation4 + $0x110] sm:$0xff] %v2047
  %2052 = vst.msk [vmem:[#allocation4 + $0x118] sm:$0xff] %vm22, %v2048
  %v2053 = vadd.f32 %v1926, %v2045
  %v2054 = vadd.f32 %v1927, %v2046
  %v2055 = vadd.f32 %v1928, %v2047
  %v2056 = vadd.f32 %v1929, %v2048
  %v2057 = vmul.f32 %v2045, %v2045
  %v2058 = vmul.f32 %v2046, %v2046
  %v2059 = vmul.f32 %v2047, %v2047
  %v2060 = vmul.f32 %v2048, %v2048
  %v2061 = vadd.f32 %v1934, %v2057
  %v2062 = vadd.f32 %v1935, %v2058
  %v2063 = vadd.f32 %v1936, %v2059
  %v2064 = vadd.f32 %v1937, %v2060
  %v2065 = vld [vmem:[%s1883] sm:$0xff]
  %v2066 = vld [vmem:[%s1883 + $0x8] sm:$0xff]
  %v2067 = vld [vmem:[%s1883 + $0x10] sm:$0xff]
  %v2068 = vld [vmem:[%s1883 + $0x18] sm:$0xff]
  %v2069 = vmul.f32 %v2065, %v879
  %v2070 = vmul.f32 %v2066, %v880
  %v2071 = vmul.f32 %v2067, %v879
  %v2072 = vmul.f32 %v2068, %v880
  %v2073 = vadd.f32 %v2069, 0.0
  %v2074 = vadd.f32 %v2070, 0.0
  %v2075 = vadd.f32 %v2071, 0.0
  %v2076 = vadd.f32 %v2072, 0.0
  %v2077 = vld [vmem:[%s1896] sm:$0xff]
  %v2078 = vld [vmem:[%s1896 + $0x8] sm:$0xff]
  %v2079 = vld [vmem:[%s1896 + $0x10] sm:$0xff]
  %v2080 = vld [vmem:[%s1896 + $0x18] sm:$0xff]
  %v2081 = vmul.f32 %v2077, %v896
  %v2082 = vmul.f32 %v2078, %v897
  %v2083 = vmul.f32 %v2079, %v896
  %v2084 = vmul.f32 %v2080, %v897
  %v2085 = vadd.f32 %v2073, %v2081
  %v2086 = vadd.f32 %v2074, %v2082
  %v2087 = vadd.f32 %v2075, %v2083
  %v2088 = vadd.f32 %v2076, %v2084
  %v2089 = vld [vmem:[%s1909] sm:$0xff]
  %v2090 = vld [vmem:[%s1909 + $0x8] sm:$0xff]
  %v2091 = vld [vmem:[%s1909 + $0x10] sm:$0xff]
  %v2092 = vld [vmem:[%s1909 + $0x18] sm:$0xff]
  %v2093 = vmul.f32 %v2089, %v913
  %v2094 = vmul.f32 %v2090, %v914
  %v2095 = vmul.f32 %v2091, %v913
  %v2096 = vmul.f32 %v2092, %v914
  %v2097 = vadd.f32 %v2085, %v2093
  %v2098 = vadd.f32 %v2086, %v2094
  %v2099 = vadd.f32 %v2087, %v2095
  %v2100 = vadd.f32 %v2088, %v2096
  %v2101 = vld [vmem:[%s2010] sm:$0xff]
  %v2102 = vld [vmem:[%s2010 + $0x8] sm:$0xff]
  %v2103 = vld [vmem:[%s2010 + $0x10] sm:$0xff]
  %v2104 = vld [vmem:[%s2010 + $0x18] sm:$0xff]
  %v2105 = vmul.f32 %v2101, %v931
  %v2106 = vmul.f32 %v2102, %v932
  %v2107 = vmul.f32 %v2103, %v931
  %v2108 = vmul.f32 %v2104, %v932
  %v2109 = vadd.f32 %v2097, %v2105
  %v2110 = vadd.f32 %v2098, %v2106
  %v2111 = vadd.f32 %v2099, %v2107
  %v2112 = vadd.f32 %v2100, %v2108
  %v2113 = vld [vmem:[%s2023] sm:$0xff]
  %v2114 = vld [vmem:[%s2023 + $0x8] sm:$0xff]
  %v2115 = vld [vmem:[%s2023 + $0x10] sm:$0xff]
  %v2116 = vld [vmem:[%s2023 + $0x18] sm:$0xff]
  %v2117 = vmul.f32 %v2113, %v949
  %v2118 = vmul.f32 %v2114, %v950
  %v2119 = vmul.f32 %v2115, %v949
  %v2120 = vmul.f32 %v2116, %v950
  %v2121 = vadd.f32 %v2109, %v2117
  %v2122 = vadd.f32 %v2110, %v2118
  %v2123 = vadd.f32 %v2111, %v2119
  %v2124 = vadd.f32 %v2112, %v2120
  %v2125 = vld [vmem:[%s2036] sm:$0xff]
  %v2126 = vld [vmem:[%s2036 + $0x8] sm:$0xff]
  %v2127 = vld [vmem:[%s2036 + $0x10] sm:$0xff]
  %v2128 = vld [vmem:[%s2036 + $0x18] sm:$0xff]
  %v2129 = vmul.f32 %v2125, %v967
  %v2130 = vmul.f32 %v2126, %v968
  %v2131 = vmul.f32 %v2127, %v967
  %v2132 = vmul.f32 %v2128, %v968
  %v2133 = vadd.f32 %v2121, %v2129
  %v2134 = vadd.f32 %v2122, %v2130
  %v2135 = vadd.f32 %v2123, %v2131
  %v2136 = vadd.f32 %v2124, %v2132
  %s2137 = scalar_lea.vmem %s0, 352
  %v2138 = vld [vmem:[%s2137] sm:$0xff]
  %v2139 = vld [vmem:[%s2137 + $0x8] sm:$0xff]
  %v2140 = vld [vmem:[%s2137 + $0x10] sm:$0xff]
  %v2141 = vld [vmem:[%s2137 + $0x18] sm:$0xff]
  %v2142 = vmul.f32 %v2138, %v985
  %v2143 = vmul.f32 %v2139, %v986
  %v2144 = vmul.f32 %v2140, %v985
  %v2145 = vmul.f32 %v2141, %v986
  %v2146 = vadd.f32 %v2133, %v2142
  %v2147 = vadd.f32 %v2134, %v2143
  %v2148 = vadd.f32 %v2135, %v2144
  %v2149 = vadd.f32 %v2136, %v2145
  %s2150 = scalar_lea.vmem [#allocation2], 352
  %v2151 = vld [vmem:[%s2150] sm:$0xff]
  %v2152 = vld [vmem:[%s2150 + $0x8] sm:$0xff]
  %v2153 = vld [vmem:[%s2150 + $0x10] sm:$0xff]
  %v2154 = vld [vmem:[%s2150 + $0x18] sm:$0xff]
  %v2155 = vmul.f32 %v2151, %v1003
  %v2156 = vmul.f32 %v2152, %v1004
  %v2157 = vmul.f32 %v2153, %v1003
  %v2158 = vmul.f32 %v2154, %v1004
  %v2159 = vadd.f32 %v2146, %v2155
  %v2160 = vadd.f32 %v2147, %v2156
  %v2161 = vadd.f32 %v2148, %v2157
  %v2162 = vadd.f32 %v2149, %v2158
  %s2163 = scalar_lea.vmem [#allocation3], 352
  %v2164 = vld [vmem:[%s2163] sm:$0xff]
  %v2165 = vld [vmem:[%s2163 + $0x8] sm:$0xff]
  %v2166 = vld [vmem:[%s2163 + $0x10] sm:$0xff]
  %v2167 = vld [vmem:[%s2163 + $0x18] sm:$0xff]
  %v2168 = vmul.f32 %v2164, %v1021
  %v2169 = vmul.f32 %v2165, %v1022
  %v2170 = vmul.f32 %v2166, %v1021
  %v2171 = vmul.f32 %v2167, %v1022
  %v2172 = vadd.f32 %v2159, %v2168
  %v2173 = vadd.f32 %v2160, %v2169
  %v2174 = vadd.f32 %v2161, %v2170
  %v2175 = vadd.f32 %v2162, %v2171
  %2176 = vst [vmem:[#allocation4 + $0x120] sm:$0xff] %v2172
  %2177 = vst.msk [vmem:[#allocation4 + $0x128] sm:$0xff] %vm22, %v2173
  %2178 = vst [vmem:[#allocation4 + $0x130] sm:$0xff] %v2174
  %2179 = vst.msk [vmem:[#allocation4 + $0x138] sm:$0xff] %vm22, %v2175
  %v2180 = vadd.f32 %v2053, %v2172
  %v2181 = vadd.f32 %v2054, %v2173
  %v2182 = vadd.f32 %v2055, %v2174
  %v2183 = vadd.f32 %v2056, %v2175
  %v2184 = vmul.f32 %v2172, %v2172
  %v2185 = vmul.f32 %v2173, %v2173
  %v2186 = vmul.f32 %v2174, %v2174
  %v2187 = vmul.f32 %v2175, %v2175
  %v2188 = vadd.f32 %v2061, %v2184
  %v2189 = vadd.f32 %v2062, %v2185
  %v2190 = vadd.f32 %v2063, %v2186
  %v2191 = vadd.f32 %v2064, %v2187
  %v2192 = vld [vmem:[%s2010] sm:$0xff]
  %v2193 = vld [vmem:[%s2010 + $0x8] sm:$0xff]
  %v2194 = vld [vmem:[%s2010 + $0x10] sm:$0xff]
  %v2195 = vld [vmem:[%s2010 + $0x18] sm:$0xff]
  %v2196 = vmul.f32 %v2192, %v879
  %v2197 = vmul.f32 %v2193, %v880
  %v2198 = vmul.f32 %v2194, %v879
  %v2199 = vmul.f32 %v2195, %v880
  %v2200 = vadd.f32 %v2196, 0.0
  %v2201 = vadd.f32 %v2197, 0.0
  %v2202 = vadd.f32 %v2198, 0.0
  %v2203 = vadd.f32 %v2199, 0.0
  %v2204 = vld [vmem:[%s2023] sm:$0xff]
  %v2205 = vld [vmem:[%s2023 + $0x8] sm:$0xff]
  %v2206 = vld [vmem:[%s2023 + $0x10] sm:$0xff]
  %v2207 = vld [vmem:[%s2023 + $0x18] sm:$0xff]
  %v2208 = vmul.f32 %v2204, %v896
  %v2209 = vmul.f32 %v2205, %v897
  %v2210 = vmul.f32 %v2206, %v896
  %v2211 = vmul.f32 %v2207, %v897
  %v2212 = vadd.f32 %v2200, %v2208
  %v2213 = vadd.f32 %v2201, %v2209
  %v2214 = vadd.f32 %v2202, %v2210
  %v2215 = vadd.f32 %v2203, %v2211
  %v2216 = vld [vmem:[%s2036] sm:$0xff]
  %v2217 = vld [vmem:[%s2036 + $0x8] sm:$0xff]
  %v2218 = vld [vmem:[%s2036 + $0x10] sm:$0xff]
  %v2219 = vld [vmem:[%s2036 + $0x18] sm:$0xff]
  %v2220 = vmul.f32 %v2216, %v913
  %v2221 = vmul.f32 %v2217, %v914
  %v2222 = vmul.f32 %v2218, %v913
  %v2223 = vmul.f32 %v2219, %v914
  %v2224 = vadd.f32 %v2212, %v2220
  %v2225 = vadd.f32 %v2213, %v2221
  %v2226 = vadd.f32 %v2214, %v2222
  %v2227 = vadd.f32 %v2215, %v2223
  %v2228 = vld [vmem:[%s2137] sm:$0xff]
  %v2229 = vld [vmem:[%s2137 + $0x8] sm:$0xff]
  %v2230 = vld [vmem:[%s2137 + $0x10] sm:$0xff]
  %v2231 = vld [vmem:[%s2137 + $0x18] sm:$0xff]
  %v2232 = vmul.f32 %v2228, %v931
  %v2233 = vmul.f32 %v2229, %v932
  %v2234 = vmul.f32 %v2230, %v931
  %v2235 = vmul.f32 %v2231, %v932
  %v2236 = vadd.f32 %v2224, %v2232
  %v2237 = vadd.f32 %v2225, %v2233
  %v2238 = vadd.f32 %v2226, %v2234
  %v2239 = vadd.f32 %v2227, %v2235
  %v2240 = vld [vmem:[%s2150] sm:$0xff]
  %v2241 = vld [vmem:[%s2150 + $0x8] sm:$0xff]
  %v2242 = vld [vmem:[%s2150 + $0x10] sm:$0xff]
  %v2243 = vld [vmem:[%s2150 + $0x18] sm:$0xff]
  %v2244 = vmul.f32 %v2240, %v949
  %v2245 = vmul.f32 %v2241, %v950
  %v2246 = vmul.f32 %v2242, %v949
  %v2247 = vmul.f32 %v2243, %v950
  %v2248 = vadd.f32 %v2236, %v2244
  %v2249 = vadd.f32 %v2237, %v2245
  %v2250 = vadd.f32 %v2238, %v2246
  %v2251 = vadd.f32 %v2239, %v2247
  %v2252 = vld [vmem:[%s2163] sm:$0xff]
  %v2253 = vld [vmem:[%s2163 + $0x8] sm:$0xff]
  %v2254 = vld [vmem:[%s2163 + $0x10] sm:$0xff]
  %v2255 = vld [vmem:[%s2163 + $0x18] sm:$0xff]
  %v2256 = vmul.f32 %v2252, %v967
  %v2257 = vmul.f32 %v2253, %v968
  %v2258 = vmul.f32 %v2254, %v967
  %v2259 = vmul.f32 %v2255, %v968
  %v2260 = vadd.f32 %v2248, %v2256
  %v2261 = vadd.f32 %v2249, %v2257
  %v2262 = vadd.f32 %v2250, %v2258
  %v2263 = vadd.f32 %v2251, %v2259
  %s2264 = scalar_lea.vmem %s0, 384
  %v2265 = vld [vmem:[%s2264] sm:$0xff]
  %v2266 = vld [vmem:[%s2264 + $0x8] sm:$0xff]
  %v2267 = vld [vmem:[%s2264 + $0x10] sm:$0xff]
  %v2268 = vld [vmem:[%s2264 + $0x18] sm:$0xff]
  %v2269 = vmul.f32 %v2265, %v985
  %v2270 = vmul.f32 %v2266, %v986
  %v2271 = vmul.f32 %v2267, %v985
  %v2272 = vmul.f32 %v2268, %v986
  %v2273 = vadd.f32 %v2260, %v2269
  %v2274 = vadd.f32 %v2261, %v2270
  %v2275 = vadd.f32 %v2262, %v2271
  %v2276 = vadd.f32 %v2263, %v2272
  %s2277 = scalar_lea.vmem [#allocation2], 384
  %v2278 = vld [vmem:[%s2277] sm:$0xff]
  %v2279 = vld [vmem:[%s2277 + $0x8] sm:$0xff]
  %v2280 = vld [vmem:[%s2277 + $0x10] sm:$0xff]
  %v2281 = vld [vmem:[%s2277 + $0x18] sm:$0xff]
  %v2282 = vmul.f32 %v2278, %v1003
  %v2283 = vmul.f32 %v2279, %v1004
  %v2284 = vmul.f32 %v2280, %v1003
  %v2285 = vmul.f32 %v2281, %v1004
  %v2286 = vadd.f32 %v2273, %v2282
  %v2287 = vadd.f32 %v2274, %v2283
  %v2288 = vadd.f32 %v2275, %v2284
  %v2289 = vadd.f32 %v2276, %v2285
  %s2290 = scalar_lea.vmem [#allocation3], 384
  %v2291 = vld [vmem:[%s2290] sm:$0xff]
  %v2292 = vld [vmem:[%s2290 + $0x8] sm:$0xff]
  %v2293 = vld [vmem:[%s2290 + $0x10] sm:$0xff]
  %v2294 = vld [vmem:[%s2290 + $0x18] sm:$0xff]
  %v2295 = vmul.f32 %v2291, %v1021
  %v2296 = vmul.f32 %v2292, %v1022
  %v2297 = vmul.f32 %v2293, %v1021
  %v2298 = vmul.f32 %v2294, %v1022
  %v2299 = vadd.f32 %v2286, %v2295
  %v2300 = vadd.f32 %v2287, %v2296
  %v2301 = vadd.f32 %v2288, %v2297
  %v2302 = vadd.f32 %v2289, %v2298
  %2303 = vst [vmem:[#allocation4 + $0x140] sm:$0xff] %v2299
  %2304 = vst.msk [vmem:[#allocation4 + $0x148] sm:$0xff] %vm22, %v2300
  %2305 = vst [vmem:[#allocation4 + $0x150] sm:$0xff] %v2301
  %2306 = vst.msk [vmem:[#allocation4 + $0x158] sm:$0xff] %vm22, %v2302
  %v2307 = vadd.f32 %v2180, %v2299
  %v2308 = vadd.f32 %v2181, %v2300
  %v2309 = vadd.f32 %v2182, %v2301
  %v2310 = vadd.f32 %v2183, %v2302
  %v2311 = vmul.f32 %v2299, %v2299
  %v2312 = vmul.f32 %v2300, %v2300
  %v2313 = vmul.f32 %v2301, %v2301
  %v2314 = vmul.f32 %v2302, %v2302
  %v2315 = vadd.f32 %v2188, %v2311
  %v2316 = vadd.f32 %v2189, %v2312
  %v2317 = vadd.f32 %v2190, %v2313
  %v2318 = vadd.f32 %v2191, %v2314
  %v2319 = vld [vmem:[%s2137] sm:$0xff]
  %v2320 = vld [vmem:[%s2137 + $0x8] sm:$0xff]
  %v2321 = vld [vmem:[%s2137 + $0x10] sm:$0xff]
  %v2322 = vld [vmem:[%s2137 + $0x18] sm:$0xff]
  %v2323 = vmul.f32 %v2319, %v879
  %v2324 = vmul.f32 %v2320, %v880
  %v2325 = vmul.f32 %v2321, %v879
  %v2326 = vmul.f32 %v2322, %v880
  %v2327 = vadd.f32 %v2323, 0.0
  %v2328 = vadd.f32 %v2324, 0.0
  %v2329 = vadd.f32 %v2325, 0.0
  %v2330 = vadd.f32 %v2326, 0.0
  %v2331 = vld [vmem:[%s2150] sm:$0xff]
  %v2332 = vld [vmem:[%s2150 + $0x8] sm:$0xff]
  %v2333 = vld [vmem:[%s2150 + $0x10] sm:$0xff]
  %v2334 = vld [vmem:[%s2150 + $0x18] sm:$0xff]
  %v2335 = vmul.f32 %v2331, %v896
  %v2336 = vmul.f32 %v2332, %v897
  %v2337 = vmul.f32 %v2333, %v896
  %v2338 = vmul.f32 %v2334, %v897
  %v2339 = vadd.f32 %v2327, %v2335
  %v2340 = vadd.f32 %v2328, %v2336
  %v2341 = vadd.f32 %v2329, %v2337
  %v2342 = vadd.f32 %v2330, %v2338
  %v2343 = vld [vmem:[%s2163] sm:$0xff]
  %v2344 = vld [vmem:[%s2163 + $0x8] sm:$0xff]
  %v2345 = vld [vmem:[%s2163 + $0x10] sm:$0xff]
  %v2346 = vld [vmem:[%s2163 + $0x18] sm:$0xff]
  %v2347 = vmul.f32 %v2343, %v913
  %v2348 = vmul.f32 %v2344, %v914
  %v2349 = vmul.f32 %v2345, %v913
  %v2350 = vmul.f32 %v2346, %v914
  %v2351 = vadd.f32 %v2339, %v2347
  %v2352 = vadd.f32 %v2340, %v2348
  %v2353 = vadd.f32 %v2341, %v2349
  %v2354 = vadd.f32 %v2342, %v2350
  %v2355 = vld [vmem:[%s2264] sm:$0xff]
  %v2356 = vld [vmem:[%s2264 + $0x8] sm:$0xff]
  %v2357 = vld [vmem:[%s2264 + $0x10] sm:$0xff]
  %v2358 = vld [vmem:[%s2264 + $0x18] sm:$0xff]
  %v2359 = vmul.f32 %v2355, %v931
  %v2360 = vmul.f32 %v2356, %v932
  %v2361 = vmul.f32 %v2357, %v931
  %v2362 = vmul.f32 %v2358, %v932
  %v2363 = vadd.f32 %v2351, %v2359
  %v2364 = vadd.f32 %v2352, %v2360
  %v2365 = vadd.f32 %v2353, %v2361
  %v2366 = vadd.f32 %v2354, %v2362
  %v2367 = vld [vmem:[%s2277] sm:$0xff]
  %v2368 = vld [vmem:[%s2277 + $0x8] sm:$0xff]
  %v2369 = vld [vmem:[%s2277 + $0x10] sm:$0xff]
  %v2370 = vld [vmem:[%s2277 + $0x18] sm:$0xff]
  %v2371 = vmul.f32 %v2367, %v949
  %v2372 = vmul.f32 %v2368, %v950
  %v2373 = vmul.f32 %v2369, %v949
  %v2374 = vmul.f32 %v2370, %v950
  %v2375 = vadd.f32 %v2363, %v2371
  %v2376 = vadd.f32 %v2364, %v2372
  %v2377 = vadd.f32 %v2365, %v2373
  %v2378 = vadd.f32 %v2366, %v2374
  %v2379 = vld [vmem:[%s2290] sm:$0xff]
  %v2380 = vld [vmem:[%s2290 + $0x8] sm:$0xff]
  %v2381 = vld [vmem:[%s2290 + $0x10] sm:$0xff]
  %v2382 = vld [vmem:[%s2290 + $0x18] sm:$0xff]
  %v2383 = vmul.f32 %v2379, %v967
  %v2384 = vmul.f32 %v2380, %v968
  %v2385 = vmul.f32 %v2381, %v967
  %v2386 = vmul.f32 %v2382, %v968
  %v2387 = vadd.f32 %v2375, %v2383
  %v2388 = vadd.f32 %v2376, %v2384
  %v2389 = vadd.f32 %v2377, %v2385
  %v2390 = vadd.f32 %v2378, %v2386
  %s2391 = scalar_lea.vmem %s0, 416
  %v2392 = vld [vmem:[%s2391] sm:$0xff]
  %v2393 = vld [vmem:[%s2391 + $0x8] sm:$0xff]
  %v2394 = vld [vmem:[%s2391 + $0x10] sm:$0xff]
  %v2395 = vld [vmem:[%s2391 + $0x18] sm:$0xff]
  %v2396 = vmul.f32 %v2392, %v985
  %v2397 = vmul.f32 %v2393, %v986
  %v2398 = vmul.f32 %v2394, %v985
  %v2399 = vmul.f32 %v2395, %v986
  %v2400 = vadd.f32 %v2387, %v2396
  %v2401 = vadd.f32 %v2388, %v2397
  %v2402 = vadd.f32 %v2389, %v2398
  %v2403 = vadd.f32 %v2390, %v2399
  %s2404 = scalar_lea.vmem [#allocation2], 416
  %v2405 = vld [vmem:[%s2404] sm:$0xff]
  %v2406 = vld [vmem:[%s2404 + $0x8] sm:$0xff]
  %v2407 = vld [vmem:[%s2404 + $0x10] sm:$0xff]
  %v2408 = vld [vmem:[%s2404 + $0x18] sm:$0xff]
  %v2409 = vmul.f32 %v2405, %v1003
  %v2410 = vmul.f32 %v2406, %v1004
  %v2411 = vmul.f32 %v2407, %v1003
  %v2412 = vmul.f32 %v2408, %v1004
  %v2413 = vadd.f32 %v2400, %v2409
  %v2414 = vadd.f32 %v2401, %v2410
  %v2415 = vadd.f32 %v2402, %v2411
  %v2416 = vadd.f32 %v2403, %v2412
  %s2417 = scalar_lea.vmem [#allocation3], 416
  %v2418 = vld [vmem:[%s2417] sm:$0xff]
  %v2419 = vld [vmem:[%s2417 + $0x8] sm:$0xff]
  %v2420 = vld [vmem:[%s2417 + $0x10] sm:$0xff]
  %v2421 = vld [vmem:[%s2417 + $0x18] sm:$0xff]
  %v2422 = vmul.f32 %v2418, %v1021
  %v2423 = vmul.f32 %v2419, %v1022
  %v2424 = vmul.f32 %v2420, %v1021
  %v2425 = vmul.f32 %v2421, %v1022
  %v2426 = vadd.f32 %v2413, %v2422
  %v2427 = vadd.f32 %v2414, %v2423
  %v2428 = vadd.f32 %v2415, %v2424
  %v2429 = vadd.f32 %v2416, %v2425
  %2430 = vst [vmem:[#allocation4 + $0x160] sm:$0xff] %v2426
  %2431 = vst.msk [vmem:[#allocation4 + $0x168] sm:$0xff] %vm22, %v2427
  %2432 = vst [vmem:[#allocation4 + $0x170] sm:$0xff] %v2428
  %2433 = vst.msk [vmem:[#allocation4 + $0x178] sm:$0xff] %vm22, %v2429
  %v2434 = vadd.f32 %v2307, %v2426
  %v2435 = vadd.f32 %v2308, %v2427
  %v2436 = vadd.f32 %v2309, %v2428
  %v2437 = vadd.f32 %v2310, %v2429
  %v2438 = vmul.f32 %v2426, %v2426
  %v2439 = vmul.f32 %v2427, %v2427
  %v2440 = vmul.f32 %v2428, %v2428
  %v2441 = vmul.f32 %v2429, %v2429
  %v2442 = vadd.f32 %v2315, %v2438
  %v2443 = vadd.f32 %v2316, %v2439
  %v2444 = vadd.f32 %v2317, %v2440
  %v2445 = vadd.f32 %v2318, %v2441
  %v2446 = vld [vmem:[%s2264] sm:$0xff]
  %v2447 = vld [vmem:[%s2264 + $0x8] sm:$0xff]
  %v2448 = vld [vmem:[%s2264 + $0x10] sm:$0xff]
  %v2449 = vld [vmem:[%s2264 + $0x18] sm:$0xff]
  %v2450 = vmul.f32 %v2446, %v879
  %v2451 = vmul.f32 %v2447, %v880
  %v2452 = vmul.f32 %v2448, %v879
  %v2453 = vmul.f32 %v2449, %v880
  %v2454 = vadd.f32 %v2450, 0.0
  %v2455 = vadd.f32 %v2451, 0.0
  %v2456 = vadd.f32 %v2452, 0.0
  %v2457 = vadd.f32 %v2453, 0.0
  %v2458 = vld [vmem:[%s2277] sm:$0xff]
  %v2459 = vld [vmem:[%s2277 + $0x8] sm:$0xff]
  %v2460 = vld [vmem:[%s2277 + $0x10] sm:$0xff]
  %v2461 = vld [vmem:[%s2277 + $0x18] sm:$0xff]
  %v2462 = vmul.f32 %v2458, %v896
  %v2463 = vmul.f32 %v2459, %v897
  %v2464 = vmul.f32 %v2460, %v896
  %v2465 = vmul.f32 %v2461, %v897
  %v2466 = vadd.f32 %v2454, %v2462
  %v2467 = vadd.f32 %v2455, %v2463
  %v2468 = vadd.f32 %v2456, %v2464
  %v2469 = vadd.f32 %v2457, %v2465
  %v2470 = vld [vmem:[%s2290] sm:$0xff]
  %v2471 = vld [vmem:[%s2290 + $0x8] sm:$0xff]
  %v2472 = vld [vmem:[%s2290 + $0x10] sm:$0xff]
  %v2473 = vld [vmem:[%s2290 + $0x18] sm:$0xff]
  %v2474 = vmul.f32 %v2470, %v913
  %v2475 = vmul.f32 %v2471, %v914
  %v2476 = vmul.f32 %v2472, %v913
  %v2477 = vmul.f32 %v2473, %v914
  %v2478 = vadd.f32 %v2466, %v2474
  %v2479 = vadd.f32 %v2467, %v2475
  %v2480 = vadd.f32 %v2468, %v2476
  %v2481 = vadd.f32 %v2469, %v2477
  %v2482 = vld [vmem:[%s2391] sm:$0xff]
  %v2483 = vld [vmem:[%s2391 + $0x8] sm:$0xff]
  %v2484 = vld [vmem:[%s2391 + $0x10] sm:$0xff]
  %v2485 = vld [vmem:[%s2391 + $0x18] sm:$0xff]
  %v2486 = vmul.f32 %v2482, %v931
  %v2487 = vmul.f32 %v2483, %v932
  %v2488 = vmul.f32 %v2484, %v931
  %v2489 = vmul.f32 %v2485, %v932
  %v2490 = vadd.f32 %v2478, %v2486
  %v2491 = vadd.f32 %v2479, %v2487
  %v2492 = vadd.f32 %v2480, %v2488
  %v2493 = vadd.f32 %v2481, %v2489
  %v2494 = vld [vmem:[%s2404] sm:$0xff]
  %v2495 = vld [vmem:[%s2404 + $0x8] sm:$0xff]
  %v2496 = vld [vmem:[%s2404 + $0x10] sm:$0xff]
  %v2497 = vld [vmem:[%s2404 + $0x18] sm:$0xff]
  %v2498 = vmul.f32 %v2494, %v949
  %v2499 = vmul.f32 %v2495, %v950
  %v2500 = vmul.f32 %v2496, %v949
  %v2501 = vmul.f32 %v2497, %v950
  %v2502 = vadd.f32 %v2490, %v2498
  %v2503 = vadd.f32 %v2491, %v2499
  %v2504 = vadd.f32 %v2492, %v2500
  %v2505 = vadd.f32 %v2493, %v2501
  %v2506 = vld [vmem:[%s2417] sm:$0xff]
  %v2507 = vld [vmem:[%s2417 + $0x8] sm:$0xff]
  %v2508 = vld [vmem:[%s2417 + $0x10] sm:$0xff]
  %v2509 = vld [vmem:[%s2417 + $0x18] sm:$0xff]
  %v2510 = vmul.f32 %v2506, %v967
  %v2511 = vmul.f32 %v2507, %v968
  %v2512 = vmul.f32 %v2508, %v967
  %v2513 = vmul.f32 %v2509, %v968
  %v2514 = vadd.f32 %v2502, %v2510
  %v2515 = vadd.f32 %v2503, %v2511
  %v2516 = vadd.f32 %v2504, %v2512
  %v2517 = vadd.f32 %v2505, %v2513
  %s2518 = scalar_lea.vmem %s0, 448
  %v2519 = vld [vmem:[%s2518] sm:$0xff]
  %v2520 = vld [vmem:[%s2518 + $0x8] sm:$0xff]
  %v2521 = vld [vmem:[%s2518 + $0x10] sm:$0xff]
  %v2522 = vld [vmem:[%s2518 + $0x18] sm:$0xff]
  %v2523 = vmul.f32 %v2519, %v985
  %v2524 = vmul.f32 %v2520, %v986
  %v2525 = vmul.f32 %v2521, %v985
  %v2526 = vmul.f32 %v2522, %v986
  %v2527 = vadd.f32 %v2514, %v2523
  %v2528 = vadd.f32 %v2515, %v2524
  %v2529 = vadd.f32 %v2516, %v2525
  %v2530 = vadd.f32 %v2517, %v2526
  %s2531 = scalar_lea.vmem [#allocation2], 448
  %v2532 = vld [vmem:[%s2531] sm:$0xff]
  %v2533 = vld [vmem:[%s2531 + $0x8] sm:$0xff]
  %v2534 = vld [vmem:[%s2531 + $0x10] sm:$0xff]
  %v2535 = vld [vmem:[%s2531 + $0x18] sm:$0xff]
  %v2536 = vmul.f32 %v2532, %v1003
  %v2537 = vmul.f32 %v2533, %v1004
  %v2538 = vmul.f32 %v2534, %v1003
  %v2539 = vmul.f32 %v2535, %v1004
  %v2540 = vadd.f32 %v2527, %v2536
  %v2541 = vadd.f32 %v2528, %v2537
  %v2542 = vadd.f32 %v2529, %v2538
  %v2543 = vadd.f32 %v2530, %v2539
  %s2544 = scalar_lea.vmem [#allocation3], 448
  %v2545 = vld [vmem:[%s2544] sm:$0xff]
  %v2546 = vld [vmem:[%s2544 + $0x8] sm:$0xff]
  %v2547 = vld [vmem:[%s2544 + $0x10] sm:$0xff]
  %v2548 = vld [vmem:[%s2544 + $0x18] sm:$0xff]
  %v2549 = vmul.f32 %v2545, %v1021
  %v2550 = vmul.f32 %v2546, %v1022
  %v2551 = vmul.f32 %v2547, %v1021
  %v2552 = vmul.f32 %v2548, %v1022
  %v2553 = vadd.f32 %v2540, %v2549
  %v2554 = vadd.f32 %v2541, %v2550
  %v2555 = vadd.f32 %v2542, %v2551
  %v2556 = vadd.f32 %v2543, %v2552
  %2557 = vst [vmem:[#allocation4 + $0x180] sm:$0xff] %v2553
  %2558 = vst.msk [vmem:[#allocation4 + $0x188] sm:$0xff] %vm22, %v2554
  %2559 = vst [vmem:[#allocation4 + $0x190] sm:$0xff] %v2555
  %2560 = vst.msk [vmem:[#allocation4 + $0x198] sm:$0xff] %vm22, %v2556
  %v2561 = vadd.f32 %v2434, %v2553
  %v2562 = vadd.f32 %v2435, %v2554
  %v2563 = vadd.f32 %v2436, %v2555
  %v2564 = vadd.f32 %v2437, %v2556
  %v2565 = vmul.f32 %v2553, %v2553
  %v2566 = vmul.f32 %v2554, %v2554
  %v2567 = vmul.f32 %v2555, %v2555
  %v2568 = vmul.f32 %v2556, %v2556
  %v2569 = vadd.f32 %v2442, %v2565
  %v2570 = vadd.f32 %v2443, %v2566
  %v2571 = vadd.f32 %v2444, %v2567
  %v2572 = vadd.f32 %v2445, %v2568
  %v2573 = vld [vmem:[%s2391] sm:$0xff]
  %v2574 = vld [vmem:[%s2391 + $0x8] sm:$0xff]
  %v2575 = vld [vmem:[%s2391 + $0x10] sm:$0xff]
  %v2576 = vld [vmem:[%s2391 + $0x18] sm:$0xff]
  %v2577 = vmul.f32 %v2573, %v879
  %v2578 = vmul.f32 %v2574, %v880
  %v2579 = vmul.f32 %v2575, %v879
  %v2580 = vmul.f32 %v2576, %v880
  %v2581 = vadd.f32 %v2577, 0.0
  %v2582 = vadd.f32 %v2578, 0.0
  %v2583 = vadd.f32 %v2579, 0.0
  %v2584 = vadd.f32 %v2580, 0.0
  %v2585 = vld [vmem:[%s2404] sm:$0xff]
  %v2586 = vld [vmem:[%s2404 + $0x8] sm:$0xff]
  %v2587 = vld [vmem:[%s2404 + $0x10] sm:$0xff]
  %v2588 = vld [vmem:[%s2404 + $0x18] sm:$0xff]
  %v2589 = vmul.f32 %v2585, %v896
  %v2590 = vmul.f32 %v2586, %v897
  %v2591 = vmul.f32 %v2587, %v896
  %v2592 = vmul.f32 %v2588, %v897
  %v2593 = vadd.f32 %v2581, %v2589
  %v2594 = vadd.f32 %v2582, %v2590
  %v2595 = vadd.f32 %v2583, %v2591
  %v2596 = vadd.f32 %v2584, %v2592
  %v2597 = vld [vmem:[%s2417] sm:$0xff]
  %v2598 = vld [vmem:[%s2417 + $0x8] sm:$0xff]
  %v2599 = vld [vmem:[%s2417 + $0x10] sm:$0xff]
  %v2600 = vld [vmem:[%s2417 + $0x18] sm:$0xff]
  %v2601 = vmul.f32 %v2597, %v913
  %v2602 = vmul.f32 %v2598, %v914
  %v2603 = vmul.f32 %v2599, %v913
  %v2604 = vmul.f32 %v2600, %v914
  %v2605 = vadd.f32 %v2593, %v2601
  %v2606 = vadd.f32 %v2594, %v2602
  %v2607 = vadd.f32 %v2595, %v2603
  %v2608 = vadd.f32 %v2596, %v2604
  %v2609 = vld [vmem:[%s2518] sm:$0xff]
  %v2610 = vld [vmem:[%s2518 + $0x8] sm:$0xff]
  %v2611 = vld [vmem:[%s2518 + $0x10] sm:$0xff]
  %v2612 = vld [vmem:[%s2518 + $0x18] sm:$0xff]
  %v2613 = vmul.f32 %v2609, %v931
  %v2614 = vmul.f32 %v2610, %v932
  %v2615 = vmul.f32 %v2611, %v931
  %v2616 = vmul.f32 %v2612, %v932
  %v2617 = vadd.f32 %v2605, %v2613
  %v2618 = vadd.f32 %v2606, %v2614
  %v2619 = vadd.f32 %v2607, %v2615
  %v2620 = vadd.f32 %v2608, %v2616
  %v2621 = vld [vmem:[%s2531] sm:$0xff]
  %v2622 = vld [vmem:[%s2531 + $0x8] sm:$0xff]
  %v2623 = vld [vmem:[%s2531 + $0x10] sm:$0xff]
  %v2624 = vld [vmem:[%s2531 + $0x18] sm:$0xff]
  %v2625 = vmul.f32 %v2621, %v949
  %v2626 = vmul.f32 %v2622, %v950
  %v2627 = vmul.f32 %v2623, %v949
  %v2628 = vmul.f32 %v2624, %v950
  %v2629 = vadd.f32 %v2617, %v2625
  %v2630 = vadd.f32 %v2618, %v2626
  %v2631 = vadd.f32 %v2619, %v2627
  %v2632 = vadd.f32 %v2620, %v2628
  %v2633 = vld [vmem:[%s2544] sm:$0xff]
  %v2634 = vld [vmem:[%s2544 + $0x8] sm:$0xff]
  %v2635 = vld [vmem:[%s2544 + $0x10] sm:$0xff]
  %v2636 = vld [vmem:[%s2544 + $0x18] sm:$0xff]
  %v2637 = vmul.f32 %v2633, %v967
  %v2638 = vmul.f32 %v2634, %v968
  %v2639 = vmul.f32 %v2635, %v967
  %v2640 = vmul.f32 %v2636, %v968
  %v2641 = vadd.f32 %v2629, %v2637
  %v2642 = vadd.f32 %v2630, %v2638
  %v2643 = vadd.f32 %v2631, %v2639
  %v2644 = vadd.f32 %v2632, %v2640
  %s2645 = scalar_lea.vmem %s0, 480
  %v2646 = vld [vmem:[%s2645] sm:$0xff]
  %v2647 = vld [vmem:[%s2645 + $0x8] sm:$0xff]
  %v2648 = vld [vmem:[%s2645 + $0x10] sm:$0xff]
  %v2649 = vld [vmem:[%s2645 + $0x18] sm:$0xff]
  %v2650 = vmul.f32 %v2646, %v985
  %v2651 = vmul.f32 %v2647, %v986
  %v2652 = vmul.f32 %v2648, %v985
  %v2653 = vmul.f32 %v2649, %v986
  %v2654 = vadd.f32 %v2641, %v2650
  %v2655 = vadd.f32 %v2642, %v2651
  %v2656 = vadd.f32 %v2643, %v2652
  %v2657 = vadd.f32 %v2644, %v2653
  %s2658 = scalar_lea.vmem [#allocation2], 480
  %v2659 = vld [vmem:[%s2658] sm:$0xff]
  %v2660 = vld [vmem:[%s2658 + $0x8] sm:$0xff]
  %v2661 = vld [vmem:[%s2658 + $0x10] sm:$0xff]
  %v2662 = vld [vmem:[%s2658 + $0x18] sm:$0xff]
  %v2663 = vmul.f32 %v2659, %v1003
  %v2664 = vmul.f32 %v2660, %v1004
  %v2665 = vmul.f32 %v2661, %v1003
  %v2666 = vmul.f32 %v2662, %v1004
  %v2667 = vadd.f32 %v2654, %v2663
  %v2668 = vadd.f32 %v2655, %v2664
  %v2669 = vadd.f32 %v2656, %v2665
  %v2670 = vadd.f32 %v2657, %v2666
  %s2671 = scalar_lea.vmem [#allocation3], 480
  %v2672 = vld [vmem:[%s2671] sm:$0xff]
  %v2673 = vld [vmem:[%s2671 + $0x8] sm:$0xff]
  %v2674 = vld [vmem:[%s2671 + $0x10] sm:$0xff]
  %v2675 = vld [vmem:[%s2671 + $0x18] sm:$0xff]
  %v2676 = vmul.f32 %v2672, %v1021
  %v2677 = vmul.f32 %v2673, %v1022
  %v2678 = vmul.f32 %v2674, %v1021
  %v2679 = vmul.f32 %v2675, %v1022
  %v2680 = vadd.f32 %v2667, %v2676
  %v2681 = vadd.f32 %v2668, %v2677
  %v2682 = vadd.f32 %v2669, %v2678
  %v2683 = vadd.f32 %v2670, %v2679
  %2684 = vst [vmem:[#allocation4 + $0x1a0] sm:$0xff] %v2680
  %2685 = vst.msk [vmem:[#allocation4 + $0x1a8] sm:$0xff] %vm22, %v2681
  %2686 = vst [vmem:[#allocation4 + $0x1b0] sm:$0xff] %v2682
  %2687 = vst.msk [vmem:[#allocation4 + $0x1b8] sm:$0xff] %vm22, %v2683
  %v2688 = vadd.f32 %v2561, %v2680
  %v2689 = vadd.f32 %v2562, %v2681
  %v2690 = vadd.f32 %v2563, %v2682
  %v2691 = vadd.f32 %v2564, %v2683
  %v2692 = vmul.f32 %v2680, %v2680
  %v2693 = vmul.f32 %v2681, %v2681
  %v2694 = vmul.f32 %v2682, %v2682
  %v2695 = vmul.f32 %v2683, %v2683
  %v2696 = vadd.f32 %v2569, %v2692
  %v2697 = vadd.f32 %v2570, %v2693
  %v2698 = vadd.f32 %v2571, %v2694
  %v2699 = vadd.f32 %v2572, %v2695
  %v2700 = vsel %vm632, %v2690, 0.0
  %v2701 = vadd.f32 %v2688, %v2700
  %v2702 = vrot.slane %v2701, 4
  %v2703 = vadd.f32 %v2701, %v2702
  %v2704 = vrot.slane %v2703, 2
  %v2705 = vadd.f32 %v2703, %v2704
  %v2706 = vrot.slane %v2705, 1
  %v2707 = vadd.f32 %v2705, %v2706
  %v2708 = vsel %vm22, %v2689, 0.0
  %v2709 = vsel %vm442, %v2691, 0.0
  %v2710 = vadd.f32 %v2708, %v2709
  %v2711 = vrot.slane %v2710, 4
  %v2712 = vadd.f32 %v2710, %v2711
  %v2713 = vrot.slane %v2712, 2
  %v2714 = vadd.f32 %v2712, %v2713
  %v2715 = vrot.slane %v2714, 1
  %v2716 = vadd.f32 %v2714, %v2715
  %v2717 = vrcp.pop 196.0
  %v2718 = vmul.f32 196.0, %v2717
  %v2719 = vsub.f32 1.0, %v2718
  %v2720 = vmul.f32 %v2717, %v2719
  %v2721 = vadd.f32 %v2717, %v2720
  %vm2722 = vweird.f32 %v2717
  %v2723 = vsel %vm2722, %v2717, %v2721
  %v2724 = vmul.f32 %v2707, %v2723
  %v2725 = vmul.f32 %v2716, %v2723
  %v2726 = vsel %vm632, %v2698, 0.0
  %v2727 = vadd.f32 %v2696, %v2726
  %v2728 = vrot.slane %v2727, 4
  %v2729 = vadd.f32 %v2727, %v2728
  %v2730 = vrot.slane %v2729, 2
  %v2731 = vadd.f32 %v2729, %v2730
  %v2732 = vrot.slane %v2731, 1
  %v2733 = vadd.f32 %v2731, %v2732
  %v2734 = vsel %vm22, %v2697, 0.0
  %v2735 = vsel %vm442, %v2699, 0.0
  %v2736 = vadd.f32 %v2734, %v2735
  %v2737 = vrot.slane %v2736, 4
  %v2738 = vadd.f32 %v2736, %v2737
  %v2739 = vrot.slane %v2738, 2
  %v2740 = vadd.f32 %v2738, %v2739
  %v2741 = vrot.slane %v2740, 1
  %v2742 = vadd.f32 %v2740, %v2741
  %v2743 = vmul.f32 %v2733, %v2723
  %v2744 = vmul.f32 %v2742, %v2723
  %v2745 = vmul.f32 %v2724, %v2724
  %v2746 = vmul.f32 %v2725, %v2725
  %v2747 = vsub.f32 %v2743, %v2745
  %v2748 = vsub.f32 %v2744, %v2746
  %v2749 = vadd.f32 %v2747, 1e-05
  %v2750 = vadd.f32 %v2748, 1e-05
  %v2751 = vrsqrt.pop %v2749
  %v2752 = vmul.f32 %v2751, %v2749
  %v2753 = vmul.f32 %v2752, %v2751
  %v2754 = vmul.f32 0.5, %v2753
  %v2755 = vsub.f32 1.5, %v2754
  %v2756 = vmul.f32 %v2751, %v2755
  %vm2757 = vweird.f32 %v2749
  %vm2758 = vweird.f32 %v2751
  %vm2759 = vmor %vm2757, %vm2758
  %v2760 = vsel %vm2759, %v2751, %v2756
  %v2761 = vrsqrt.pop %v2750
  %v2762 = vmul.f32 %v2761, %v2750
  %v2763 = vmul.f32 %v2762, %v2761
  %v2764 = vmul.f32 0.5, %v2763
  %v2765 = vsub.f32 1.5, %v2764
  %v2766 = vmul.f32 %v2761, %v2765
  %vm2767 = vweird.f32 %v2750
  %vm2768 = vweird.f32 %v2761
  %vm2769 = vmor %vm2767, %vm2768
  %v2770 = vsel %vm2769, %v2761, %v2766
  %v2771 = vld [vmem:[%s2] sm:$0x3]
  %v2774 = vrot.slane %v2770, 7
  %vm2775 = vcmask 1040384
  %v2776 = vsel %vm2775, %v2760, %v2774
  %v2778 = vmul.f32 %v2771, %v2776
  %v2779 = vld [vmem:[%s3] sm:$0x3]
  %v2781 = vperm.slane %v2778, 0
  %v2782 = vperm.slane %v2778, 1
  %v2785 = vmul.f32 %v2724, %v2781
  %v2786 = vmul.f32 %v2725, %v2782
  %v2789 = vrot.slane %v2786, 7
  %v2790 = vsel %vm2775, %v2785, %v2789
  %v2792 = vsub.f32 %v2779, %v2790
  %v2794 = vperm.slane %v2792, 0
  %v2795 = vperm.slane %v2792, 1
  %v2798 = vld [vmem:[#allocation4] sm:$0xff]
  %v2799 = vld [vmem:[#allocation4 + $0x8] sm:$0xff]
  %v2800 = vld [vmem:[#allocation4 + $0x10] sm:$0xff]
  %v2801 = vld [vmem:[#allocation4 + $0x18] sm:$0xff]
  %v2802 = vmul.f32 %v2798, %v2781
  %v2803 = vmul.f32 %v2799, %v2782
  %v2804 = vmul.f32 %v2800, %v2781
  %v2805 = vmul.f32 %v2801, %v2782
  %v2806 = vadd.f32 %v2802, %v2794
  %v2807 = vadd.f32 %v2803, %v2795
  %v2808 = vadd.f32 %v2804, %v2794
  %v2809 = vadd.f32 %v2805, %v2795
  %v2810 = vpack.c.bf16 %v2807, %v2806
  %v2811 = vpack.c.bf16 %v2809, %v2808
  %vm2812 = vcmask 1043456
  %vm2813 = vcmask 392196
  %vm2814 = vmor %vm2813, %vm2812
  %2815 = vst.msk [vmem:[#allocation5] sm:$0xff] %vm2814, %v2810
  %2816 = vst.msk [vmem:[#allocation5 + $0x8] sm:$0xff] %vm2814, %v2811
  %v2817 = vld [vmem:[#allocation4 + $0x20] sm:$0xff]
  %v2818 = vld [vmem:[#allocation4 + $0x28] sm:$0xff]
  %v2819 = vld [vmem:[#allocation4 + $0x30] sm:$0xff]
  %v2820 = vld [vmem:[#allocation4 + $0x38] sm:$0xff]
  %v2821 = vmul.f32 %v2817, %v2781
  %v2822 = vmul.f32 %v2818, %v2782
  %v2823 = vmul.f32 %v2819, %v2781
  %v2824 = vmul.f32 %v2820, %v2782
  %v2825 = vadd.f32 %v2821, %v2794
  %v2826 = vadd.f32 %v2822, %v2795
  %v2827 = vadd.f32 %v2823, %v2794
  %v2828 = vadd.f32 %v2824, %v2795
  %v2829 = vpack.c.bf16 %v2826, %v2825
  %v2830 = vpack.c.bf16 %v2828, %v2827
  %2831 = vst.msk [vmem:[#allocation5 + $0x10] sm:$0xff] %vm2814, %v2829
  %2832 = vst.msk [vmem:[#allocation5 + $0x18] sm:$0xff] %vm2814, %v2830
  %v2833 = vld [vmem:[#allocation4 + $0x40] sm:$0xff]
  %v2834 = vld [vmem:[#allocation4 + $0x48] sm:$0xff]
  %v2835 = vld [vmem:[#allocation4 + $0x50] sm:$0xff]
  %v2836 = vld [vmem:[#allocation4 + $0x58] sm:$0xff]
  %v2837 = vmul.f32 %v2833, %v2781
  %v2838 = vmul.f32 %v2834, %v2782
  %v2839 = vmul.f32 %v2835, %v2781
  %v2840 = vmul.f32 %v2836, %v2782
  %v2841 = vadd.f32 %v2837, %v2794
  %v2842 = vadd.f32 %v2838, %v2795
  %v2843 = vadd.f32 %v2839, %v2794
  %v2844 = vadd.f32 %v2840, %v2795
  %v2845 = vpack.c.bf16 %v2842, %v2841
  %v2846 = vpack.c.bf16 %v2844, %v2843
  %2847 = vst.msk [vmem:[#allocation5 + $0x20] sm:$0xff] %vm2814, %v2845
  %2848 = vst.msk [vmem:[#allocation5 + $0x28] sm:$0xff] %vm2814, %v2846
  %v2849 = vld [vmem:[#allocation4 + $0x60] sm:$0xff]
  %v2850 = vld [vmem:[#allocation4 + $0x68] sm:$0xff]
  %v2851 = vld [vmem:[#allocation4 + $0x70] sm:$0xff]
  %v2852 = vld [vmem:[#allocation4 + $0x78] sm:$0xff]
  %v2853 = vmul.f32 %v2849, %v2781
  %v2854 = vmul.f32 %v2850, %v2782
  %v2855 = vmul.f32 %v2851, %v2781
  %v2856 = vmul.f32 %v2852, %v2782
  %v2857 = vadd.f32 %v2853, %v2794
  %v2858 = vadd.f32 %v2854, %v2795
  %v2859 = vadd.f32 %v2855, %v2794
  %v2860 = vadd.f32 %v2856, %v2795
  %v2861 = vpack.c.bf16 %v2858, %v2857
  %v2862 = vpack.c.bf16 %v2860, %v2859
  %2863 = vst.msk [vmem:[#allocation5 + $0x30] sm:$0xff] %vm2814, %v2861
  %2864 = vst.msk [vmem:[#allocation5 + $0x38] sm:$0xff] %vm2814, %v2862
  %v2865 = vld [vmem:[#allocation4 + $0x80] sm:$0xff]
  %v2866 = vld [vmem:[#allocation4 + $0x88] sm:$0xff]
  %v2867 = vld [vmem:[#allocation4 + $0x90] sm:$0xff]
  %v2868 = vld [vmem:[#allocation4 + $0x98] sm:$0xff]
  %v2869 = vmul.f32 %v2865, %v2781
  %v2870 = vmul.f32 %v2866, %v2782
  %v2871 = vmul.f32 %v2867, %v2781
  %v2872 = vmul.f32 %v2868, %v2782
  %v2873 = vadd.f32 %v2869, %v2794
  %v2874 = vadd.f32 %v2870, %v2795
  %v2875 = vadd.f32 %v2871, %v2794
  %v2876 = vadd.f32 %v2872, %v2795
  %v2877 = vpack.c.bf16 %v2874, %v2873
  %v2878 = vpack.c.bf16 %v2876, %v2875
  %2879 = vst.msk [vmem:[#allocation5 + $0x40] sm:$0xff] %vm2814, %v2877
  %2880 = vst.msk [vmem:[#allocation5 + $0x48] sm:$0xff] %vm2814, %v2878
  %v2881 = vld [vmem:[#allocation4 + $0xa0] sm:$0xff]
  %v2882 = vld [vmem:[#allocation4 + $0xa8] sm:$0xff]
  %v2883 = vld [vmem:[#allocation4 + $0xb0] sm:$0xff]
  %v2884 = vld [vmem:[#allocation4 + $0xb8] sm:$0xff]
  %v2885 = vmul.f32 %v2881, %v2781
  %v2886 = vmul.f32 %v2882, %v2782
  %v2887 = vmul.f32 %v2883, %v2781
  %v2888 = vmul.f32 %v2884, %v2782
  %v2889 = vadd.f32 %v2885, %v2794
  %v2890 = vadd.f32 %v2886, %v2795
  %v2891 = vadd.f32 %v2887, %v2794
  %v2892 = vadd.f32 %v2888, %v2795
  %v2893 = vpack.c.bf16 %v2890, %v2889
  %v2894 = vpack.c.bf16 %v2892, %v2891
  %2895 = vst.msk [vmem:[#allocation5 + $0x50] sm:$0xff] %vm2814, %v2893
  %2896 = vst.msk [vmem:[#allocation5 + $0x58] sm:$0xff] %vm2814, %v2894
  %v2897 = vld [vmem:[#allocation4 + $0xc0] sm:$0xff]
  %v2898 = vld [vmem:[#allocation4 + $0xc8] sm:$0xff]
  %v2899 = vld [vmem:[#allocation4 + $0xd0] sm:$0xff]
  %v2900 = vld [vmem:[#allocation4 + $0xd8] sm:$0xff]
  %v2901 = vmul.f32 %v2897, %v2781
  %v2902 = vmul.f32 %v2898, %v2782
  %v2903 = vmul.f32 %v2899, %v2781
  %v2904 = vmul.f32 %v2900, %v2782
  %v2905 = vadd.f32 %v2901, %v2794
  %v2906 = vadd.f32 %v2902, %v2795
  %v2907 = vadd.f32 %v2903, %v2794
  %v2908 = vadd.f32 %v2904, %v2795
  %v2909 = vpack.c.bf16 %v2906, %v2905
  %v2910 = vpack.c.bf16 %v2908, %v2907
  %2911 = vst.msk [vmem:[#allocation5 + $0x60] sm:$0xff] %vm2814, %v2909
  %2912 = vst.msk [vmem:[#allocation5 + $0x68] sm:$0xff] %vm2814, %v2910
  %v2913 = vld [vmem:[#allocation4 + $0xe0] sm:$0xff]
  %v2914 = vld [vmem:[#allocation4 + $0xe8] sm:$0xff]
  %v2915 = vld [vmem:[#allocation4 + $0xf0] sm:$0xff]
  %v2916 = vld [vmem:[#allocation4 + $0xf8] sm:$0xff]
  %v2917 = vmul.f32 %v2913, %v2781
  %v2918 = vmul.f32 %v2914, %v2782
  %v2919 = vmul.f32 %v2915, %v2781
  %v2920 = vmul.f32 %v2916, %v2782
  %v2921 = vadd.f32 %v2917, %v2794
  %v2922 = vadd.f32 %v2918, %v2795
  %v2923 = vadd.f32 %v2919, %v2794
  %v2924 = vadd.f32 %v2920, %v2795
  %v2925 = vpack.c.bf16 %v2922, %v2921
  %v2926 = vpack.c.bf16 %v2924, %v2923
  %2927 = vst.msk [vmem:[#allocation5 + $0x70] sm:$0xff] %vm2814, %v2925
  %2928 = vst.msk [vmem:[#allocation5 + $0x78] sm:$0xff] %vm2814, %v2926
  %v2929 = vld [vmem:[#allocation4 + $0x100] sm:$0xff]
  %v2930 = vld [vmem:[#allocation4 + $0x108] sm:$0xff]
  %v2931 = vld [vmem:[#allocation4 + $0x110] sm:$0xff]
  %v2932 = vld [vmem:[#allocation4 + $0x118] sm:$0xff]
  %v2933 = vmul.f32 %v2929, %v2781
  %v2934 = vmul.f32 %v2930, %v2782
  %v2935 = vmul.f32 %v2931, %v2781
  %v2936 = vmul.f32 %v2932, %v2782
  %v2937 = vadd.f32 %v2933, %v2794
  %v2938 = vadd.f32 %v2934, %v2795
  %v2939 = vadd.f32 %v2935, %v2794
  %v2940 = vadd.f32 %v2936, %v2795
  %v2941 = vpack.c.bf16 %v2938, %v2937
  %v2942 = vpack.c.bf16 %v2940, %v2939
  %2943 = vst.msk [vmem:[#allocation5 + $0x80] sm:$0xff] %vm2814, %v2941
  %2944 = vst.msk [vmem:[#allocation5 + $0x88] sm:$0xff] %vm2814, %v2942
  %v2945 = vld [vmem:[#allocation4 + $0x120] sm:$0xff]
  %v2946 = vld [vmem:[#allocation4 + $0x128] sm:$0xff]
  %v2947 = vld [vmem:[#allocation4 + $0x130] sm:$0xff]
  %v2948 = vld [vmem:[#allocation4 + $0x138] sm:$0xff]
  %v2949 = vmul.f32 %v2945, %v2781
  %v2950 = vmul.f32 %v2946, %v2782
  %v2951 = vmul.f32 %v2947, %v2781
  %v2952 = vmul.f32 %v2948, %v2782
  %v2953 = vadd.f32 %v2949, %v2794
  %v2954 = vadd.f32 %v2950, %v2795
  %v2955 = vadd.f32 %v2951, %v2794
  %v2956 = vadd.f32 %v2952, %v2795
  %v2957 = vpack.c.bf16 %v2954, %v2953
  %v2958 = vpack.c.bf16 %v2956, %v2955
  %2959 = vst.msk [vmem:[#allocation5 + $0x90] sm:$0xff] %vm2814, %v2957
  %2960 = vst.msk [vmem:[#allocation5 + $0x98] sm:$0xff] %vm2814, %v2958
  %v2961 = vld [vmem:[#allocation4 + $0x140] sm:$0xff]
  %v2962 = vld [vmem:[#allocation4 + $0x148] sm:$0xff]
  %v2963 = vld [vmem:[#allocation4 + $0x150] sm:$0xff]
  %v2964 = vld [vmem:[#allocation4 + $0x158] sm:$0xff]
  %v2965 = vmul.f32 %v2961, %v2781
  %v2966 = vmul.f32 %v2962, %v2782
  %v2967 = vmul.f32 %v2963, %v2781
  %v2968 = vmul.f32 %v2964, %v2782
  %v2969 = vadd.f32 %v2965, %v2794
  %v2970 = vadd.f32 %v2966, %v2795
  %v2971 = vadd.f32 %v2967, %v2794
  %v2972 = vadd.f32 %v2968, %v2795
  %v2973 = vpack.c.bf16 %v2970, %v2969
  %v2974 = vpack.c.bf16 %v2972, %v2971
  %2975 = vst.msk [vmem:[#allocation5 + $0xa0] sm:$0xff] %vm2814, %v2973
  %2976 = vst.msk [vmem:[#allocation5 + $0xa8] sm:$0xff] %vm2814, %v2974
  %v2977 = vld [vmem:[#allocation4 + $0x160] sm:$0xff]
  %v2978 = vld [vmem:[#allocation4 + $0x168] sm:$0xff]
  %v2979 = vld [vmem:[#allocation4 + $0x170] sm:$0xff]
  %v2980 = vld [vmem:[#allocation4 + $0x178] sm:$0xff]
  %v2981 = vmul.f32 %v2977, %v2781
  %v2982 = vmul.f32 %v2978, %v2782
  %v2983 = vmul.f32 %v2979, %v2781
  %v2984 = vmul.f32 %v2980, %v2782
  %v2985 = vadd.f32 %v2981, %v2794
  %v2986 = vadd.f32 %v2982, %v2795
  %v2987 = vadd.f32 %v2983, %v2794
  %v2988 = vadd.f32 %v2984, %v2795
  %v2989 = vpack.c.bf16 %v2986, %v2985
  %v2990 = vpack.c.bf16 %v2988, %v2987
  %2991 = vst.msk [vmem:[#allocation5 + $0xb0] sm:$0xff] %vm2814, %v2989
  %2992 = vst.msk [vmem:[#allocation5 + $0xb8] sm:$0xff] %vm2814, %v2990
  %v2993 = vld [vmem:[#allocation4 + $0x180] sm:$0xff]
  %v2994 = vld [vmem:[#allocation4 + $0x188] sm:$0xff]
  %v2995 = vld [vmem:[#allocation4 + $0x190] sm:$0xff]
  %v2996 = vld [vmem:[#allocation4 + $0x198] sm:$0xff]
  %v2997 = vmul.f32 %v2993, %v2781
  %v2998 = vmul.f32 %v2994, %v2782
  %v2999 = vmul.f32 %v2995, %v2781
  %v3000 = vmul.f32 %v2996, %v2782
  %v3001 = vadd.f32 %v2997, %v2794
  %v3002 = vadd.f32 %v2998, %v2795
  %v3003 = vadd.f32 %v2999, %v2794
  %v3004 = vadd.f32 %v3000, %v2795
  %v3005 = vpack.c.bf16 %v3002, %v3001
  %v3006 = vpack.c.bf16 %v3004, %v3003
  %3007 = vst.msk [vmem:[#allocation5 + $0xc0] sm:$0xff] %vm2814, %v3005
  %3008 = vst.msk [vmem:[#allocation5 + $0xc8] sm:$0xff] %vm2814, %v3006
  %v3009 = vld [vmem:[#allocation4 + $0x1a0] sm:$0xff]
  %v3010 = vld [vmem:[#allocation4 + $0x1a8] sm:$0xff]
  %v3011 = vld [vmem:[#allocation4 + $0x1b0] sm:$0xff]
  %v3012 = vld [vmem:[#allocation4 + $0x1b8] sm:$0xff]
  %v3013 = vmul.f32 %v3009, %v2781
  %v3014 = vmul.f32 %v3010, %v2782
  %v3015 = vmul.f32 %v3011, %v2781
  %v3016 = vmul.f32 %v3012, %v2782
  %v3017 = vadd.f32 %v3013, %v2794
  %v3018 = vadd.f32 %v3014, %v2795
  %v3019 = vadd.f32 %v3015, %v2794
  %v3020 = vadd.f32 %v3016, %v2795
  %v3021 = vpack.c.bf16 %v3018, %v3017
  %v3022 = vpack.c.bf16 %v3020, %v3019
  %3023 = vst.msk [vmem:[#allocation5 + $0xd0] sm:$0xff] %vm2814, %v3021
  %3024 = vst.msk [vmem:[#allocation5 + $0xd8] sm:$0xff] %vm2814, %v3022
  %v3025 = vld [vmem:[#allocation5] sm:$0xff]
  %v3026 = vld [vmem:[#allocation5 + $0x8] sm:$0xff]
  %v3027 = vld [vmem:[#allocation5 + $0x10] sm:$0xff]
  %v3028 = vld [vmem:[#allocation5 + $0x18] sm:$0xff]
  %v3029 = vld [vmem:[#allocation5 + $0x20] sm:$0xff]
  %v3030 = vld [vmem:[#allocation5 + $0x28] sm:$0xff]
  %v3031 = vld [vmem:[#allocation5 + $0x30] sm:$0xff]
  %v3032 = vld [vmem:[#allocation5 + $0x38] sm:$0xff]
  %v3033 = vld [vmem:[#allocation5 + $0x40] sm:$0xff]
  %v3034 = vld [vmem:[#allocation5 + $0x48] sm:$0xff]
  %v3035 = vld [vmem:[#allocation5 + $0x50] sm:$0xff]
  %v3036 = vld [vmem:[#allocation5 + $0x58] sm:$0xff]
  %v3037 = vld [vmem:[#allocation5 + $0x60] sm:$0xff]
  %v3038 = vld [vmem:[#allocation5 + $0x68] sm:$0xff]
  %v3039 = vld [vmem:[#allocation5 + $0x70] sm:$0xff]
  %v3040 = vld [vmem:[#allocation5 + $0x78] sm:$0xff]
  %v3041 = vld [vmem:[#allocation5 + $0x80] sm:$0xff]
  %v3042 = vld [vmem:[#allocation5 + $0x88] sm:$0xff]
  %v3043 = vld [vmem:[#allocation5 + $0x90] sm:$0xff]
  %v3044 = vld [vmem:[#allocation5 + $0x98] sm:$0xff]
  %v3045 = vld [vmem:[#allocation5 + $0xa0] sm:$0xff]
  %v3046 = vld [vmem:[#allocation5 + $0xa8] sm:$0xff]
  %v3047 = vld [vmem:[#allocation5 + $0xb0] sm:$0xff]
  %v3048 = vld [vmem:[#allocation5 + $0xb8] sm:$0xff]
  %v3049 = vld [vmem:[#allocation5 + $0xc0] sm:$0xff]
  %v3050 = vld [vmem:[#allocation5 + $0xc8] sm:$0xff]
  %v3051 = vld [vmem:[#allocation5 + $0xd0] sm:$0xff]
  %v3052 = vld [vmem:[#allocation5 + $0xd8] sm:$0xff]
  %v3053 = vld [vmem:[%s4] sm:$0xff]
  %v3054 = vld [vmem:[%s4 + $0x8] sm:$0xff]
  %v3055 = vld [vmem:[%s4 + $0x10] sm:$0xff]
  %v3056 = vld [vmem:[%s4 + $0x18] sm:$0xff]
  %v3057 = vld [vmem:[%s4 + $0x20] sm:$0xff]
  %v3058 = vld [vmem:[%s4 + $0x28] sm:$0xff]
  %v3059 = vld [vmem:[%s4 + $0x30] sm:$0xff]
  %v3060 = vld [vmem:[%s4 + $0x38] sm:$0xff]
  %v3061 = vld [vmem:[%s4 + $0x40] sm:$0xff]
  %v3062 = vld [vmem:[%s4 + $0x48] sm:$0xff]
  %v3063 = vld [vmem:[%s4 + $0x50] sm:$0xff]
  %v3064 = vld [vmem:[%s4 + $0x58] sm:$0xff]
  %v3065 = vld [vmem:[%s4 + $0x60] sm:$0xff]
  %v3066 = vld [vmem:[%s4 + $0x68] sm:$0xff]
  %v3067 = vld [vmem:[%s4 + $0x70] sm:$0xff]
  %v3068 = vld [vmem:[%s4 + $0x78] sm:$0xff]
  %v3069 = vld [vmem:[%s4 + $0x80] sm:$0xff]
  %v3070 = vld [vmem:[%s4 + $0x88] sm:$0xff]
  %v3071 = vld [vmem:[%s4 + $0x90] sm:$0xff]
  %v3072 = vld [vmem:[%s4 + $0x98] sm:$0xff]
  %v3073 = vld [vmem:[%s4 + $0xa0] sm:$0xff]
  %v3074 = vld [vmem:[%s4 + $0xa8] sm:$0xff]
  %v3103 = vunpack.c.l.b16 %v3025
  %v3104 = vunpack.c.h.b16 %v3025
  %v3105 = vunpack.c.l.b16 %v3026
  %v3106 = vunpack.c.h.b16 %v3026
  %v3107 = vunpack.c.l.b16 %v3027
  %v3108 = vunpack.c.h.b16 %v3027
  %v3109 = vunpack.c.l.b16 %v3028
  %v3110 = vunpack.c.h.b16 %v3028
  %v3111 = vunpack.c.l.b16 %v3029
  %v3112 = vunpack.c.h.b16 %v3029
  %v3113 = vunpack.c.l.b16 %v3030
  %v3114 = vunpack.c.h.b16 %v3030
  %v3115 = vunpack.c.l.b16 %v3031
  %v3116 = vunpack.c.h.b16 %v3031
  %v3117 = vunpack.c.l.b16 %v3032
  %v3118 = vunpack.c.h.b16 %v3032
  %v3119 = vunpack.c.l.b16 %v3033
  %v3120 = vunpack.c.h.b16 %v3033
  %v3121 = vunpack.c.l.b16 %v3034
  %v3122 = vunpack.c.h.b16 %v3034
  %v3123 = vunpack.c.l.b16 %v3035
  %v3124 = vunpack.c.h.b16 %v3035
  %v3125 = vunpack.c.l.b16 %v3036
  %v3126 = vunpack.c.h.b16 %v3036
  %v3127 = vunpack.c.l.b16 %v3037
  %v3128 = vunpack.c.h.b16 %v3037
  %v3129 = vunpack.c.l.b16 %v3038
  %v3130 = vunpack.c.h.b16 %v3038
  %v3131 = vunpack.c.l.b16 %v3039
  %v3132 = vunpack.c.h.b16 %v3039
  %v3133 = vunpack.c.l.b16 %v3040
  %v3134 = vunpack.c.h.b16 %v3040
  %v3135 = vunpack.c.l.b16 %v3041
  %v3136 = vunpack.c.h.b16 %v3041
  %v3137 = vunpack.c.l.b16 %v3042
  %v3138 = vunpack.c.h.b16 %v3042
  %v3139 = vunpack.c.l.b16 %v3043
  %v3140 = vunpack.c.h.b16 %v3043
  %v3141 = vunpack.c.l.b16 %v3044
  %v3142 = vunpack.c.h.b16 %v3044
  %v3143 = vunpack.c.l.b16 %v3045
  %v3144 = vunpack.c.h.b16 %v3045
  %v3145 = vunpack.c.l.b16 %v3046
  %v3146 = vunpack.c.h.b16 %v3046
  %v3147 = vunpack.c.l.b16 %v3047
  %v3148 = vunpack.c.h.b16 %v3047
  %v3149 = vunpack.c.l.b16 %v3048
  %v3150 = vunpack.c.h.b16 %v3048
  %v3151 = vunpack.c.l.b16 %v3049
  %v3152 = vunpack.c.h.b16 %v3049
  %v3153 = vunpack.c.l.b16 %v3050
  %v3154 = vunpack.c.h.b16 %v3050
  %v3155 = vunpack.c.l.b16 %v3051
  %v3156 = vunpack.c.h.b16 %v3051
  %v3157 = vunpack.c.l.b16 %v3052
  %v3158 = vunpack.c.h.b16 %v3052
  %v3159 = vpack.c.b16 %v3105, %v3103
  %v3160 = vpack.c.b16 %v3106, %v3104
  %v3161 = vpack.c.b16 %v3109, %v3107
  %v3162 = vpack.c.b16 %v3110, %v3108
  %v3163 = vpack.c.b16 %v3113, %v3111
  %v3164 = vpack.c.b16 %v3114, %v3112
  %v3165 = vpack.c.b16 %v3117, %v3115
  %v3166 = vpack.c.b16 %v3118, %v3116
  %v3167 = vpack.c.b16 %v3121, %v3119
  %v3168 = vpack.c.b16 %v3122, %v3120
  %v3169 = vpack.c.b16 %v3125, %v3123
  %v3170 = vpack.c.b16 %v3126, %v3124
  %v3171 = vpack.c.b16 %v3129, %v3127
  %v3172 = vpack.c.b16 %v3130, %v3128
  %v3173 = vpack.c.b16 %v3133, %v3131
  %v3174 = vpack.c.b16 %v3134, %v3132
  %v3175 = vpack.c.b16 %v3137, %v3135
  %v3176 = vpack.c.b16 %v3138, %v3136
  %v3177 = vpack.c.b16 %v3141, %v3139
  %v3178 = vpack.c.b16 %v3142, %v3140
  %v3179 = vpack.c.b16 %v3145, %v3143
  %v3180 = vpack.c.b16 %v3146, %v3144
  %v3181 = vpack.c.b16 %v3149, %v3147
  %v3182 = vpack.c.b16 %v3150, %v3148
  %v3183 = vpack.c.b16 %v3153, %v3151
  %v3184 = vpack.c.b16 %v3154, %v3152
  %v3185 = vpack.c.b16 %v3157, %v3155
  %v3186 = vpack.c.b16 %v3158, %v3156
  %v3223 = vunpack.c.l.b16 %v3053
  %v3224 = vunpack.c.h.b16 %v3053
  %v3225 = vunpack.c.l.b16 %v3054
  %v3226 = vunpack.c.h.b16 %v3054
  %v3227 = vunpack.c.l.b16 %v3055
  %v3228 = vunpack.c.h.b16 %v3055
  %v3229 = vunpack.c.l.b16 %v3056
  %v3230 = vunpack.c.h.b16 %v3056
  %v3231 = vunpack.c.l.b16 %v3057
  %v3232 = vunpack.c.h.b16 %v3057
  %v3233 = vunpack.c.l.b16 %v3058
  %v3234 = vunpack.c.h.b16 %v3058
  %v3235 = vunpack.c.l.b16 %v3059
  %v3236 = vunpack.c.h.b16 %v3059
  %v3237 = vunpack.c.l.b16 %v3060
  %v3238 = vunpack.c.h.b16 %v3060
  %v3239 = vunpack.c.l.b16 %v3061
  %v3240 = vunpack.c.h.b16 %v3061
  %v3241 = vunpack.c.l.b16 %v3062
  %v3242 = vunpack.c.h.b16 %v3062
  %v3243 = vunpack.c.l.b16 %v3063
  %v3244 = vunpack.c.h.b16 %v3063
  %v3245 = vunpack.c.l.b16 %v3064
  %v3246 = vunpack.c.h.b16 %v3064
  %v3247 = vunpack.c.l.b16 %v3065
  %v3248 = vunpack.c.h.b16 %v3065
  %v3249 = vunpack.c.l.b16 %v3066
  %v3250 = vunpack.c.h.b16 %v3066
  %v3251 = vunpack.c.l.b16 %v3067
  %v3252 = vunpack.c.h.b16 %v3067
  %v3253 = vunpack.c.l.b16 %v3068
  %v3254 = vunpack.c.h.b16 %v3068
  %v3255 = vunpack.c.l.b16 %v3069
  %v3256 = vunpack.c.h.b16 %v3069
  %v3257 = vunpack.c.l.b16 %v3070
  %v3258 = vunpack.c.h.b16 %v3070
  %v3259 = vunpack.c.l.b16 %v3071
  %v3260 = vunpack.c.h.b16 %v3071
  %v3261 = vunpack.c.l.b16 %v3072
  %v3262 = vunpack.c.h.b16 %v3072
  %v3263 = vunpack.c.l.b16 %v3073
  %v3264 = vunpack.c.h.b16 %v3073
  %v3265 = vunpack.c.l.b16 %v3074
  %v3266 = vunpack.c.h.b16 %v3074
  %v3267 = vpack.c.b16 %v3225, %v3223
  %v3268 = vpack.c.b16 %v3226, %v3224
  %v3269 = vpack.c.b16 %v3229, %v3227
  %v3270 = vpack.c.b16 %v3230, %v3228
  %v3271 = vpack.c.b16 %v3233, %v3231
  %v3272 = vpack.c.b16 %v3234, %v3232
  %v3273 = vpack.c.b16 %v3237, %v3235
  %v3274 = vpack.c.b16 %v3238, %v3236
  %v3275 = vpack.c.b16 %v3241, %v3239
  %v3276 = vpack.c.b16 %v3242, %v3240
  %v3277 = vpack.c.b16 %v3245, %v3243
  %v3278 = vpack.c.b16 %v3246, %v3244
  %v3279 = vpack.c.b16 %v3249, %v3247
  %v3280 = vpack.c.b16 %v3250, %v3248
  %v3281 = vpack.c.b16 %v3253, %v3251
  %v3282 = vpack.c.b16 %v3254, %v3252
  %v3283 = vpack.c.b16 %v3257, %v3255
  %v3284 = vpack.c.b16 %v3258, %v3256
  %v3285 = vpack.c.b16 %v3261, %v3259
  %v3286 = vpack.c.b16 %v3262, %v3260
  %v3287 = vpack.c.b16 %v3265, %v3263
  %v3288 = vpack.c.b16 %v3266, %v3264
  %v3312 = vsel %vm22, %v3160, 0
  %v3315 = vsel %vm22, %v3162, 0
  %v3318 = vsel %vm22, %v3164, 0
  %v3321 = vsel %vm22, %v3166, 0
  %v3324 = vsel %vm22, %v3168, 0
  %v3327 = vsel %vm22, %v3170, 0
  %v3330 = vsel %vm22, %v3172, 0
  %v3333 = vsel %vm22, %v3174, 0
  %v3336 = vsel %vm22, %v3176, 0
  %v3339 = vsel %vm22, %v3178, 0
  %v3342 = vsel %vm22, %v3180, 0
  %v3345 = vsel %vm22, %v3182, 0
  %v3348 = vsel %vm22, %v3184, 0
  %v3351 = vsel %vm22, %v3186, 0
  %3353 = vmatpush.bf16.msra.mxu0 %v3281
  %3354 = vmatpush.bf16.msra.mxu0 %v3279
  %3355 = vmatpush.bf16.msra.mxu0 %v3277
  %3356 = vmatpush.bf16.msra.mxu0 %v3275
  %3357 = vmatpush.bf16.msra.mxu0 %v3273
  %3358 = vmatpush.bf16.msra.mxu0 %v3271
  %3359 = vmatpush.bf16.msra.mxu0 %v3269
  %3360 = vmatpush.bf16.msra.mxu0 %v3267
  %3361 = vmatmul.bf16.gmra.mxu0 %v3159
  %v3362 = vpop.f32.mrf.mxu0
  %v3363 = vadd.f32 0.0, %v3362
  %v3364 = vpop.f32.mrf.mxu0
  %v3365 = vadd.f32 0.0, %v3364
  %3366 = vmatmul.bf16.gmra.mxu0 %v3161
  %v3367 = vpop.f32.mrf.mxu0
  %v3368 = vadd.f32 0.0, %v3367
  %v3369 = vpop.f32.mrf.mxu0
  %v3370 = vadd.f32 0.0, %v3369
  %3371 = vmatmul.bf16.gmra.mxu0 %v3163
  %v3372 = vpop.f32.mrf.mxu0
  %v3373 = vadd.f32 0.0, %v3372
  %v3374 = vpop.f32.mrf.mxu0
  %v3375 = vadd.f32 0.0, %v3374
  %3376 = vmatmul.bf16.gmra.mxu0 %v3165
  %v3377 = vpop.f32.mrf.mxu0
  %v3378 = vadd.f32 0.0, %v3377
  %v3379 = vpop.f32.mrf.mxu0
  %v3380 = vadd.f32 0.0, %v3379
  %3381 = vmatmul.bf16.gmra.mxu0 %v3167
  %v3382 = vpop.f32.mrf.mxu0
  %v3383 = vadd.f32 0.0, %v3382
  %v3384 = vpop.f32.mrf.mxu0
  %v3385 = vadd.f32 0.0, %v3384
  %3386 = vmatmul.bf16.gmra.mxu0 %v3169
  %v3387 = vpop.f32.mrf.mxu0
  %v3388 = vadd.f32 0.0, %v3387
  %v3389 = vpop.f32.mrf.mxu0
  %v3390 = vadd.f32 0.0, %v3389
  %3391 = vmatmul.bf16.gmra.mxu0 %v3171
  %v3392 = vpop.f32.mrf.mxu0
  %v3393 = vadd.f32 0.0, %v3392
  %v3394 = vpop.f32.mrf.mxu0
  %v3395 = vadd.f32 0.0, %v3394
  %3396 = vmatmul.bf16.gmra.mxu0 %v3173
  %v3397 = vpop.f32.mrf.mxu0
  %v3398 = vadd.f32 0.0, %v3397
  %v3399 = vpop.f32.mrf.mxu0
  %v3400 = vadd.f32 0.0, %v3399
  %3401 = vmatmul.bf16.gmra.mxu0 %v3175
  %v3402 = vpop.f32.mrf.mxu0
  %v3403 = vadd.f32 0.0, %v3402
  %v3404 = vpop.f32.mrf.mxu0
  %v3405 = vadd.f32 0.0, %v3404
  %3406 = vmatmul.bf16.gmra.mxu0 %v3177
  %v3407 = vpop.f32.mrf.mxu0
  %v3408 = vadd.f32 0.0, %v3407
  %v3409 = vpop.f32.mrf.mxu0
  %v3410 = vadd.f32 0.0, %v3409
  %3411 = vmatmul.bf16.gmra.mxu0 %v3179
  %v3412 = vpop.f32.mrf.mxu0
  %v3413 = vadd.f32 0.0, %v3412
  %v3414 = vpop.f32.mrf.mxu0
  %v3415 = vadd.f32 0.0, %v3414
  %3416 = vmatmul.bf16.gmra.mxu0 %v3181
  %v3417 = vpop.f32.mrf.mxu0
  %v3418 = vadd.f32 0.0, %v3417
  %v3419 = vpop.f32.mrf.mxu0
  %v3420 = vadd.f32 0.0, %v3419
  %3421 = vmatmul.bf16.gmra.mxu0 %v3183
  %v3422 = vpop.f32.mrf.mxu0
  %v3423 = vadd.f32 0.0, %v3422
  %v3424 = vpop.f32.mrf.mxu0
  %v3425 = vadd.f32 0.0, %v3424
  %3426 = vmatmul.bf16.gmra.mxu0 %v3185
  %v3427 = vpop.f32.mrf.mxu0
  %v3428 = vadd.f32 0.0, %v3427
  %v3429 = vpop.f32.mrf.mxu0
  %v3430 = vadd.f32 0.0, %v3429
  %3431 = vdwg.mxu0
  %3432 = vmatpush.bf16.msra.mxu0 0
  %3433 = vmatpush.bf16.msra.mxu0 0
  %3434 = vmatpush.bf16.msra.mxu0 0
  %3435 = vmatpush.bf16.msra.mxu0 0
  %3436 = vmatpush.bf16.msra.mxu0 0
  %3437 = vmatpush.bf16.msra.mxu0 %v3287
  %3438 = vmatpush.bf16.msra.mxu0 %v3285
  %3439 = vmatpush.bf16.msra.mxu0 %v3283
  %3440 = vmatmul.bf16.gmra.mxu0 %v3312
  %v3441 = vpop.f32.mrf.mxu0
  %v3442 = vadd.f32 %v3363, %v3441
  %v3443 = vpop.f32.mrf.mxu0
  %v3444 = vadd.f32 %v3365, %v3443
  %3445 = vmatmul.bf16.gmra.mxu0 %v3315
  %v3446 = vpop.f32.mrf.mxu0
  %v3447 = vadd.f32 %v3368, %v3446
  %v3448 = vpop.f32.mrf.mxu0
  %v3449 = vadd.f32 %v3370, %v3448
  %3450 = vmatmul.bf16.gmra.mxu0 %v3318
  %v3451 = vpop.f32.mrf.mxu0
  %v3452 = vadd.f32 %v3373, %v3451
  %v3453 = vpop.f32.mrf.mxu0
  %v3454 = vadd.f32 %v3375, %v3453
  %3455 = vmatmul.bf16.gmra.mxu0 %v3321
  %v3456 = vpop.f32.mrf.mxu0
  %v3457 = vadd.f32 %v3378, %v3456
  %v3458 = vpop.f32.mrf.mxu0
  %v3459 = vadd.f32 %v3380, %v3458
  %3460 = vmatmul.bf16.gmra.mxu0 %v3324
  %v3461 = vpop.f32.mrf.mxu0
  %v3462 = vadd.f32 %v3383, %v3461
  %v3463 = vpop.f32.mrf.mxu0
  %v3464 = vadd.f32 %v3385, %v3463
  %3465 = vmatmul.bf16.gmra.mxu0 %v3327
  %v3466 = vpop.f32.mrf.mxu0
  %v3467 = vadd.f32 %v3388, %v3466
  %v3468 = vpop.f32.mrf.mxu0
  %v3469 = vadd.f32 %v3390, %v3468
  %3470 = vmatmul.bf16.gmra.mxu0 %v3330
  %v3471 = vpop.f32.mrf.mxu0
  %v3472 = vadd.f32 %v3393, %v3471
  %v3473 = vpop.f32.mrf.mxu0
  %v3474 = vadd.f32 %v3395, %v3473
  %3475 = vmatmul.bf16.gmra.mxu0 %v3333
  %v3476 = vpop.f32.mrf.mxu0
  %v3477 = vadd.f32 %v3398, %v3476
  %v3478 = vpop.f32.mrf.mxu0
  %v3479 = vadd.f32 %v3400, %v3478
  %3480 = vmatmul.bf16.gmra.mxu0 %v3336
  %v3481 = vpop.f32.mrf.mxu0
  %v3482 = vadd.f32 %v3403, %v3481
  %v3483 = vpop.f32.mrf.mxu0
  %v3484 = vadd.f32 %v3405, %v3483
  %3485 = vmatmul.bf16.gmra.mxu0 %v3339
  %v3486 = vpop.f32.mrf.mxu0
  %v3487 = vadd.f32 %v3408, %v3486
  %v3488 = vpop.f32.mrf.mxu0
  %v3489 = vadd.f32 %v3410, %v3488
  %3490 = vmatmul.bf16.gmra.mxu0 %v3342
  %v3491 = vpop.f32.mrf.mxu0
  %v3492 = vadd.f32 %v3413, %v3491
  %v3493 = vpop.f32.mrf.mxu0
  %v3494 = vadd.f32 %v3415, %v3493
  %3495 = vmatmul.bf16.gmra.mxu0 %v3345
  %v3496 = vpop.f32.mrf.mxu0
  %v3497 = vadd.f32 %v3418, %v3496
  %v3498 = vpop.f32.mrf.mxu0
  %v3499 = vadd.f32 %v3420, %v3498
  %3500 = vmatmul.bf16.gmra.mxu0 %v3348
  %v3501 = vpop.f32.mrf.mxu0
  %v3502 = vadd.f32 %v3423, %v3501
  %v3503 = vpop.f32.mrf.mxu0
  %v3504 = vadd.f32 %v3425, %v3503
  %3505 = vmatmul.bf16.gmra.mxu0 %v3351
  %v3506 = vpop.f32.mrf.mxu0
  %v3507 = vadd.f32 %v3428, %v3506
  %v3508 = vpop.f32.mrf.mxu0
  %v3509 = vadd.f32 %v3430, %v3508
  %3510 = vdwg.mxu0
  %3511 = vmatpush.bf16.msra.mxu0 %v3282
  %3512 = vmatpush.bf16.msra.mxu0 %v3280
  %3513 = vmatpush.bf16.msra.mxu0 %v3278
  %3514 = vmatpush.bf16.msra.mxu0 %v3276
  %3515 = vmatpush.bf16.msra.mxu0 %v3274
  %3516 = vmatpush.bf16.msra.mxu0 %v3272
  %3517 = vmatpush.bf16.msra.mxu0 %v3270
  %3518 = vmatpush.bf16.msra.mxu0 %v3268
  %3519 = vmatmul.bf16.gmra.mxu0 %v3159
  %v3520 = vpop.f32.mrf.mxu0
  %v3521 = vadd.f32 0.0, %v3520
  %v3522 = vpop.f32.mrf.mxu0
  %v3523 = vadd.f32 0.0, %v3522
  %3524 = vmatmul.bf16.gmra.mxu0 %v3161
  %v3525 = vpop.f32.mrf.mxu0
  %v3526 = vadd.f32 0.0, %v3525
  %v3527 = vpop.f32.mrf.mxu0
  %v3528 = vadd.f32 0.0, %v3527
  %3529 = vmatmul.bf16.gmra.mxu0 %v3163
  %v3530 = vpop.f32.mrf.mxu0
  %v3531 = vadd.f32 0.0, %v3530
  %v3532 = vpop.f32.mrf.mxu0
  %v3533 = vadd.f32 0.0, %v3532
  %3534 = vmatmul.bf16.gmra.mxu0 %v3165
  %v3535 = vpop.f32.mrf.mxu0
  %v3536 = vadd.f32 0.0, %v3535
  %v3537 = vpop.f32.mrf.mxu0
  %v3538 = vadd.f32 0.0, %v3537
  %3539 = vmatmul.bf16.gmra.mxu0 %v3167
  %v3540 = vpop.f32.mrf.mxu0
  %v3541 = vadd.f32 0.0, %v3540
  %v3542 = vpop.f32.mrf.mxu0
  %v3543 = vadd.f32 0.0, %v3542
  %3544 = vmatmul.bf16.gmra.mxu0 %v3169
  %v3545 = vpop.f32.mrf.mxu0
  %v3546 = vadd.f32 0.0, %v3545
  %v3547 = vpop.f32.mrf.mxu0
  %v3548 = vadd.f32 0.0, %v3547
  %3549 = vmatmul.bf16.gmra.mxu0 %v3171
  %v3550 = vpop.f32.mrf.mxu0
  %v3551 = vadd.f32 0.0, %v3550
  %v3552 = vpop.f32.mrf.mxu0
  %v3553 = vadd.f32 0.0, %v3552
  %3554 = vmatmul.bf16.gmra.mxu0 %v3173
  %v3555 = vpop.f32.mrf.mxu0
  %v3556 = vadd.f32 0.0, %v3555
  %v3557 = vpop.f32.mrf.mxu0
  %v3558 = vadd.f32 0.0, %v3557
  %3559 = vmatmul.bf16.gmra.mxu0 %v3175
  %v3560 = vpop.f32.mrf.mxu0
  %v3561 = vadd.f32 0.0, %v3560
  %v3562 = vpop.f32.mrf.mxu0
  %v3563 = vadd.f32 0.0, %v3562
  %3564 = vmatmul.bf16.gmra.mxu0 %v3177
  %v3565 = vpop.f32.mrf.mxu0
  %v3566 = vadd.f32 0.0, %v3565
  %v3567 = vpop.f32.mrf.mxu0
  %v3568 = vadd.f32 0.0, %v3567
  %3569 = vmatmul.bf16.gmra.mxu0 %v3179
  %v3570 = vpop.f32.mrf.mxu0
  %v3571 = vadd.f32 0.0, %v3570
  %v3572 = vpop.f32.mrf.mxu0
  %v3573 = vadd.f32 0.0, %v3572
  %3574 = vmatmul.bf16.gmra.mxu0 %v3181
  %v3575 = vpop.f32.mrf.mxu0
  %v3576 = vadd.f32 0.0, %v3575
  %v3577 = vpop.f32.mrf.mxu0
  %v3578 = vadd.f32 0.0, %v3577
  %3579 = vmatmul.bf16.gmra.mxu0 %v3183
  %v3580 = vpop.f32.mrf.mxu0
  %v3581 = vadd.f32 0.0, %v3580
  %v3582 = vpop.f32.mrf.mxu0
  %v3583 = vadd.f32 0.0, %v3582
  %3584 = vmatmul.bf16.gmra.mxu0 %v3185
  %v3585 = vpop.f32.mrf.mxu0
  %v3586 = vadd.f32 0.0, %v3585
  %v3587 = vpop.f32.mrf.mxu0
  %v3588 = vadd.f32 0.0, %v3587
  %3589 = vdwg.mxu0
  %3590 = vmatpush.bf16.msra.mxu0 0
  %3591 = vmatpush.bf16.msra.mxu0 0
  %3592 = vmatpush.bf16.msra.mxu0 0
  %3593 = vmatpush.bf16.msra.mxu0 0
  %3594 = vmatpush.bf16.msra.mxu0 0
  %3595 = vmatpush.bf16.msra.mxu0 %v3288
  %3596 = vmatpush.bf16.msra.mxu0 %v3286
  %3597 = vmatpush.bf16.msra.mxu0 %v3284
  %3598 = vmatmul.bf16.gmra.mxu0 %v3312
  %v3599 = vpop.f32.mrf.mxu0
  %v3600 = vadd.f32 %v3521, %v3599
  %v3601 = vpop.f32.mrf.mxu0
  %v3602 = vadd.f32 %v3523, %v3601
  %3603 = vmatmul.bf16.gmra.mxu0 %v3315
  %v3604 = vpop.f32.mrf.mxu0
  %v3605 = vadd.f32 %v3526, %v3604
  %v3606 = vpop.f32.mrf.mxu0
  %v3607 = vadd.f32 %v3528, %v3606
  %3608 = vmatmul.bf16.gmra.mxu0 %v3318
  %v3609 = vpop.f32.mrf.mxu0
  %v3610 = vadd.f32 %v3531, %v3609
  %v3611 = vpop.f32.mrf.mxu0
  %v3612 = vadd.f32 %v3533, %v3611
  %3613 = vmatmul.bf16.gmra.mxu0 %v3321
  %v3614 = vpop.f32.mrf.mxu0
  %v3615 = vadd.f32 %v3536, %v3614
  %v3616 = vpop.f32.mrf.mxu0
  %v3617 = vadd.f32 %v3538, %v3616
  %3618 = vmatmul.bf16.gmra.mxu0 %v3324
  %v3619 = vpop.f32.mrf.mxu0
  %v3620 = vadd.f32 %v3541, %v3619
  %v3621 = vpop.f32.mrf.mxu0
  %v3622 = vadd.f32 %v3543, %v3621
  %3623 = vmatmul.bf16.gmra.mxu0 %v3327
  %v3624 = vpop.f32.mrf.mxu0
  %v3625 = vadd.f32 %v3546, %v3624
  %v3626 = vpop.f32.mrf.mxu0
  %v3627 = vadd.f32 %v3548, %v3626
  %3628 = vmatmul.bf16.gmra.mxu0 %v3330
  %v3629 = vpop.f32.mrf.mxu0
  %v3630 = vadd.f32 %v3551, %v3629
  %v3631 = vpop.f32.mrf.mxu0
  %v3632 = vadd.f32 %v3553, %v3631
  %3633 = vmatmul.bf16.gmra.mxu0 %v3333
  %v3634 = vpop.f32.mrf.mxu0
  %v3635 = vadd.f32 %v3556, %v3634
  %v3636 = vpop.f32.mrf.mxu0
  %v3637 = vadd.f32 %v3558, %v3636
  %3638 = vmatmul.bf16.gmra.mxu0 %v3336
  %v3639 = vpop.f32.mrf.mxu0
  %v3640 = vadd.f32 %v3561, %v3639
  %v3641 = vpop.f32.mrf.mxu0
  %v3642 = vadd.f32 %v3563, %v3641
  %3643 = vmatmul.bf16.gmra.mxu0 %v3339
  %v3644 = vpop.f32.mrf.mxu0
  %v3645 = vadd.f32 %v3566, %v3644
  %v3646 = vpop.f32.mrf.mxu0
  %v3647 = vadd.f32 %v3568, %v3646
  %3648 = vmatmul.bf16.gmra.mxu0 %v3342
  %v3649 = vpop.f32.mrf.mxu0
  %v3650 = vadd.f32 %v3571, %v3649
  %v3651 = vpop.f32.mrf.mxu0
  %v3652 = vadd.f32 %v3573, %v3651
  %3653 = vmatmul.bf16.gmra.mxu0 %v3345
  %v3654 = vpop.f32.mrf.mxu0
  %v3655 = vadd.f32 %v3576, %v3654
  %v3656 = vpop.f32.mrf.mxu0
  %v3657 = vadd.f32 %v3578, %v3656
  %3658 = vmatmul.bf16.gmra.mxu0 %v3348
  %v3659 = vpop.f32.mrf.mxu0
  %v3660 = vadd.f32 %v3581, %v3659
  %v3661 = vpop.f32.mrf.mxu0
  %v3662 = vadd.f32 %v3583, %v3661
  %3663 = vmatmul.bf16.gmra.mxu0 %v3351
  %v3664 = vpop.f32.mrf.mxu0
  %v3665 = vadd.f32 %v3586, %v3664
  %v3666 = vpop.f32.mrf.mxu0
  %v3667 = vadd.f32 %v3588, %v3666
  %3668 = vdwg.mxu0
  %3669 = vst [vmem:[%s5] sm:$0xff] %v3442
  %3670 = vst.msk [vmem:[%s5 + $0x8] sm:$0xff] %vm22, %v3600
  %3671 = vst [vmem:[%s5 + $0x10] sm:$0xff] %v3444
  %3672 = vst.msk [vmem:[%s5 + $0x18] sm:$0xff] %vm22, %v3602
  %3673 = vst [vmem:[%s5 + $0x20] sm:$0xff] %v3447
  %3674 = vst.msk [vmem:[%s5 + $0x28] sm:$0xff] %vm22, %v3605
  %3675 = vst [vmem:[%s5 + $0x30] sm:$0xff] %v3449
  %3676 = vst.msk [vmem:[%s5 + $0x38] sm:$0xff] %vm22, %v3607
  %3677 = vst [vmem:[%s5 + $0x40] sm:$0xff] %v3452
  %3678 = vst.msk [vmem:[%s5 + $0x48] sm:$0xff] %vm22, %v3610
  %3679 = vst [vmem:[%s5 + $0x50] sm:$0xff] %v3454
  %3680 = vst.msk [vmem:[%s5 + $0x58] sm:$0xff] %vm22, %v3612
  %3681 = vst [vmem:[%s5 + $0x60] sm:$0xff] %v3457
  %3682 = vst.msk [vmem:[%s5 + $0x68] sm:$0xff] %vm22, %v3615
  %3683 = vst [vmem:[%s5 + $0x70] sm:$0xff] %v3459
  %3684 = vst.msk [vmem:[%s5 + $0x78] sm:$0xff] %vm22, %v3617
  %3685 = vst [vmem:[%s5 + $0x80] sm:$0xff] %v3462
  %3686 = vst.msk [vmem:[%s5 + $0x88] sm:$0xff] %vm22, %v3620
  %3687 = vst [vmem:[%s5 + $0x90] sm:$0xff] %v3464
  %3688 = vst.msk [vmem:[%s5 + $0x98] sm:$0xff] %vm22, %v3622
  %3689 = vst [vmem:[%s5 + $0xa0] sm:$0xff] %v3467
  %3690 = vst.msk [vmem:[%s5 + $0xa8] sm:$0xff] %vm22, %v3625
  %3691 = vst [vmem:[%s5 + $0xb0] sm:$0xff] %v3469
  %3692 = vst.msk [vmem:[%s5 + $0xb8] sm:$0xff] %vm22, %v3627
  %3693 = vst [vmem:[%s5 + $0xc0] sm:$0xff] %v3472
  %3694 = vst.msk [vmem:[%s5 + $0xc8] sm:$0xff] %vm22, %v3630
  %3695 = vst [vmem:[%s5 + $0xd0] sm:$0xff] %v3474
  %3696 = vst.msk [vmem:[%s5 + $0xd8] sm:$0xff] %vm22, %v3632
  %3697 = vst [vmem:[%s5 + $0xe0] sm:$0xff] %v3477
  %3698 = vst.msk [vmem:[%s5 + $0xe8] sm:$0xff] %vm22, %v3635
  %3699 = vst [vmem:[%s5 + $0xf0] sm:$0xff] %v3479
  %3700 = vst.msk [vmem:[%s5 + $0xf8] sm:$0xff] %vm22, %v3637
  %3701 = vst [vmem:[%s5 + $0x100] sm:$0xff] %v3482
  %3702 = vst.msk [vmem:[%s5 + $0x108] sm:$0xff] %vm22, %v3640
  %3703 = vst [vmem:[%s5 + $0x110] sm:$0xff] %v3484
  %3704 = vst.msk [vmem:[%s5 + $0x118] sm:$0xff] %vm22, %v3642
  %3705 = vst [vmem:[%s5 + $0x120] sm:$0xff] %v3487
  %3706 = vst.msk [vmem:[%s5 + $0x128] sm:$0xff] %vm22, %v3645
  %3707 = vst [vmem:[%s5 + $0x130] sm:$0xff] %v3489
  %3708 = vst.msk [vmem:[%s5 + $0x138] sm:$0xff] %vm22, %v3647
  %3709 = vst [vmem:[%s5 + $0x140] sm:$0xff] %v3492
  %3710 = vst.msk [vmem:[%s5 + $0x148] sm:$0xff] %vm22, %v3650
  %3711 = vst [vmem:[%s5 + $0x150] sm:$0xff] %v3494
  %3712 = vst.msk [vmem:[%s5 + $0x158] sm:$0xff] %vm22, %v3652
  %3713 = vst [vmem:[%s5 + $0x160] sm:$0xff] %v3497
  %3714 = vst.msk [vmem:[%s5 + $0x168] sm:$0xff] %vm22, %v3655
  %3715 = vst [vmem:[%s5 + $0x170] sm:$0xff] %v3499
  %3716 = vst.msk [vmem:[%s5 + $0x178] sm:$0xff] %vm22, %v3657
  %3717 = vst [vmem:[%s5 + $0x180] sm:$0xff] %v3502
  %3718 = vst.msk [vmem:[%s5 + $0x188] sm:$0xff] %vm22, %v3660
  %3719 = vst [vmem:[%s5 + $0x190] sm:$0xff] %v3504
  %3720 = vst.msk [vmem:[%s5 + $0x198] sm:$0xff] %vm22, %v3662
  %3721 = vst [vmem:[%s5 + $0x1a0] sm:$0xff] %v3507
  %3722 = vst.msk [vmem:[%s5 + $0x1a8] sm:$0xff] %vm22, %v3665
  %3723 = vst [vmem:[%s5 + $0x1b0] sm:$0xff] %v3509
  %3724 = vst.msk [vmem:[%s5 + $0x1b8] sm:$0xff] %vm22, %v3667
  // Predicated region
  $region22: #{fused_forward.1} parent=0 // pred_check
    _
  $region23: #{fused_forward.1} parent=0 // pred_check_branch
    %3726 = sbr.rel (0) target = $region25
  $region24: #{fused_forward.1} parent=0 // pred_region
    _
  $region25: #{fused_forward.1} parent=0 // pred_fallthru
    _
  // Predicated region
  $region26: #{fused_forward.1} parent=0 // pred_check
    _
  $region27: #{fused_forward.1} parent=0 // pred_check_branch
    %3728 = sbr.rel (0) target = $region29
  $region28: #{fused_forward.1} parent=0 // pred_region
    _
  $region29: #{fused_forward.1} parent=0 // pred_fallthru
    _

</llo_original>
